<compile_context>
chip_gen: v7x
topology: tpu7x:2x2x1
jax: 0.10.0
libtpu: 0.0.40
codegen_flags: <defaults>
</compile_context>

<pallas_src>
import jax
import jax.numpy as jnp
from jax import lax
from jax.experimental import pallas as pl
from jax.experimental.pallas import tpu as pltpu  # noqa: F401  (TPU backend)

# ---- model hyper-parameters (small, consistent with the module) -------------
BATCH = 2
SEQ = 8
EMBED = 32
HEADS = 4
HEAD_DIM = EMBED // HEADS
EXPANSION = 4
FFN = EXPANSION * EMBED
EPS = 1e-5                      # nn.LayerNorm default
SCALE = float(EMBED) ** -0.5    # module divides energy by sqrt(embed_size)


# ---- Pallas kernel: whole batch in one invocation ----------------------------
def transformer_block_kernel(
    v_ref, k_ref, q_ref, mb_ref,
    wv_ref, wk_ref, wq_ref, wo_ref, bo_ref,
    g1_ref, be1_ref,
    w1_ref, b1_ref, w2_ref, b2_ref,
    g2_ref, be2_ref,
    out_ref,
):
    # weights / biases (tiny, load once)
    wv = wv_ref[...]          # (E, E) block-diagonal
    wk = wk_ref[...]
    wq = wq_ref[...]
    wo = wo_ref[...]          # (E, E)
    bo = bo_ref[...]          # (1, E)
    g1 = g1_ref[...]
    be1 = be1_ref[...]
    w1 = w1_ref[...]          # (E, FFN)
    b1 = b1_ref[...]          # (1, FFN)
    w2 = w2_ref[...]          # (FFN, E)
    b2 = b2_ref[...]          # (1, E)
    g2 = g2_ref[...]
    be2 = be2_ref[...]

    # Fully unrolled static loop over the (tiny) batch.
    for n in range(BATCH):
        v_n = v_ref[n]        # (S, E)
        k_n = k_ref[n]        # (S, E)
        q_n = q_ref[n]        # (S, E)
        bias = mb_ref[n]      # (S, S) additive f32 mask bias (0 / -1e28)

        # --- head projections: 3 full-width matmuls (block-diagonal weights) ---
        V = jnp.dot(v_n, wv, preferred_element_type=jnp.float32)   # (S, E)
        K = jnp.dot(k_n, wk, preferred_element_type=jnp.float32)   # (S, E)
        Q = jnp.dot(q_n, wq, preferred_element_type=jnp.float32)   # (S, E)

        # --- multi-head attention: per-head scores, accumulate through fc_out ---
        attn_out = jnp.zeros((SEQ, EMBED), jnp.float32)
        for h in range(HEADS):
            lo = h * HEAD_DIM
            hi = lo + HEAD_DIM
            qh = Q[:, lo:hi]                                        # (S, D)
            kh = K[:, lo:hi]                                        # (S, D)
            vh = V[:, lo:hi]                                        # (S, D)

            energy = jnp.dot(qh, kh.T, preferred_element_type=jnp.float32)  # (S, S)
            logits = (energy + bias) * SCALE

            m = jnp.max(logits, axis=-1, keepdims=True)
            p = jnp.exp(logits - m)
            denom = jnp.sum(p, axis=-1, keepdims=True)
            attn = p * pl.reciprocal(denom, approx=True)            # EUP reciprocal

            head_out = jnp.dot(attn, vh, preferred_element_type=jnp.float32)  # (S, D)
            # accumulate into fc_out product via a (free) sublane slice of wo
            attn_out = attn_out + jnp.dot(
                head_out, wo[lo:hi, :], preferred_element_type=jnp.float32)

        attn_out = attn_out + bo

        # --- residual + LayerNorm1 (dropout = identity) ---
        x = attn_out + q_n
        mu = jnp.mean(x, axis=-1, keepdims=True)
        var = jnp.mean((x - mu) ** 2, axis=-1, keepdims=True)
        x = (x - mu) * lax.rsqrt(var + EPS) * g1 + be1

        # --- feed-forward: Linear -> ReLU -> Linear ---
        h1 = jnp.dot(x, w1, preferred_element_type=jnp.float32) + b1
        h1 = jnp.maximum(h1, 0.0)
        ff = jnp.dot(h1, w2, preferred_element_type=jnp.float32) + b2

        # --- residual + LayerNorm2 (dropout = identity) ---
        y = ff + x
        mu2 = jnp.mean(y, axis=-1, keepdims=True)
        var2 = jnp.mean((y - mu2) ** 2, axis=-1, keepdims=True)
        y = (y - mu2) * lax.rsqrt(var2 + EPS) * g2 + be2

        out_ref[n] = y.astype(out_ref.dtype)


# ---- wrapper ------------------------------------------------------------------
def transformer_block(v, k, q, mask, params):
    (wv, wk, wq, wo, bo, g1, be1, w1, b1, w2, b2, g2, be2) = params
    N, S, E = q.shape

    # Block-diagonal (E, E) projection weights (same per-head (D, D) weight on
    # every diagonal block, matching the shared nn.Linear across heads).
    eye_h = jnp.eye(HEADS, dtype=jnp.float32)
    wv_bd = jnp.kron(eye_h, wv)
    wk_bd = jnp.kron(eye_h, wk)
    wq_bd = jnp.kron(eye_h, wq)

    # Additive float mask bias: 0 where attended, -1e28 where masked.
    mask_bias = jnp.where(mask[:, 0] == 0, -1e28, 0.0).astype(jnp.float32)  # (N, S, S)

    # No grid: single invocation, whole arrays resident in VMEM (total live
    # data is a few KB, so per-grid-step overhead would dominate otherwise).
    return pl.pallas_call(
        transformer_block_kernel,
        out_shape=jax.ShapeDtypeStruct((N, S, E), jnp.float32),
    )(v, k, q, mask_bias,
      wv_bd, wk_bd, wq_bd, wo, bo,
      g1, be1, w1, b1, w2, b2, g2, be2)


# ---- pure-JAX reference (mirrors the PyTorch forward exactly) ------------------
def ref_forward(v, k, q, mask, params):
    (wv, wk, wq, wo, bo, g1, be1, w1, b1, w2, b2, g2, be2) = params
    N, S, E = q.shape
    vr = v.reshape(N, S, HEADS, HEAD_DIM) @ wv
    kr = k.reshape(N, S, HEADS, HEAD_DIM) @ wk
    qr = q.reshape(N, S, HEADS, HEAD_DIM) @ wq
    energy = jnp.einsum('nqhd,nkhd->nhqk', qr, kr)
    energy = jnp.where(mask == 0, jnp.float32(-1e28), energy)
    attn = jax.nn.softmax(energy / jnp.sqrt(jnp.float32(E)), axis=3)
    out = jnp.einsum('nhqk,nkhd->nqhd', attn, vr).reshape(N, S, E)
    attn_out = out @ wo + bo[0]

    def ln(x, g, b):
        mu = x.mean(-1, keepdims=True)
        var = ((x - mu) ** 2).mean(-1, keepdims=True)
        return (x - mu) / jnp.sqrt(var + EPS) * g[0] + b[0]

    x = ln(attn_out + q, g1, be1)
    ff = jnp.maximum(x @ w1 + b1[0], 0.0) @ w2 + b2[0]
    return ln(ff + x, g2, be2)


# ---- parameter / input construction --------------------------------------------
def make_params(key):
    ks = jax.random.split(key, 8)
    init = lambda kk, shape, fan_in: (
        jax.random.normal(kk, shape, jnp.float32) / jnp.sqrt(jnp.float32(fan_in))
    )
    wv = init(ks[0], (HEAD_DIM, HEAD_DIM), HEAD_DIM)
    wk = init(ks[1], (HEAD_DIM, HEAD_DIM), HEAD_DIM)
    wq = init(ks[2], (HEAD_DIM, HEAD_DIM), HEAD_DIM)
    wo = init(ks[3], (EMBED, EMBED), EMBED)
    bo = jnp.full((1, EMBED), 0.01, jnp.float32)
    g1 = jnp.ones((1, EMBED), jnp.float32)
    be1 = jnp.zeros((1, EMBED), jnp.float32)
    w1 = init(ks[4], (EMBED, FFN), EMBED)
    b1 = jnp.full((1, FFN), 0.02, jnp.float32)
    w2 = init(ks[5], (FFN, EMBED), FFN)
    b2 = jnp.full((1, EMBED), 0.03, jnp.float32)
    g2 = jnp.ones((1, EMBED), jnp.float32)
    be2 = jnp.zeros((1, EMBED), jnp.float32)
    return [wv, wk, wq, wo, bo, g1, be1, w1, b1, w2, b2, g2, be2]


if __name__ == "__main__":
    key = jax.random.PRNGKey(0)
    kv_, kk_, kq_, kp_ = jax.random.split(key, 4)
    v = jax.random.normal(kv_, (BATCH, SEQ, EMBED), jnp.float32)
    k = jax.random.normal(kk_, (BATCH, SEQ, EMBED), jnp.float32)
    q = jax.random.normal(kq_, (BATCH, SEQ, EMBED), jnp.float32)
    # causal mask, broadcast over heads: (N, 1, S, S)
    mask = jnp.broadcast_to(
        jnp.tril(jnp.ones((SEQ, SEQ), jnp.int32)), (BATCH, 1, SEQ, SEQ)
    )
    params = make_params(kp_)

    out = jax.block_until_ready(transformer_block(v, k, q, mask, params))
    ref = ref_forward(v, k, q, mask, params)

    assert out.shape == (BATCH, SEQ, EMBED)
    max_err = float(jnp.max(jnp.abs(out - ref)))
    # Tolerance accommodates the EUP approximate reciprocal in the softmax
    # (outputs are O(1) after LayerNorm, so this is still a tight check).
    assert jnp.allclose(out, ref, rtol=2e-3, atol=2e-3), max_err

    print("KERNEL_OK")
</pallas_src>

<mosaic_0001>
module attributes {stable_mosaic.version = 11 : i64} {
  func.func @transformer_block_kernel(%arg0: memref<2x8x32xf32, #tpu.memory_space<vmem>>, %arg1: memref<2x8x32xf32, #tpu.memory_space<vmem>>, %arg2: memref<2x8x32xf32, #tpu.memory_space<vmem>>, %arg3: memref<2x8x8xf32, #tpu.memory_space<vmem>>, %arg4: memref<32x32xf32, #tpu.memory_space<vmem>>, %arg5: memref<32x32xf32, #tpu.memory_space<vmem>>, %arg6: memref<32x32xf32, #tpu.memory_space<vmem>>, %arg7: memref<32x32xf32, #tpu.memory_space<vmem>>, %arg8: memref<1x32xf32, #tpu.memory_space<vmem>>, %arg9: memref<1x32xf32, #tpu.memory_space<vmem>>, %arg10: memref<1x32xf32, #tpu.memory_space<vmem>>, %arg11: memref<32x128xf32, #tpu.memory_space<vmem>>, %arg12: memref<1x128xf32, #tpu.memory_space<vmem>>, %arg13: memref<128x32xf32, #tpu.memory_space<vmem>>, %arg14: memref<1x32xf32, #tpu.memory_space<vmem>>, %arg15: memref<1x32xf32, #tpu.memory_space<vmem>>, %arg16: memref<1x32xf32, #tpu.memory_space<vmem>>, %arg17: memref<2x8x32xf32, #tpu.memory_space<vmem>>) attributes {dimension_semantics = [], scalar_prefetch = 0 : i64, scratch_operands = 0 : i64, tpu.core_type = #tpu.core_type<tc>} {
    %c0 = arith.constant 0 : index
    %c0_0 = arith.constant 0 : index
    %0 = vector.load %arg4[%c0, %c0_0] : memref<32x32xf32, #tpu.memory_space<vmem>>, vector<32x32xf32>
    %c0_1 = arith.constant 0 : index
    %c0_2 = arith.constant 0 : index
    %1 = vector.load %arg5[%c0_1, %c0_2] : memref<32x32xf32, #tpu.memory_space<vmem>>, vector<32x32xf32>
    %c0_3 = arith.constant 0 : index
    %c0_4 = arith.constant 0 : index
    %2 = vector.load %arg6[%c0_3, %c0_4] : memref<32x32xf32, #tpu.memory_space<vmem>>, vector<32x32xf32>
    %c0_5 = arith.constant 0 : index
    %c0_6 = arith.constant 0 : index
    %3 = vector.load %arg7[%c0_5, %c0_6] : memref<32x32xf32, #tpu.memory_space<vmem>>, vector<32x32xf32>
    %c0_7 = arith.constant 0 : index
    %c0_8 = arith.constant 0 : index
    %4 = vector.load %arg8[%c0_7, %c0_8] : memref<1x32xf32, #tpu.memory_space<vmem>>, vector<1x32xf32>
    %c0_9 = arith.constant 0 : index
    %c0_10 = arith.constant 0 : index
    %5 = vector.load %arg9[%c0_9, %c0_10] : memref<1x32xf32, #tpu.memory_space<vmem>>, vector<1x32xf32>
    %c0_11 = arith.constant 0 : index
    %c0_12 = arith.constant 0 : index
    %6 = vector.load %arg10[%c0_11, %c0_12] : memref<1x32xf32, #tpu.memory_space<vmem>>, vector<1x32xf32>
    %c0_13 = arith.constant 0 : index
    %c0_14 = arith.constant 0 : index
    %7 = vector.load %arg11[%c0_13, %c0_14] : memref<32x128xf32, #tpu.memory_space<vmem>>, vector<32x128xf32>
    %c0_15 = arith.constant 0 : index
    %c0_16 = arith.constant 0 : index
    %8 = vector.load %arg12[%c0_15, %c0_16] : memref<1x128xf32, #tpu.memory_space<vmem>>, vector<1x128xf32>
    %c0_17 = arith.constant 0 : index
    %c0_18 = arith.constant 0 : index
    %9 = vector.load %arg13[%c0_17, %c0_18] : memref<128x32xf32, #tpu.memory_space<vmem>>, vector<128x32xf32>
    %c0_19 = arith.constant 0 : index
    %c0_20 = arith.constant 0 : index
    %10 = vector.load %arg14[%c0_19, %c0_20] : memref<1x32xf32, #tpu.memory_space<vmem>>, vector<1x32xf32>
    %c0_21 = arith.constant 0 : index
    %c0_22 = arith.constant 0 : index
    %11 = vector.load %arg15[%c0_21, %c0_22] : memref<1x32xf32, #tpu.memory_space<vmem>>, vector<1x32xf32>
    %c0_23 = arith.constant 0 : index
    %c0_24 = arith.constant 0 : index
    %12 = vector.load %arg16[%c0_23, %c0_24] : memref<1x32xf32, #tpu.memory_space<vmem>>, vector<1x32xf32>
    %c0_25 = arith.constant 0 : index
    %c0_26 = arith.constant 0 : index
    %c0_27 = arith.constant 0 : index
    %13 = vector.load %arg0[%c0_25, %c0_26, %c0_27] : memref<2x8x32xf32, #tpu.memory_space<vmem>>, vector<1x8x32xf32>
    %14 = vector.shape_cast %13 : vector<1x8x32xf32> to vector<8x32xf32>
    %c0_28 = arith.constant 0 : index
    %c0_29 = arith.constant 0 : index
    %c0_30 = arith.constant 0 : index
    %15 = vector.load %arg1[%c0_28, %c0_29, %c0_30] : memref<2x8x32xf32, #tpu.memory_space<vmem>>, vector<1x8x32xf32>
    %16 = vector.shape_cast %15 : vector<1x8x32xf32> to vector<8x32xf32>
    %c0_31 = arith.constant 0 : index
    %c0_32 = arith.constant 0 : index
    %c0_33 = arith.constant 0 : index
    %17 = vector.load %arg2[%c0_31, %c0_32, %c0_33] : memref<2x8x32xf32, #tpu.memory_space<vmem>>, vector<1x8x32xf32>
    %18 = vector.shape_cast %17 : vector<1x8x32xf32> to vector<8x32xf32>
    %c0_34 = arith.constant 0 : index
    %c0_35 = arith.constant 0 : index
    %c0_36 = arith.constant 0 : index
    %19 = vector.load %arg3[%c0_34, %c0_35, %c0_36] : memref<2x8x8xf32, #tpu.memory_space<vmem>>, vector<1x8x8xf32>
    %20 = vector.shape_cast %19 : vector<1x8x8xf32> to vector<8x8xf32>
    %cst = arith.constant dense<0.000000e+00> : vector<8x32xf32>
    %21 = tpu.matmul %14, %0, %cst {dimension_numbers = #tpu.dot_dimension_numbers<[1], [0], [0], [1], [0, 0, 1, 1], [], []>} : vector<8x32xf32>, vector<32x32xf32>, vector<8x32xf32> -> vector<8x32xf32>
    %cst_37 = arith.constant dense<0.000000e+00> : vector<8x32xf32>
    %22 = tpu.matmul %16, %1, %cst_37 {dimension_numbers = #tpu.dot_dimension_numbers<[1], [0], [0], [1], [0, 0, 1, 1], [], []>} : vector<8x32xf32>, vector<32x32xf32>, vector<8x32xf32> -> vector<8x32xf32>
    %cst_38 = arith.constant dense<0.000000e+00> : vector<8x32xf32>
    %23 = tpu.matmul %18, %2, %cst_38 {dimension_numbers = #tpu.dot_dimension_numbers<[1], [0], [0], [1], [0, 0, 1, 1], [], []>} : vector<8x32xf32>, vector<32x32xf32>, vector<8x32xf32> -> vector<8x32xf32>
    %cst_39 = arith.constant 0.000000e+00 : f32
    %24 = vector.broadcast %cst_39 : f32 to vector<8x32xf32>
    %25 = vector.extract_strided_slice %23 {offsets = [0, 0], sizes = [8, 8], strides = [1, 1]} : vector<8x32xf32> to vector<8x8xf32>
    %26 = vector.extract_strided_slice %22 {offsets = [0, 0], sizes = [8, 8], strides = [1, 1]} : vector<8x32xf32> to vector<8x8xf32>
    %27 = vector.extract_strided_slice %21 {offsets = [0, 0], sizes = [8, 8], strides = [1, 1]} : vector<8x32xf32> to vector<8x8xf32>
    %28 = tpu.transpose %26, [1, 0] : vector<8x8xf32> -> vector<8x8xf32>
    %cst_40 = arith.constant dense<0.000000e+00> : vector<8x8xf32>
    %29 = tpu.matmul %25, %28, %cst_40 {dimension_numbers = #tpu.dot_dimension_numbers<[1], [0], [0], [1], [0, 0, 1, 1], [], []>} : vector<8x8xf32>, vector<8x8xf32>, vector<8x8xf32> -> vector<8x8xf32>
    %30 = arith.addf %29, %20 : vector<8x8xf32>
    %cst_41 = arith.constant 0.176776692 : f32
    %31 = vector.broadcast %cst_41 : f32 to vector<8x8xf32>
    %32 = arith.mulf %30, %31 : vector<8x8xf32>
    %cst_42 = arith.constant dense<0xFF800000> : vector<8xf32>
    %33 = vector.multi_reduction <maximumf>, %32, %cst_42 [1] : vector<8x8xf32> to vector<8xf32>
    %34 = vector.shape_cast %33 : vector<8xf32> to vector<8x1xf32>
    %35 = vector.broadcast %34 : vector<8x1xf32> to vector<8x8xf32>
    %36 = arith.subf %32, %35 : vector<8x8xf32>
    %37 = math.exp %36 : vector<8x8xf32>
    %cst_43 = arith.constant dense<0.000000e+00> : vector<8xf32>
    %38 = vector.multi_reduction <add>, %37, %cst_43 [1] : vector<8x8xf32> to vector<8xf32>
    %39 = vector.shape_cast %38 : vector<8xf32> to vector<8x1xf32>
    %40 = tpu.reciprocal %39 {approx = true} : vector<8x1xf32> -> vector<8x1xf32>
    %41 = vector.broadcast %40 : vector<8x1xf32> to vector<8x8xf32>
    %42 = arith.mulf %37, %41 : vector<8x8xf32>
    %cst_44 = arith.constant dense<0.000000e+00> : vector<8x8xf32>
    %43 = tpu.matmul %42, %27, %cst_44 {dimension_numbers = #tpu.dot_dimension_numbers<[1], [0], [0], [1], [0, 0, 1, 1], [], []>} : vector<8x8xf32>, vector<8x8xf32>, vector<8x8xf32> -> vector<8x8xf32>
    %44 = vector.extract_strided_slice %3 {offsets = [0, 0], sizes = [8, 32], strides = [1, 1]} : vector<32x32xf32> to vector<8x32xf32>
    %cst_45 = arith.constant dense<0.000000e+00> : vector<8x32xf32>
    %45 = tpu.matmul %43, %44, %cst_45 {dimension_numbers = #tpu.dot_dimension_numbers<[1], [0], [0], [1], [0, 0, 1, 1], [], []>} : vector<8x8xf32>, vector<8x32xf32>, vector<8x32xf32> -> vector<8x32xf32>
    %46 = arith.addf %24, %45 : vector<8x32xf32>
    %47 = vector.extract_strided_slice %23 {offsets = [0, 8], sizes = [8, 8], strides = [1, 1]} : vector<8x32xf32> to vector<8x8xf32>
    %48 = vector.extract_strided_slice %22 {offsets = [0, 8], sizes = [8, 8], strides = [1, 1]} : vector<8x32xf32> to vector<8x8xf32>
    %49 = vector.extract_strided_slice %21 {offsets = [0, 8], sizes = [8, 8], strides = [1, 1]} : vector<8x32xf32> to vector<8x8xf32>
    %50 = tpu.transpose %48, [1, 0] : vector<8x8xf32> -> vector<8x8xf32>
    %cst_46 = arith.constant dense<0.000000e+00> : vector<8x8xf32>
    %51 = tpu.matmul %47, %50, %cst_46 {dimension_numbers = #tpu.dot_dimension_numbers<[1], [0], [0], [1], [0, 0, 1, 1], [], []>} : vector<8x8xf32>, vector<8x8xf32>, vector<8x8xf32> -> vector<8x8xf32>
    %52 = arith.addf %51, %20 : vector<8x8xf32>
    %cst_47 = arith.constant 0.176776692 : f32
    %53 = vector.broadcast %cst_47 : f32 to vector<8x8xf32>
    %54 = arith.mulf %52, %53 : vector<8x8xf32>
    %cst_48 = arith.constant dense<0xFF800000> : vector<8xf32>
    %55 = vector.multi_reduction <maximumf>, %54, %cst_48 [1] : vector<8x8xf32> to vector<8xf32>
    %56 = vector.shape_cast %55 : vector<8xf32> to vector<8x1xf32>
    %57 = vector.broadcast %56 : vector<8x1xf32> to vector<8x8xf32>
    %58 = arith.subf %54, %57 : vector<8x8xf32>
    %59 = math.exp %58 : vector<8x8xf32>
    %cst_49 = arith.constant dense<0.000000e+00> : vector<8xf32>
    %60 = vector.multi_reduction <add>, %59, %cst_49 [1] : vector<8x8xf32> to vector<8xf32>
    %61 = vector.shape_cast %60 : vector<8xf32> to vector<8x1xf32>
    %62 = tpu.reciprocal %61 {approx = true} : vector<8x1xf32> -> vector<8x1xf32>
    %63 = vector.broadcast %62 : vector<8x1xf32> to vector<8x8xf32>
    %64 = arith.mulf %59, %63 : vector<8x8xf32>
    %cst_50 = arith.constant dense<0.000000e+00> : vector<8x8xf32>
    %65 = tpu.matmul %64, %49, %cst_50 {dimension_numbers = #tpu.dot_dimension_numbers<[1], [0], [0], [1], [0, 0, 1, 1], [], []>} : vector<8x8xf32>, vector<8x8xf32>, vector<8x8xf32> -> vector<8x8xf32>
    %66 = vector.extract_strided_slice %3 {offsets = [8, 0], sizes = [8, 32], strides = [1, 1]} : vector<32x32xf32> to vector<8x32xf32>
    %cst_51 = arith.constant dense<0.000000e+00> : vector<8x32xf32>
    %67 = tpu.matmul %65, %66, %cst_51 {dimension_numbers = #tpu.dot_dimension_numbers<[1], [0], [0], [1], [0, 0, 1, 1], [], []>} : vector<8x8xf32>, vector<8x32xf32>, vector<8x32xf32> -> vector<8x32xf32>
    %68 = arith.addf %46, %67 : vector<8x32xf32>
    %69 = vector.extract_strided_slice %23 {offsets = [0, 16], sizes = [8, 8], strides = [1, 1]} : vector<8x32xf32> to vector<8x8xf32>
    %70 = vector.extract_strided_slice %22 {offsets = [0, 16], sizes = [8, 8], strides = [1, 1]} : vector<8x32xf32> to vector<8x8xf32>
    %71 = vector.extract_strided_slice %21 {offsets = [0, 16], sizes = [8, 8], strides = [1, 1]} : vector<8x32xf32> to vector<8x8xf32>
    %72 = tpu.transpose %70, [1, 0] : vector<8x8xf32> -> vector<8x8xf32>
    %cst_52 = arith.constant dense<0.000000e+00> : vector<8x8xf32>
    %73 = tpu.matmul %69, %72, %cst_52 {dimension_numbers = #tpu.dot_dimension_numbers<[1], [0], [0], [1], [0, 0, 1, 1], [], []>} : vector<8x8xf32>, vector<8x8xf32>, vector<8x8xf32> -> vector<8x8xf32>
    %74 = arith.addf %73, %20 : vector<8x8xf32>
    %cst_53 = arith.constant 0.176776692 : f32
    %75 = vector.broadcast %cst_53 : f32 to vector<8x8xf32>
    %76 = arith.mulf %74, %75 : vector<8x8xf32>
    %cst_54 = arith.constant dense<0xFF800000> : vector<8xf32>
    %77 = vector.multi_reduction <maximumf>, %76, %cst_54 [1] : vector<8x8xf32> to vector<8xf32>
    %78 = vector.shape_cast %77 : vector<8xf32> to vector<8x1xf32>
    %79 = vector.broadcast %78 : vector<8x1xf32> to vector<8x8xf32>
    %80 = arith.subf %76, %79 : vector<8x8xf32>
    %81 = math.exp %80 : vector<8x8xf32>
    %cst_55 = arith.constant dense<0.000000e+00> : vector<8xf32>
    %82 = vector.multi_reduction <add>, %81, %cst_55 [1] : vector<8x8xf32> to vector<8xf32>
    %83 = vector.shape_cast %82 : vector<8xf32> to vector<8x1xf32>
    %84 = tpu.reciprocal %83 {approx = true} : vector<8x1xf32> -> vector<8x1xf32>
    %85 = vector.broadcast %84 : vector<8x1xf32> to vector<8x8xf32>
    %86 = arith.mulf %81, %85 : vector<8x8xf32>
    %cst_56 = arith.constant dense<0.000000e+00> : vector<8x8xf32>
    %87 = tpu.matmul %86, %71, %cst_56 {dimension_numbers = #tpu.dot_dimension_numbers<[1], [0], [0], [1], [0, 0, 1, 1], [], []>} : vector<8x8xf32>, vector<8x8xf32>, vector<8x8xf32> -> vector<8x8xf32>
    %88 = vector.extract_strided_slice %3 {offsets = [16, 0], sizes = [8, 32], strides = [1, 1]} : vector<32x32xf32> to vector<8x32xf32>
    %cst_57 = arith.constant dense<0.000000e+00> : vector<8x32xf32>
    %89 = tpu.matmul %87, %88, %cst_57 {dimension_numbers = #tpu.dot_dimension_numbers<[1], [0], [0], [1], [0, 0, 1, 1], [], []>} : vector<8x8xf32>, vector<8x32xf32>, vector<8x32xf32> -> vector<8x32xf32>
    %90 = arith.addf %68, %89 : vector<8x32xf32>
    %91 = vector.extract_strided_slice %23 {offsets = [0, 24], sizes = [8, 8], strides = [1, 1]} : vector<8x32xf32> to vector<8x8xf32>
    %92 = vector.extract_strided_slice %22 {offsets = [0, 24], sizes = [8, 8], strides = [1, 1]} : vector<8x32xf32> to vector<8x8xf32>
    %93 = vector.extract_strided_slice %21 {offsets = [0, 24], sizes = [8, 8], strides = [1, 1]} : vector<8x32xf32> to vector<8x8xf32>
    %94 = tpu.transpose %92, [1, 0] : vector<8x8xf32> -> vector<8x8xf32>
    %cst_58 = arith.constant dense<0.000000e+00> : vector<8x8xf32>
    %95 = tpu.matmul %91, %94, %cst_58 {dimension_numbers = #tpu.dot_dimension_numbers<[1], [0], [0], [1], [0, 0, 1, 1], [], []>} : vector<8x8xf32>, vector<8x8xf32>, vector<8x8xf32> -> vector<8x8xf32>
    %96 = arith.addf %95, %20 : vector<8x8xf32>
    %cst_59 = arith.constant 0.176776692 : f32
    %97 = vector.broadcast %cst_59 : f32 to vector<8x8xf32>
    %98 = arith.mulf %96, %97 : vector<8x8xf32>
    %cst_60 = arith.constant dense<0xFF800000> : vector<8xf32>
    %99 = vector.multi_reduction <maximumf>, %98, %cst_60 [1] : vector<8x8xf32> to vector<8xf32>
    %100 = vector.shape_cast %99 : vector<8xf32> to vector<8x1xf32>
    %101 = vector.broadcast %100 : vector<8x1xf32> to vector<8x8xf32>
    %102 = arith.subf %98, %101 : vector<8x8xf32>
    %103 = math.exp %102 : vector<8x8xf32>
    %cst_61 = arith.constant dense<0.000000e+00> : vector<8xf32>
    %104 = vector.multi_reduction <add>, %103, %cst_61 [1] : vector<8x8xf32> to vector<8xf32>
    %105 = vector.shape_cast %104 : vector<8xf32> to vector<8x1xf32>
    %106 = tpu.reciprocal %105 {approx = true} : vector<8x1xf32> -> vector<8x1xf32>
    %107 = vector.broadcast %106 : vector<8x1xf32> to vector<8x8xf32>
    %108 = arith.mulf %103, %107 : vector<8x8xf32>
    %cst_62 = arith.constant dense<0.000000e+00> : vector<8x8xf32>
    %109 = tpu.matmul %108, %93, %cst_62 {dimension_numbers = #tpu.dot_dimension_numbers<[1], [0], [0], [1], [0, 0, 1, 1], [], []>} : vector<8x8xf32>, vector<8x8xf32>, vector<8x8xf32> -> vector<8x8xf32>
    %110 = vector.extract_strided_slice %3 {offsets = [24, 0], sizes = [8, 32], strides = [1, 1]} : vector<32x32xf32> to vector<8x32xf32>
    %cst_63 = arith.constant dense<0.000000e+00> : vector<8x32xf32>
    %111 = tpu.matmul %109, %110, %cst_63 {dimension_numbers = #tpu.dot_dimension_numbers<[1], [0], [0], [1], [0, 0, 1, 1], [], []>} : vector<8x8xf32>, vector<8x32xf32>, vector<8x32xf32> -> vector<8x32xf32>
    %112 = arith.addf %90, %111 : vector<8x32xf32>
    %113 = vector.broadcast %4 : vector<1x32xf32> to vector<8x32xf32>
    %114 = arith.addf %112, %113 : vector<8x32xf32>
    %115 = arith.addf %114, %18 : vector<8x32xf32>
    %cst_64 = arith.constant dense<0.000000e+00> : vector<8xf32>
    %116 = vector.multi_reduction <add>, %115, %cst_64 [1] : vector<8x32xf32> to vector<8xf32>
    %117 = vector.shape_cast %116 : vector<8xf32> to vector<8x1xf32>
    %cst_65 = arith.constant 3.200000e+01 : f32
    %118 = vector.broadcast %cst_65 : f32 to vector<8x1xf32>
    %119 = arith.divf %117, %118 : vector<8x1xf32>
    %120 = vector.broadcast %119 : vector<8x1xf32> to vector<8x32xf32>
    %121 = arith.subf %115, %120 : vector<8x32xf32>
    %122 = arith.mulf %121, %121 : vector<8x32xf32>
    %cst_66 = arith.constant dense<0.000000e+00> : vector<8xf32>
    %123 = vector.multi_reduction <add>, %122, %cst_66 [1] : vector<8x32xf32> to vector<8xf32>
    %124 = vector.shape_cast %123 : vector<8xf32> to vector<8x1xf32>
    %cst_67 = arith.constant 3.200000e+01 : f32
    %125 = vector.broadcast %cst_67 : f32 to vector<8x1xf32>
    %126 = arith.divf %124, %125 : vector<8x1xf32>
    %127 = vector.broadcast %119 : vector<8x1xf32> to vector<8x32xf32>
    %128 = arith.subf %115, %127 : vector<8x32xf32>
    %cst_68 = arith.constant 9.99999974E-6 : f32
    %129 = vector.broadcast %cst_68 : f32 to vector<8x1xf32>
    %130 = arith.addf %126, %129 : vector<8x1xf32>
    %131 = math.rsqrt %130 : vector<8x1xf32>
    %132 = vector.broadcast %131 : vector<8x1xf32> to vector<8x32xf32>
    %133 = arith.mulf %128, %132 : vector<8x32xf32>
    %134 = vector.broadcast %5 : vector<1x32xf32> to vector<8x32xf32>
    %135 = arith.mulf %133, %134 : vector<8x32xf32>
    %136 = vector.broadcast %6 : vector<1x32xf32> to vector<8x32xf32>
    %137 = arith.addf %135, %136 : vector<8x32xf32>
    %cst_69 = arith.constant dense<0.000000e+00> : vector<8x128xf32>
    %138 = tpu.matmul %137, %7, %cst_69 {dimension_numbers = #tpu.dot_dimension_numbers<[1], [0], [0], [1], [0, 0, 1, 1], [], []>} : vector<8x32xf32>, vector<32x128xf32>, vector<8x128xf32> -> vector<8x128xf32>
    %139 = vector.broadcast %8 : vector<1x128xf32> to vector<8x128xf32>
    %140 = arith.addf %138, %139 : vector<8x128xf32>
    %cst_70 = arith.constant 0.000000e+00 : f32
    %141 = vector.broadcast %cst_70 : f32 to vector<8x128xf32>
    %142 = arith.maximumf %140, %141 : vector<8x128xf32>
    %cst_71 = arith.constant dense<0.000000e+00> : vector<8x32xf32>
    %143 = tpu.matmul %142, %9, %cst_71 {dimension_numbers = #tpu.dot_dimension_numbers<[1], [0], [0], [1], [0, 0, 1, 1], [], []>} : vector<8x128xf32>, vector<128x32xf32>, vector<8x32xf32> -> vector<8x32xf32>
    %144 = vector.broadcast %10 : vector<1x32xf32> to vector<8x32xf32>
    %145 = arith.addf %143, %144 : vector<8x32xf32>
    %146 = arith.addf %145, %137 : vector<8x32xf32>
    %cst_72 = arith.constant dense<0.000000e+00> : vector<8xf32>
    %147 = vector.multi_reduction <add>, %146, %cst_72 [1] : vector<8x32xf32> to vector<8xf32>
    %148 = vector.shape_cast %147 : vector<8xf32> to vector<8x1xf32>
    %cst_73 = arith.constant 3.200000e+01 : f32
    %149 = vector.broadcast %cst_73 : f32 to vector<8x1xf32>
    %150 = arith.divf %148, %149 : vector<8x1xf32>
    %151 = vector.broadcast %150 : vector<8x1xf32> to vector<8x32xf32>
    %152 = arith.subf %146, %151 : vector<8x32xf32>
    %153 = arith.mulf %152, %152 : vector<8x32xf32>
    %cst_74 = arith.constant dense<0.000000e+00> : vector<8xf32>
    %154 = vector.multi_reduction <add>, %153, %cst_74 [1] : vector<8x32xf32> to vector<8xf32>
    %155 = vector.shape_cast %154 : vector<8xf32> to vector<8x1xf32>
    %cst_75 = arith.constant 3.200000e+01 : f32
    %156 = vector.broadcast %cst_75 : f32 to vector<8x1xf32>
    %157 = arith.divf %155, %156 : vector<8x1xf32>
    %158 = vector.broadcast %150 : vector<8x1xf32> to vector<8x32xf32>
    %159 = arith.subf %146, %158 : vector<8x32xf32>
    %cst_76 = arith.constant 9.99999974E-6 : f32
    %160 = vector.broadcast %cst_76 : f32 to vector<8x1xf32>
    %161 = arith.addf %157, %160 : vector<8x1xf32>
    %162 = math.rsqrt %161 : vector<8x1xf32>
    %163 = vector.broadcast %162 : vector<8x1xf32> to vector<8x32xf32>
    %164 = arith.mulf %159, %163 : vector<8x32xf32>
    %165 = vector.broadcast %11 : vector<1x32xf32> to vector<8x32xf32>
    %166 = arith.mulf %164, %165 : vector<8x32xf32>
    %167 = vector.broadcast %12 : vector<1x32xf32> to vector<8x32xf32>
    %168 = arith.addf %166, %167 : vector<8x32xf32>
    %c0_77 = arith.constant 0 : index
    %c0_78 = arith.constant 0 : index
    %c0_79 = arith.constant 0 : index
    %169 = vector.load %arg17[%c0_77, %c0_78, %c0_79] : memref<2x8x32xf32, #tpu.memory_space<vmem>>, vector<1x8x32xf32>
    %170 = vector.shape_cast %169 : vector<1x8x32xf32> to vector<8x32xf32>
    %171 = vector.shape_cast %168 : vector<8x32xf32> to vector<1x8x32xf32>
    tpu.vector_store %arg17[%c0_77, %c0_78, %c0_79], %171 {strides = array<i32>} : memref<2x8x32xf32, #tpu.memory_space<vmem>>, vector<1x8x32xf32>,
    %c1 = arith.constant 1 : index
    %c0_80 = arith.constant 0 : index
    %c0_81 = arith.constant 0 : index
    %172 = vector.load %arg0[%c1, %c0_80, %c0_81] : memref<2x8x32xf32, #tpu.memory_space<vmem>>, vector<1x8x32xf32>
    %173 = vector.shape_cast %172 : vector<1x8x32xf32> to vector<8x32xf32>
    %c1_82 = arith.constant 1 : index
    %c0_83 = arith.constant 0 : index
    %c0_84 = arith.constant 0 : index
    %174 = vector.load %arg1[%c1_82, %c0_83, %c0_84] : memref<2x8x32xf32, #tpu.memory_space<vmem>>, vector<1x8x32xf32>
    %175 = vector.shape_cast %174 : vector<1x8x32xf32> to vector<8x32xf32>
    %c1_85 = arith.constant 1 : index
    %c0_86 = arith.constant 0 : index
    %c0_87 = arith.constant 0 : index
    %176 = vector.load %arg2[%c1_85, %c0_86, %c0_87] : memref<2x8x32xf32, #tpu.memory_space<vmem>>, vector<1x8x32xf32>
    %177 = vector.shape_cast %176 : vector<1x8x32xf32> to vector<8x32xf32>
    %c1_88 = arith.constant 1 : index
    %c0_89 = arith.constant 0 : index
    %c0_90 = arith.constant 0 : index
    %178 = vector.load %arg3[%c1_88, %c0_89, %c0_90] : memref<2x8x8xf32, #tpu.memory_space<vmem>>, vector<1x8x8xf32>
    %179 = vector.shape_cast %178 : vector<1x8x8xf32> to vector<8x8xf32>
    %cst_91 = arith.constant dense<0.000000e+00> : vector<8x32xf32>
    %180 = tpu.matmul %173, %0, %cst_91 {dimension_numbers = #tpu.dot_dimension_numbers<[1], [0], [0], [1], [0, 0, 1, 1], [], []>} : vector<8x32xf32>, vector<32x32xf32>, vector<8x32xf32> -> vector<8x32xf32>
    %cst_92 = arith.constant dense<0.000000e+00> : vector<8x32xf32>
    %181 = tpu.matmul %175, %1, %cst_92 {dimension_numbers = #tpu.dot_dimension_numbers<[1], [0], [0], [1], [0, 0, 1, 1], [], []>} : vector<8x32xf32>, vector<32x32xf32>, vector<8x32xf32> -> vector<8x32xf32>
    %cst_93 = arith.constant dense<0.000000e+00> : vector<8x32xf32>
    %182 = tpu.matmul %177, %2, %cst_93 {dimension_numbers = #tpu.dot_dimension_numbers<[1], [0], [0], [1], [0, 0, 1, 1], [], []>} : vector<8x32xf32>, vector<32x32xf32>, vector<8x32xf32> -> vector<8x32xf32>
    %cst_94 = arith.constant 0.000000e+00 : f32
    %183 = vector.broadcast %cst_94 : f32 to vector<8x32xf32>
    %184 = vector.extract_strided_slice %182 {offsets = [0, 0], sizes = [8, 8], strides = [1, 1]} : vector<8x32xf32> to vector<8x8xf32>
    %185 = vector.extract_strided_slice %181 {offsets = [0, 0], sizes = [8, 8], strides = [1, 1]} : vector<8x32xf32> to vector<8x8xf32>
    %186 = vector.extract_strided_slice %180 {offsets = [0, 0], sizes = [8, 8], strides = [1, 1]} : vector<8x32xf32> to vector<8x8xf32>
    %187 = tpu.transpose %185, [1, 0] : vector<8x8xf32> -> vector<8x8xf32>
    %cst_95 = arith.constant dense<0.000000e+00> : vector<8x8xf32>
    %188 = tpu.matmul %184, %187, %cst_95 {dimension_numbers = #tpu.dot_dimension_numbers<[1], [0], [0], [1], [0, 0, 1, 1], [], []>} : vector<8x8xf32>, vector<8x8xf32>, vector<8x8xf32> -> vector<8x8xf32>
    %189 = arith.addf %188, %179 : vector<8x8xf32>
    %cst_96 = arith.constant 0.176776692 : f32
    %190 = vector.broadcast %cst_96 : f32 to vector<8x8xf32>
    %191 = arith.mulf %189, %190 : vector<8x8xf32>
    %cst_97 = arith.constant dense<0xFF800000> : vector<8xf32>
    %192 = vector.multi_reduction <maximumf>, %191, %cst_97 [1] : vector<8x8xf32> to vector<8xf32>
    %193 = vector.shape_cast %192 : vector<8xf32> to vector<8x1xf32>
    %194 = vector.broadcast %193 : vector<8x1xf32> to vector<8x8xf32>
    %195 = arith.subf %191, %194 : vector<8x8xf32>
    %196 = math.exp %195 : vector<8x8xf32>
    %cst_98 = arith.constant dense<0.000000e+00> : vector<8xf32>
    %197 = vector.multi_reduction <add>, %196, %cst_98 [1] : vector<8x8xf32> to vector<8xf32>
    %198 = vector.shape_cast %197 : vector<8xf32> to vector<8x1xf32>
    %199 = tpu.reciprocal %198 {approx = true} : vector<8x1xf32> -> vector<8x1xf32>
    %200 = vector.broadcast %199 : vector<8x1xf32> to vector<8x8xf32>
    %201 = arith.mulf %196, %200 : vector<8x8xf32>
    %cst_99 = arith.constant dense<0.000000e+00> : vector<8x8xf32>
    %202 = tpu.matmul %201, %186, %cst_99 {dimension_numbers = #tpu.dot_dimension_numbers<[1], [0], [0], [1], [0, 0, 1, 1], [], []>} : vector<8x8xf32>, vector<8x8xf32>, vector<8x8xf32> -> vector<8x8xf32>
    %203 = vector.extract_strided_slice %3 {offsets = [0, 0], sizes = [8, 32], strides = [1, 1]} : vector<32x32xf32> to vector<8x32xf32>
    %cst_100 = arith.constant dense<0.000000e+00> : vector<8x32xf32>
    %204 = tpu.matmul %202, %203, %cst_100 {dimension_numbers = #tpu.dot_dimension_numbers<[1], [0], [0], [1], [0, 0, 1, 1], [], []>} : vector<8x8xf32>, vector<8x32xf32>, vector<8x32xf32> -> vector<8x32xf32>
    %205 = arith.addf %183, %204 : vector<8x32xf32>
    %206 = vector.extract_strided_slice %182 {offsets = [0, 8], sizes = [8, 8], strides = [1, 1]} : vector<8x32xf32> to vector<8x8xf32>
    %207 = vector.extract_strided_slice %181 {offsets = [0, 8], sizes = [8, 8], strides = [1, 1]} : vector<8x32xf32> to vector<8x8xf32>
    %208 = vector.extract_strided_slice %180 {offsets = [0, 8], sizes = [8, 8], strides = [1, 1]} : vector<8x32xf32> to vector<8x8xf32>
    %209 = tpu.transpose %207, [1, 0] : vector<8x8xf32> -> vector<8x8xf32>
    %cst_101 = arith.constant dense<0.000000e+00> : vector<8x8xf32>
    %210 = tpu.matmul %206, %209, %cst_101 {dimension_numbers = #tpu.dot_dimension_numbers<[1], [0], [0], [1], [0, 0, 1, 1], [], []>} : vector<8x8xf32>, vector<8x8xf32>, vector<8x8xf32> -> vector<8x8xf32>
    %211 = arith.addf %210, %179 : vector<8x8xf32>
    %cst_102 = arith.constant 0.176776692 : f32
    %212 = vector.broadcast %cst_102 : f32 to vector<8x8xf32>
    %213 = arith.mulf %211, %212 : vector<8x8xf32>
    %cst_103 = arith.constant dense<0xFF800000> : vector<8xf32>
    %214 = vector.multi_reduction <maximumf>, %213, %cst_103 [1] : vector<8x8xf32> to vector<8xf32>
    %215 = vector.shape_cast %214 : vector<8xf32> to vector<8x1xf32>
    %216 = vector.broadcast %215 : vector<8x1xf32> to vector<8x8xf32>
    %217 = arith.subf %213, %216 : vector<8x8xf32>
    %218 = math.exp %217 : vector<8x8xf32>
    %cst_104 = arith.constant dense<0.000000e+00> : vector<8xf32>
    %219 = vector.multi_reduction <add>, %218, %cst_104 [1] : vector<8x8xf32> to vector<8xf32>
    %220 = vector.shape_cast %219 : vector<8xf32> to vector<8x1xf32>
    %221 = tpu.reciprocal %220 {approx = true} : vector<8x1xf32> -> vector<8x1xf32>
    %222 = vector.broadcast %221 : vector<8x1xf32> to vector<8x8xf32>
    %223 = arith.mulf %218, %222 : vector<8x8xf32>
    %cst_105 = arith.constant dense<0.000000e+00> : vector<8x8xf32>
    %224 = tpu.matmul %223, %208, %cst_105 {dimension_numbers = #tpu.dot_dimension_numbers<[1], [0], [0], [1], [0, 0, 1, 1], [], []>} : vector<8x8xf32>, vector<8x8xf32>, vector<8x8xf32> -> vector<8x8xf32>
    %225 = vector.extract_strided_slice %3 {offsets = [8, 0], sizes = [8, 32], strides = [1, 1]} : vector<32x32xf32> to vector<8x32xf32>
    %cst_106 = arith.constant dense<0.000000e+00> : vector<8x32xf32>
    %226 = tpu.matmul %224, %225, %cst_106 {dimension_numbers = #tpu.dot_dimension_numbers<[1], [0], [0], [1], [0, 0, 1, 1], [], []>} : vector<8x8xf32>, vector<8x32xf32>, vector<8x32xf32> -> vector<8x32xf32>
    %227 = arith.addf %205, %226 : vector<8x32xf32>
    %228 = vector.extract_strided_slice %182 {offsets = [0, 16], sizes = [8, 8], strides = [1, 1]} : vector<8x32xf32> to vector<8x8xf32>
    %229 = vector.extract_strided_slice %181 {offsets = [0, 16], sizes = [8, 8], strides = [1, 1]} : vector<8x32xf32> to vector<8x8xf32>
    %230 = vector.extract_strided_slice %180 {offsets = [0, 16], sizes = [8, 8], strides = [1, 1]} : vector<8x32xf32> to vector<8x8xf32>
    %231 = tpu.transpose %229, [1, 0] : vector<8x8xf32> -> vector<8x8xf32>
    %cst_107 = arith.constant dense<0.000000e+00> : vector<8x8xf32>
    %232 = tpu.matmul %228, %231, %cst_107 {dimension_numbers = #tpu.dot_dimension_numbers<[1], [0], [0], [1], [0, 0, 1, 1], [], []>} : vector<8x8xf32>, vector<8x8xf32>, vector<8x8xf32> -> vector<8x8xf32>
    %233 = arith.addf %232, %179 : vector<8x8xf32>
    %cst_108 = arith.constant 0.176776692 : f32
    %234 = vector.broadcast %cst_108 : f32 to vector<8x8xf32>
    %235 = arith.mulf %233, %234 : vector<8x8xf32>
    %cst_109 = arith.constant dense<0xFF800000> : vector<8xf32>
    %236 = vector.multi_reduction <maximumf>, %235, %cst_109 [1] : vector<8x8xf32> to vector<8xf32>
    %237 = vector.shape_cast %236 : vector<8xf32> to vector<8x1xf32>
    %238 = vector.broadcast %237 : vector<8x1xf32> to vector<8x8xf32>
    %239 = arith.subf %235, %238 : vector<8x8xf32>
    %240 = math.exp %239 : vector<8x8xf32>
    %cst_110 = arith.constant dense<0.000000e+00> : vector<8xf32>
    %241 = vector.multi_reduction <add>, %240, %cst_110 [1] : vector<8x8xf32> to vector<8xf32>
    %242 = vector.shape_cast %241 : vector<8xf32> to vector<8x1xf32>
    %243 = tpu.reciprocal %242 {approx = true} : vector<8x1xf32> -> vector<8x1xf32>
    %244 = vector.broadcast %243 : vector<8x1xf32> to vector<8x8xf32>
    %245 = arith.mulf %240, %244 : vector<8x8xf32>
    %cst_111 = arith.constant dense<0.000000e+00> : vector<8x8xf32>
    %246 = tpu.matmul %245, %230, %cst_111 {dimension_numbers = #tpu.dot_dimension_numbers<[1], [0], [0], [1], [0, 0, 1, 1], [], []>} : vector<8x8xf32>, vector<8x8xf32>, vector<8x8xf32> -> vector<8x8xf32>
    %247 = vector.extract_strided_slice %3 {offsets = [16, 0], sizes = [8, 32], strides = [1, 1]} : vector<32x32xf32> to vector<8x32xf32>
    %cst_112 = arith.constant dense<0.000000e+00> : vector<8x32xf32>
    %248 = tpu.matmul %246, %247, %cst_112 {dimension_numbers = #tpu.dot_dimension_numbers<[1], [0], [0], [1], [0, 0, 1, 1], [], []>} : vector<8x8xf32>, vector<8x32xf32>, vector<8x32xf32> -> vector<8x32xf32>
    %249 = arith.addf %227, %248 : vector<8x32xf32>
    %250 = vector.extract_strided_slice %182 {offsets = [0, 24], sizes = [8, 8], strides = [1, 1]} : vector<8x32xf32> to vector<8x8xf32>
    %251 = vector.extract_strided_slice %181 {offsets = [0, 24], sizes = [8, 8], strides = [1, 1]} : vector<8x32xf32> to vector<8x8xf32>
    %252 = vector.extract_strided_slice %180 {offsets = [0, 24], sizes = [8, 8], strides = [1, 1]} : vector<8x32xf32> to vector<8x8xf32>
    %253 = tpu.transpose %251, [1, 0] : vector<8x8xf32> -> vector<8x8xf32>
    %cst_113 = arith.constant dense<0.000000e+00> : vector<8x8xf32>
    %254 = tpu.matmul %250, %253, %cst_113 {dimension_numbers = #tpu.dot_dimension_numbers<[1], [0], [0], [1], [0, 0, 1, 1], [], []>} : vector<8x8xf32>, vector<8x8xf32>, vector<8x8xf32> -> vector<8x8xf32>
    %255 = arith.addf %254, %179 : vector<8x8xf32>
    %cst_114 = arith.constant 0.176776692 : f32
    %256 = vector.broadcast %cst_114 : f32 to vector<8x8xf32>
    %257 = arith.mulf %255, %256 : vector<8x8xf32>
    %cst_115 = arith.constant dense<0xFF800000> : vector<8xf32>
    %258 = vector.multi_reduction <maximumf>, %257, %cst_115 [1] : vector<8x8xf32> to vector<8xf32>
    %259 = vector.shape_cast %258 : vector<8xf32> to vector<8x1xf32>
    %260 = vector.broadcast %259 : vector<8x1xf32> to vector<8x8xf32>
    %261 = arith.subf %257, %260 : vector<8x8xf32>
    %262 = math.exp %261 : vector<8x8xf32>
    %cst_116 = arith.constant dense<0.000000e+00> : vector<8xf32>
    %263 = vector.multi_reduction <add>, %262, %cst_116 [1] : vector<8x8xf32> to vector<8xf32>
    %264 = vector.shape_cast %263 : vector<8xf32> to vector<8x1xf32>
    %265 = tpu.reciprocal %264 {approx = true} : vector<8x1xf32> -> vector<8x1xf32>
    %266 = vector.broadcast %265 : vector<8x1xf32> to vector<8x8xf32>
    %267 = arith.mulf %262, %266 : vector<8x8xf32>
    %cst_117 = arith.constant dense<0.000000e+00> : vector<8x8xf32>
    %268 = tpu.matmul %267, %252, %cst_117 {dimension_numbers = #tpu.dot_dimension_numbers<[1], [0], [0], [1], [0, 0, 1, 1], [], []>} : vector<8x8xf32>, vector<8x8xf32>, vector<8x8xf32> -> vector<8x8xf32>
    %269 = vector.extract_strided_slice %3 {offsets = [24, 0], sizes = [8, 32], strides = [1, 1]} : vector<32x32xf32> to vector<8x32xf32>
    %cst_118 = arith.constant dense<0.000000e+00> : vector<8x32xf32>
    %270 = tpu.matmul %268, %269, %cst_118 {dimension_numbers = #tpu.dot_dimension_numbers<[1], [0], [0], [1], [0, 0, 1, 1], [], []>} : vector<8x8xf32>, vector<8x32xf32>, vector<8x32xf32> -> vector<8x32xf32>
    %271 = arith.addf %249, %270 : vector<8x32xf32>
    %272 = vector.broadcast %4 : vector<1x32xf32> to vector<8x32xf32>
    %273 = arith.addf %271, %272 : vector<8x32xf32>
    %274 = arith.addf %273, %177 : vector<8x32xf32>
    %cst_119 = arith.constant dense<0.000000e+00> : vector<8xf32>
    %275 = vector.multi_reduction <add>, %274, %cst_119 [1] : vector<8x32xf32> to vector<8xf32>
    %276 = vector.shape_cast %275 : vector<8xf32> to vector<8x1xf32>
    %cst_120 = arith.constant 3.200000e+01 : f32
    %277 = vector.broadcast %cst_120 : f32 to vector<8x1xf32>
    %278 = arith.divf %276, %277 : vector<8x1xf32>
    %279 = vector.broadcast %278 : vector<8x1xf32> to vector<8x32xf32>
    %280 = arith.subf %274, %279 : vector<8x32xf32>
    %281 = arith.mulf %280, %280 : vector<8x32xf32>
    %cst_121 = arith.constant dense<0.000000e+00> : vector<8xf32>
    %282 = vector.multi_reduction <add>, %281, %cst_121 [1] : vector<8x32xf32> to vector<8xf32>
    %283 = vector.shape_cast %282 : vector<8xf32> to vector<8x1xf32>
    %cst_122 = arith.constant 3.200000e+01 : f32
    %284 = vector.broadcast %cst_122 : f32 to vector<8x1xf32>
    %285 = arith.divf %283, %284 : vector<8x1xf32>
    %286 = vector.broadcast %278 : vector<8x1xf32> to vector<8x32xf32>
    %287 = arith.subf %274, %286 : vector<8x32xf32>
    %cst_123 = arith.constant 9.99999974E-6 : f32
    %288 = vector.broadcast %cst_123 : f32 to vector<8x1xf32>
    %289 = arith.addf %285, %288 : vector<8x1xf32>
    %290 = math.rsqrt %289 : vector<8x1xf32>
    %291 = vector.broadcast %290 : vector<8x1xf32> to vector<8x32xf32>
    %292 = arith.mulf %287, %291 : vector<8x32xf32>
    %293 = vector.broadcast %5 : vector<1x32xf32> to vector<8x32xf32>
    %294 = arith.mulf %292, %293 : vector<8x32xf32>
    %295 = vector.broadcast %6 : vector<1x32xf32> to vector<8x32xf32>
    %296 = arith.addf %294, %295 : vector<8x32xf32>
    %cst_124 = arith.constant dense<0.000000e+00> : vector<8x128xf32>
    %297 = tpu.matmul %296, %7, %cst_124 {dimension_numbers = #tpu.dot_dimension_numbers<[1], [0], [0], [1], [0, 0, 1, 1], [], []>} : vector<8x32xf32>, vector<32x128xf32>, vector<8x128xf32> -> vector<8x128xf32>
    %298 = vector.broadcast %8 : vector<1x128xf32> to vector<8x128xf32>
    %299 = arith.addf %297, %298 : vector<8x128xf32>
    %cst_125 = arith.constant 0.000000e+00 : f32
    %300 = vector.broadcast %cst_125 : f32 to vector<8x128xf32>
    %301 = arith.maximumf %299, %300 : vector<8x128xf32>
    %cst_126 = arith.constant dense<0.000000e+00> : vector<8x32xf32>
    %302 = tpu.matmul %301, %9, %cst_126 {dimension_numbers = #tpu.dot_dimension_numbers<[1], [0], [0], [1], [0, 0, 1, 1], [], []>} : vector<8x128xf32>, vector<128x32xf32>, vector<8x32xf32> -> vector<8x32xf32>
    %303 = vector.broadcast %10 : vector<1x32xf32> to vector<8x32xf32>
    %304 = arith.addf %302, %303 : vector<8x32xf32>
    %305 = arith.addf %304, %296 : vector<8x32xf32>
    %cst_127 = arith.constant dense<0.000000e+00> : vector<8xf32>
    %306 = vector.multi_reduction <add>, %305, %cst_127 [1] : vector<8x32xf32> to vector<8xf32>
    %307 = vector.shape_cast %306 : vector<8xf32> to vector<8x1xf32>
    %cst_128 = arith.constant 3.200000e+01 : f32
    %308 = vector.broadcast %cst_128 : f32 to vector<8x1xf32>
    %309 = arith.divf %307, %308 : vector<8x1xf32>
    %310 = vector.broadcast %309 : vector<8x1xf32> to vector<8x32xf32>
    %311 = arith.subf %305, %310 : vector<8x32xf32>
    %312 = arith.mulf %311, %311 : vector<8x32xf32>
    %cst_129 = arith.constant dense<0.000000e+00> : vector<8xf32>
    %313 = vector.multi_reduction <add>, %312, %cst_129 [1] : vector<8x32xf32> to vector<8xf32>
    %314 = vector.shape_cast %313 : vector<8xf32> to vector<8x1xf32>
    %cst_130 = arith.constant 3.200000e+01 : f32
    %315 = vector.broadcast %cst_130 : f32 to vector<8x1xf32>
    %316 = arith.divf %314, %315 : vector<8x1xf32>
    %317 = vector.broadcast %309 : vector<8x1xf32> to vector<8x32xf32>
    %318 = arith.subf %305, %317 : vector<8x32xf32>
    %cst_131 = arith.constant 9.99999974E-6 : f32
    %319 = vector.broadcast %cst_131 : f32 to vector<8x1xf32>
    %320 = arith.addf %316, %319 : vector<8x1xf32>
    %321 = math.rsqrt %320 : vector<8x1xf32>
    %322 = vector.broadcast %321 : vector<8x1xf32> to vector<8x32xf32>
    %323 = arith.mulf %318, %322 : vector<8x32xf32>
    %324 = vector.broadcast %11 : vector<1x32xf32> to vector<8x32xf32>
    %325 = arith.mulf %323, %324 : vector<8x32xf32>
    %326 = vector.broadcast %12 : vector<1x32xf32> to vector<8x32xf32>
    %327 = arith.addf %325, %326 : vector<8x32xf32>
    %c1_132 = arith.constant 1 : index
    %c0_133 = arith.constant 0 : index
    %c0_134 = arith.constant 0 : index
    %328 = vector.load %arg17[%c1_132, %c0_133, %c0_134] : memref<2x8x32xf32, #tpu.memory_space<vmem>>, vector<1x8x32xf32>
    %329 = vector.shape_cast %328 : vector<1x8x32xf32> to vector<8x32xf32>
    %330 = vector.shape_cast %327 : vector<8x32xf32> to vector<1x8x32xf32>
    tpu.vector_store %arg17[%c1_132, %c0_133, %c0_134], %330 {strides = array<i32>} : memref<2x8x32xf32, #tpu.memory_space<vmem>>, vector<1x8x32xf32>,
    return
  }
}

</mosaic_0001>

<llo_original>
// kernel: tpu_custom_call.1
$region0: #{tpu_custom_call.1}
  #allocation0 [shape = 'u32[]', space=smem, size = 0x4, offset = 0x4, fixed_abs, tag = 'smem constant byte address 0x4 - core index']
  #allocation1 [shape = 'u32[144,128]{1,0:T(1,128)}', space=vmem, size = 0x12000, scoped, tag = 'internal scratch']
  %s0 = inlined_call_operand.hbm [shape: f32[2,8,32], index: 0, kind: input, shape index: {}]
  %s1 = inlined_call_operand.hbm [shape: f32[2,8,32], index: 1, kind: input, shape index: {}]
  %s2 = inlined_call_operand.hbm [shape: f32[2,8,32], index: 2, kind: input, shape index: {}]
  %s3 = inlined_call_operand.hbm [shape: f32[2,8,8], index: 3, kind: input, shape index: {}]
  %s4 = inlined_call_operand.vmem [shape: f32[32,32], index: 4, kind: input, shape index: {}]
  %s5 = inlined_call_operand.vmem [shape: f32[32,32], index: 5, kind: input, shape index: {}]
  %s6 = inlined_call_operand.vmem [shape: f32[32,32], index: 6, kind: input, shape index: {}]
  %s7 = inlined_call_operand.vmem [shape: f32[32,32], index: 7, kind: input, shape index: {}]
  %s8 = inlined_call_operand.vmem [shape: f32[1,32], index: 8, kind: input, shape index: {}]
  %s9 = inlined_call_operand.vmem [shape: f32[1,32], index: 9, kind: input, shape index: {}]
  %s10 = inlined_call_operand.vmem [shape: f32[1,32], index: 10, kind: input, shape index: {}]
  %s11 = inlined_call_operand.vmem [shape: f32[32,128], index: 11, kind: input, shape index: {}]
  %s12 = inlined_call_operand.vmem [shape: f32[1,128], index: 12, kind: input, shape index: {}]
  %s13 = inlined_call_operand.vmem [shape: f32[128,32], index: 13, kind: input, shape index: {}]
  %s14 = inlined_call_operand.vmem [shape: f32[1,32], index: 14, kind: input, shape index: {}]
  %s15 = inlined_call_operand.vmem [shape: f32[1,32], index: 15, kind: input, shape index: {}]
  %s16 = inlined_call_operand.vmem [shape: f32[1,32], index: 16, kind: input, shape index: {}]
  %s17 = inlined_call_operand.hbm [shape: f32[2,8,32], index: 17, kind: output, shape index: {}]
  %s18 = sld [smem:[#allocation0]]
  $region94: #{tpu_custom_call.1} parent=0
    _
  %s20 = ssub.s32 1, %s18
  %s21 = scalar_select 0, %s20, %s18
  $region1: #{tpu_custom_call.1} parent=0
    #allocation2 [shape = 'u8[8192]{0}', space=vmem, size = 0x2000, scoped, tag = 'input window, operand 0, single buffered']
    #allocation3 [shape = 's32[1]{0}', space=sflag, size = 0x4, scoped, tag = 'scoped memory for tpu_custom_call.1']
    #allocation4 [shape = 's32[1]{0}', space=sflag, size = 0x4, scoped, tag = 'scoped memory for tpu_custom_call.1']
    #allocation5 [shape = 'u8[8192]{0}', space=vmem, size = 0x2000, scoped, tag = 'input window, operand 1, single buffered']
    #allocation6 [shape = 's32[1]{0}', space=sflag, size = 0x4, scoped, tag = 'scoped memory for tpu_custom_call.1']
    #allocation7 [shape = 'u8[8192]{0}', space=vmem, size = 0x2000, scoped, tag = 'input window, operand 2, single buffered']
    #allocation8 [shape = 'u8[8192]{0}', space=vmem, size = 0x2000, scoped, tag = 'input window, operand 3, single buffered']
    #allocation9 [shape = 's32[1]{0}', space=sflag, size = 0x4, scoped, tag = 'scoped memory for tpu_custom_call.1']
    #allocation10 [shape = 'u8[8192]{0}', space=vmem, size = 0x2000, scoped, tag = 'output window, operand 0, single buffered']
    %22 = vsyncpa [#allocation3], 0
    %23 = vsyncpa [#allocation6], 0
    %24 = vsyncpa [#allocation9], 0
    %25 = vsyncpa [#allocation4], 0
    // Predicated region
    $region2: #{tpu_custom_call.1} parent=1 // pred_check
      _
    $region3: #{tpu_custom_call.1} parent=1 // pred_check_branch
      %27 = sbr.rel (0) target = $region5
    $region4: #{tpu_custom_call.1} parent=1 // pred_region
      %s29 = ssub.s32 256, 256
      %30 = vsyncadd [#allocation3], %s29
      %s31 = sshll.u32 [#allocation2], 4
      %s32 = int_to_ptr.vmem [resolvable:$true] %s31
      %37 = dma.hbm_to_vmem [thread:$0]  %s0, 256, %s32, [#allocation3], 128, 128, 8
    $region5: #{tpu_custom_call.1} parent=1 // pred_fallthru
      _
    // Predicated region
    $region6: #{tpu_custom_call.1} parent=1 // pred_check
      _
    $region7: #{tpu_custom_call.1} parent=1 // pred_check_branch
      %39 = sbr.rel (0) target = $region9
    $region8: #{tpu_custom_call.1} parent=1 // pred_region
      %s41 = ssub.s32 256, 256
      %42 = vsyncadd [#allocation6], %s41
      %s43 = sshll.u32 [#allocation5], 4
      %s44 = int_to_ptr.vmem [resolvable:$true] %s43
      %49 = dma.hbm_to_vmem [thread:$0]  %s1, 256, %s44, [#allocation6], 128, 128, 8
    $region9: #{tpu_custom_call.1} parent=1 // pred_fallthru
      _
    // Predicated region
    $region10: #{tpu_custom_call.1} parent=1 // pred_check
      _
    $region11: #{tpu_custom_call.1} parent=1 // pred_check_branch
      %51 = sbr.rel (0) target = $region13
    $region12: #{tpu_custom_call.1} parent=1 // pred_region
      %s53 = ssub.s32 256, 256
      %54 = vsyncadd [#allocation6], %s53
      %s55 = sshll.u32 [#allocation7], 4
      %s56 = int_to_ptr.vmem [resolvable:$true] %s55
      %61 = dma.hbm_to_vmem [thread:$0]  %s2, 256, %s56, [#allocation6], 128, 128, 8
    $region13: #{tpu_custom_call.1} parent=1 // pred_fallthru
      _
    // Predicated region
    $region14: #{tpu_custom_call.1} parent=1 // pred_check
      _
    $region15: #{tpu_custom_call.1} parent=1 // pred_check_branch
      %63 = sbr.rel (0) target = $region17
    $region16: #{tpu_custom_call.1} parent=1 // pred_region
      %s65 = ssub.s32 256, 256
      %66 = vsyncadd [#allocation9], %s65
      %s67 = sshll.u32 [#allocation8], 4
      %s68 = int_to_ptr.vmem [resolvable:$true] %s67
      %73 = dma.hbm_to_vmem [thread:$0]  %s3, 256, %s68, [#allocation9], 128, 128, 8
    $region17: #{tpu_custom_call.1} parent=1 // pred_fallthru
      _
    // Predicated region
    $region18: #{tpu_custom_call.1} parent=1 // pred_check
      _
    $region19: #{tpu_custom_call.1} parent=1 // pred_check_branch
      %75 = sbr.rel (0) target = $region21
    $region20: #{tpu_custom_call.1} parent=1 // pred_region
      _
    $region21: #{tpu_custom_call.1} parent=1 // pred_fallthru
      _
    // Predicated region
    $region22: #{tpu_custom_call.1} parent=1 // pred_check
      _
    $region23: #{tpu_custom_call.1} parent=1 // pred_check_branch
      %77 = sbr.rel (0) target = $region25
    $region24: #{tpu_custom_call.1} parent=1 // pred_region
      _
    $region25: #{tpu_custom_call.1} parent=1 // pred_fallthru
      _
    // Predicated region
    $region26: #{tpu_custom_call.1} parent=1 // pred_check
      _
    $region27: #{tpu_custom_call.1} parent=1 // pred_check_branch
      %79 = sbr.rel (0) target = $region29
    $region28: #{tpu_custom_call.1} parent=1 // pred_region
      _
    $region29: #{tpu_custom_call.1} parent=1 // pred_fallthru
      _
    // Predicated region
    $region30: #{tpu_custom_call.1} parent=1 // pred_check
      _
    $region31: #{tpu_custom_call.1} parent=1 // pred_check_branch
      %81 = sbr.rel (0) target = $region33
    $region32: #{tpu_custom_call.1} parent=1 // pred_region
      _
    $region33: #{tpu_custom_call.1} parent=1 // pred_fallthru
      _
    // Predicated region
    $region34: #{tpu_custom_call.1} parent=1 // pred_check
      _
    $region35: #{tpu_custom_call.1} parent=1 // pred_check_branch
      %83 = sbr.rel (0) target = $region37
    $region36: #{tpu_custom_call.1} parent=1 // pred_region
      _
    $region37: #{tpu_custom_call.1} parent=1 // pred_fallthru
      _
    // Predicated region
    $region38: #{tpu_custom_call.1} parent=1 // pred_check
      _
    $region39: #{tpu_custom_call.1} parent=1 // pred_check_branch
      %85 = sbr.rel (0) target = $region41
    $region40: #{tpu_custom_call.1} parent=1 // pred_region
      _
    $region41: #{tpu_custom_call.1} parent=1 // pred_fallthru
      _
    // Predicated region
    $region42: #{tpu_custom_call.1} parent=1 // pred_check
      _
    $region43: #{tpu_custom_call.1} parent=1 // pred_check_branch
      %87 = sbr.rel (0) target = $region45
    $region44: #{tpu_custom_call.1} parent=1 // pred_region
      _
    $region45: #{tpu_custom_call.1} parent=1 // pred_fallthru
      _
    // Predicated region
    $region46: #{tpu_custom_call.1} parent=1 // pred_check
      _
    $region47: #{tpu_custom_call.1} parent=1 // pred_check_branch
      %89 = sbr.rel (0) target = $region49
    $region48: #{tpu_custom_call.1} parent=1 // pred_region
      _
    $region49: #{tpu_custom_call.1} parent=1 // pred_fallthru
      _
    // Predicated region
    $region50: #{tpu_custom_call.1} parent=1 // pred_check
      _
    $region51: #{tpu_custom_call.1} parent=1 // pred_check_branch
      %91 = sbr.rel (0) target = $region53
    $region52: #{tpu_custom_call.1} parent=1 // pred_region
      _
    $region53: #{tpu_custom_call.1} parent=1 // pred_fallthru
      _
    // Predicated region
    $region54: #{tpu_custom_call.1} parent=1 // pred_check
      _
    $region55: #{tpu_custom_call.1} parent=1 // pred_check_branch
      %93 = sbr.rel (0) target = $region57
    $region56: #{tpu_custom_call.1} parent=1 // pred_region
      _
    $region57: #{tpu_custom_call.1} parent=1 // pred_fallthru
      _
    // Predicated region
    $region58: #{tpu_custom_call.1} parent=1 // pred_check
      _
    $region59: #{tpu_custom_call.1} parent=1 // pred_check_branch
      %95 = sbr.rel (0) target = $region61
    $region60: #{tpu_custom_call.1} parent=1 // pred_region
      _
    $region61: #{tpu_custom_call.1} parent=1 // pred_fallthru
      _
    // Predicated region
    $region62: #{tpu_custom_call.1} parent=1 // pred_check
      _
    $region63: #{tpu_custom_call.1} parent=1 // pred_check_branch
      %97 = sbr.rel (0) target = $region65
    $region64: #{tpu_custom_call.1} parent=1 // pred_region
      _
    $region65: #{tpu_custom_call.1} parent=1 // pred_fallthru
      _
    // Predicated region
    $region66: #{tpu_custom_call.1} parent=1 // pred_check
      _
    $region67: #{tpu_custom_call.1} parent=1 // pred_check_branch
      %99 = sbr.rel (0) target = $region69
    $region68: #{tpu_custom_call.1} parent=1 // pred_region
      _
    $region69: #{tpu_custom_call.1} parent=1 // pred_fallthru
      _
    // Predicated region
    $region70: #{tpu_custom_call.1} parent=1 // pred_check
      _
    $region71: #{tpu_custom_call.1} parent=1 // pred_check_branch
      %101 = sbr.rel (0) target = $region73
    $region72: #{tpu_custom_call.1} parent=1 // pred_region
      %102 = dma.done [#allocation3], 256
    $region73: #{tpu_custom_call.1} parent=1 // pred_fallthru
      _
    // Predicated region
    $region74: #{tpu_custom_call.1} parent=1 // pred_check
      _
    $region75: #{tpu_custom_call.1} parent=1 // pred_check_branch
      %104 = sbr.rel (0) target = $region77
    $region76: #{tpu_custom_call.1} parent=1 // pred_region
      %105 = dma.done [#allocation6], 256
    $region77: #{tpu_custom_call.1} parent=1 // pred_fallthru
      _
    // Predicated region
    $region78: #{tpu_custom_call.1} parent=1 // pred_check
      _
    $region79: #{tpu_custom_call.1} parent=1 // pred_check_branch
      %107 = sbr.rel (0) target = $region81
    $region80: #{tpu_custom_call.1} parent=1 // pred_region
      %108 = dma.done [#allocation6], 256
    $region81: #{tpu_custom_call.1} parent=1 // pred_fallthru
      _
    // Predicated region
    $region82: #{tpu_custom_call.1} parent=1 // pred_check
      _
    $region83: #{tpu_custom_call.1} parent=1 // pred_check_branch
      %110 = sbr.rel (0) target = $region85
    $region84: #{tpu_custom_call.1} parent=1 // pred_region
      %111 = dma.done [#allocation9], 256
    $region85: #{tpu_custom_call.1} parent=1 // pred_fallthru
      _
    %v112 = vld [vmem:[%s4] sm:$0xff]
    %v113 = vld [vmem:[%s4 + $0x8] sm:$0xff]
    %v114 = vld [vmem:[%s4 + $0x10] sm:$0xff]
    %v115 = vld [vmem:[%s4 + $0x18] sm:$0xff]
    %v116 = vld [vmem:[%s5] sm:$0xff]
    %v117 = vld [vmem:[%s5 + $0x8] sm:$0xff]
    %v118 = vld [vmem:[%s5 + $0x10] sm:$0xff]
    %v119 = vld [vmem:[%s5 + $0x18] sm:$0xff]
    %v120 = vld [vmem:[%s6] sm:$0xff]
    %v121 = vld [vmem:[%s6 + $0x8] sm:$0xff]
    %v122 = vld [vmem:[%s6 + $0x10] sm:$0xff]
    %v123 = vld [vmem:[%s6 + $0x18] sm:$0xff]
    %v124 = vld [vmem:[%s7] sm:$0xff]
    %v125 = vld [vmem:[%s7 + $0x8] sm:$0xff]
    %v126 = vld [vmem:[%s7 + $0x10] sm:$0xff]
    %v127 = vld [vmem:[%s7 + $0x18] sm:$0xff]
    %v128 = vld [vmem:[%s8] sm:$0x1]
    %v129 = vld [vmem:[%s9] sm:$0x1]
    %v130 = vld [vmem:[%s10] sm:$0x1]
    %v131 = vld [vmem:[%s11] sm:$0xff]
    %v132 = vld [vmem:[%s11 + $0x8] sm:$0xff]
    %v133 = vld [vmem:[%s11 + $0x10] sm:$0xff]
    %v134 = vld [vmem:[%s11 + $0x18] sm:$0xff]
    %v135 = vld [vmem:[%s12] sm:$0x1]
    %v136 = vld [vmem:[%s13] sm:$0xff]
    %v137 = vld [vmem:[%s13 + $0x8] sm:$0xff]
    %v138 = vld [vmem:[%s13 + $0x10] sm:$0xff]
    %v139 = vld [vmem:[%s13 + $0x18] sm:$0xff]
    %v140 = vld [vmem:[%s13 + $0x20] sm:$0xff]
    %v141 = vld [vmem:[%s13 + $0x28] sm:$0xff]
    %v142 = vld [vmem:[%s13 + $0x30] sm:$0xff]
    %v143 = vld [vmem:[%s13 + $0x38] sm:$0xff]
    %v144 = vld [vmem:[%s13 + $0x40] sm:$0xff]
    %v145 = vld [vmem:[%s13 + $0x48] sm:$0xff]
    %v146 = vld [vmem:[%s13 + $0x50] sm:$0xff]
    %v147 = vld [vmem:[%s13 + $0x58] sm:$0xff]
    %v148 = vld [vmem:[%s13 + $0x60] sm:$0xff]
    %v149 = vld [vmem:[%s13 + $0x68] sm:$0xff]
    %v150 = vld [vmem:[%s13 + $0x70] sm:$0xff]
    %v151 = vld [vmem:[%s13 + $0x78] sm:$0xff]
    %v152 = vld [vmem:[%s14] sm:$0x1]
    %v153 = vld [vmem:[%s15] sm:$0x1]
    %v154 = vld [vmem:[%s16] sm:$0x1]
    %v155 = vld [vmem:[#allocation2] sm:$0xff]
    %v156 = vld [vmem:[#allocation5] sm:$0xff]
    %v157 = vld [vmem:[#allocation7] sm:$0xff]
    %v158 = vld [vmem:[#allocation8] sm:$0xff]
    %vm159 = vcmask 261120
    %v161 = vsel %vm159, %v155, 0
    %163 = vmatprep.subr.mxu0 0.0
    %164 = vmatpush1.msra.mxu0 %v112
    %165 = vmatprep.subr.mxu0 0.0
    %166 = vmatpush1.msra.mxu0 %v113
    %167 = vmatprep.subr.mxu0 0.0
    %168 = vmatpush1.msra.mxu0 %v114
    %169 = vmatprep.subr.mxu0 0.0
    %170 = vmatpush1.msra.mxu0 %v115
    %171 = vmatprep.subr.mxu0 0.0
    %172 = vmatpush1.msra.mxu0 0.0
    %173 = vmatprep.subr.mxu0 0.0
    %174 = vmatpush1.msra.mxu0 0.0
    %175 = vmatprep.subr.mxu0 0.0
    %176 = vmatpush1.msra.mxu0 0.0
    %177 = vmatprep.subr.mxu0 0.0
    %178 = vmatpush1.msra.mxu0 0.0
    %179 = vmatprep.subr.mxu0 0.0
    %180 = vmatpush1.msra.mxu0 0.0
    %181 = vmatprep.subr.mxu0 0.0
    %182 = vmatpush1.msra.mxu0 0.0
    %183 = vmatprep.subr.mxu0 0.0
    %184 = vmatpush1.msra.mxu0 0.0
    %185 = vmatprep.subr.mxu0 0.0
    %186 = vmatpush1.msra.mxu0 0.0
    %187 = vmatprep.subr.mxu0 0.0
    %188 = vmatpush1.msra.mxu0 0.0
    %189 = vmatprep.subr.mxu0 0.0
    %190 = vmatpush1.msra.mxu0 0.0
    %191 = vmatprep.subr.mxu0 0.0
    %192 = vmatpush1.msra.mxu0 0.0
    %193 = vmatprep.subr.mxu0 0.0
    %194 = vmatpush1.msra.mxu0 0.0
    %195 = vmatprep.subr.mxu0 0.0
    %196 = vmatpush1.msra.mxu0 0.0
    %197 = vmatprep.subr.mxu0 0.0
    %198 = vmatpush1.msra.mxu0 0.0
    %199 = vmatprep.subr.mxu0 0.0
    %200 = vmatpush1.msra.mxu0 0.0
    %201 = vmatprep.subr.mxu0 0.0
    %202 = vmatpush1.msra.mxu0 0.0
    %203 = vmatprep.subr.mxu0 0.0
    %204 = vmatpush1.msra.mxu0 0.0
    %205 = vmatprep.subr.mxu0 0.0
    %206 = vmatpush1.msra.mxu0 0.0
    %207 = vmatprep.subr.mxu0 0.0
    %208 = vmatpush1.msra.mxu0 0.0
    %209 = vmatprep.subr.mxu0 0.0
    %210 = vmatpush1.msra.mxu0 0.0
    %211 = vmatprep.subr.mxu0 0.0
    %212 = vmatpush1.msra.mxu0 0.0
    %213 = vmatprep.subr.mxu0 0.0
    %214 = vmatpush1.msra.mxu0 0.0
    %215 = vmatprep.subr.mxu0 0.0
    %216 = vmatpush1.msra.mxu0 0.0
    %217 = vmatprep.subr.mxu0 0.0
    %218 = vmatpush1.msra.mxu0 0.0
    %219 = vmatprep.subr.mxu0 0.0
    %220 = vmatpush1.msra.mxu0 0.0
    %221 = vmatprep.subr.mxu0 0.0
    %222 = vmatpush1.msra.mxu0 0.0
    %223 = vmatprep.subr.mxu0 0.0
    %224 = vmatpush1.msra.mxu0 0.0
    %225 = vmatprep.subr.mxu0 0.0
    %226 = vmatpush1.msra.mxu0 0.0
    %227 = vmatprep.mubr.f32.mxu0 0.0
    %228 = vmatmul.mubr.f32.gmra.mrb[0].mxu0 %v161
    %v229 = vpop.f32.mrb[0].mxu0
    %v230 = vadd.f32 0.0, %v229
    %v231 = vpop.f32.mrb[0].mxu0
    %232 = vdwg.mxu0
    %v234 = vsel %vm159, %v156, 0
    %236 = vmatprep.subr.mxu0 0.0
    %237 = vmatpush1.msra.mxu0 %v116
    %238 = vmatprep.subr.mxu0 0.0
    %239 = vmatpush1.msra.mxu0 %v117
    %240 = vmatprep.subr.mxu0 0.0
    %241 = vmatpush1.msra.mxu0 %v118
    %242 = vmatprep.subr.mxu0 0.0
    %243 = vmatpush1.msra.mxu0 %v119
    %244 = vmatprep.subr.mxu0 0.0
    %245 = vmatpush1.msra.mxu0 0.0
    %246 = vmatprep.subr.mxu0 0.0
    %247 = vmatpush1.msra.mxu0 0.0
    %248 = vmatprep.subr.mxu0 0.0
    %249 = vmatpush1.msra.mxu0 0.0
    %250 = vmatprep.subr.mxu0 0.0
    %251 = vmatpush1.msra.mxu0 0.0
    %252 = vmatprep.subr.mxu0 0.0
    %253 = vmatpush1.msra.mxu0 0.0
    %254 = vmatprep.subr.mxu0 0.0
    %255 = vmatpush1.msra.mxu0 0.0
    %256 = vmatprep.subr.mxu0 0.0
    %257 = vmatpush1.msra.mxu0 0.0
    %258 = vmatprep.subr.mxu0 0.0
    %259 = vmatpush1.msra.mxu0 0.0
    %260 = vmatprep.subr.mxu0 0.0
    %261 = vmatpush1.msra.mxu0 0.0
    %262 = vmatprep.subr.mxu0 0.0
    %263 = vmatpush1.msra.mxu0 0.0
    %264 = vmatprep.subr.mxu0 0.0
    %265 = vmatpush1.msra.mxu0 0.0
    %266 = vmatprep.subr.mxu0 0.0
    %267 = vmatpush1.msra.mxu0 0.0
    %268 = vmatprep.subr.mxu0 0.0
    %269 = vmatpush1.msra.mxu0 0.0
    %270 = vmatprep.subr.mxu0 0.0
    %271 = vmatpush1.msra.mxu0 0.0
    %272 = vmatprep.subr.mxu0 0.0
    %273 = vmatpush1.msra.mxu0 0.0
    %274 = vmatprep.subr.mxu0 0.0
    %275 = vmatpush1.msra.mxu0 0.0
    %276 = vmatprep.subr.mxu0 0.0
    %277 = vmatpush1.msra.mxu0 0.0
    %278 = vmatprep.subr.mxu0 0.0
    %279 = vmatpush1.msra.mxu0 0.0
    %280 = vmatprep.subr.mxu0 0.0
    %281 = vmatpush1.msra.mxu0 0.0
    %282 = vmatprep.subr.mxu0 0.0
    %283 = vmatpush1.msra.mxu0 0.0
    %284 = vmatprep.subr.mxu0 0.0
    %285 = vmatpush1.msra.mxu0 0.0
    %286 = vmatprep.subr.mxu0 0.0
    %287 = vmatpush1.msra.mxu0 0.0
    %288 = vmatprep.subr.mxu0 0.0
    %289 = vmatpush1.msra.mxu0 0.0
    %290 = vmatprep.subr.mxu0 0.0
    %291 = vmatpush1.msra.mxu0 0.0
    %292 = vmatprep.subr.mxu0 0.0
    %293 = vmatpush1.msra.mxu0 0.0
    %294 = vmatprep.subr.mxu0 0.0
    %295 = vmatpush1.msra.mxu0 0.0
    %296 = vmatprep.subr.mxu0 0.0
    %297 = vmatpush1.msra.mxu0 0.0
    %298 = vmatprep.subr.mxu0 0.0
    %299 = vmatpush1.msra.mxu0 0.0
    %300 = vmatprep.mubr.f32.mxu0 0.0
    %301 = vmatmul.mubr.f32.gmra.mrb[0].mxu0 %v234
    %v302 = vpop.f32.mrb[0].mxu0
    %v303 = vadd.f32 0.0, %v302
    %v304 = vpop.f32.mrb[0].mxu0
    %305 = vdwg.mxu0
    %v307 = vsel %vm159, %v157, 0
    %309 = vmatprep.subr.mxu0 0.0
    %310 = vmatpush1.msra.mxu0 %v120
    %311 = vmatprep.subr.mxu0 0.0
    %312 = vmatpush1.msra.mxu0 %v121
    %313 = vmatprep.subr.mxu0 0.0
    %314 = vmatpush1.msra.mxu0 %v122
    %315 = vmatprep.subr.mxu0 0.0
    %316 = vmatpush1.msra.mxu0 %v123
    %317 = vmatprep.subr.mxu0 0.0
    %318 = vmatpush1.msra.mxu0 0.0
    %319 = vmatprep.subr.mxu0 0.0
    %320 = vmatpush1.msra.mxu0 0.0
    %321 = vmatprep.subr.mxu0 0.0
    %322 = vmatpush1.msra.mxu0 0.0
    %323 = vmatprep.subr.mxu0 0.0
    %324 = vmatpush1.msra.mxu0 0.0
    %325 = vmatprep.subr.mxu0 0.0
    %326 = vmatpush1.msra.mxu0 0.0
    %327 = vmatprep.subr.mxu0 0.0
    %328 = vmatpush1.msra.mxu0 0.0
    %329 = vmatprep.subr.mxu0 0.0
    %330 = vmatpush1.msra.mxu0 0.0
    %331 = vmatprep.subr.mxu0 0.0
    %332 = vmatpush1.msra.mxu0 0.0
    %333 = vmatprep.subr.mxu0 0.0
    %334 = vmatpush1.msra.mxu0 0.0
    %335 = vmatprep.subr.mxu0 0.0
    %336 = vmatpush1.msra.mxu0 0.0
    %337 = vmatprep.subr.mxu0 0.0
    %338 = vmatpush1.msra.mxu0 0.0
    %339 = vmatprep.subr.mxu0 0.0
    %340 = vmatpush1.msra.mxu0 0.0
    %341 = vmatprep.subr.mxu0 0.0
    %342 = vmatpush1.msra.mxu0 0.0
    %343 = vmatprep.subr.mxu0 0.0
    %344 = vmatpush1.msra.mxu0 0.0
    %345 = vmatprep.subr.mxu0 0.0
    %346 = vmatpush1.msra.mxu0 0.0
    %347 = vmatprep.subr.mxu0 0.0
    %348 = vmatpush1.msra.mxu0 0.0
    %349 = vmatprep.subr.mxu0 0.0
    %350 = vmatpush1.msra.mxu0 0.0
    %351 = vmatprep.subr.mxu0 0.0
    %352 = vmatpush1.msra.mxu0 0.0
    %353 = vmatprep.subr.mxu0 0.0
    %354 = vmatpush1.msra.mxu0 0.0
    %355 = vmatprep.subr.mxu0 0.0
    %356 = vmatpush1.msra.mxu0 0.0
    %357 = vmatprep.subr.mxu0 0.0
    %358 = vmatpush1.msra.mxu0 0.0
    %359 = vmatprep.subr.mxu0 0.0
    %360 = vmatpush1.msra.mxu0 0.0
    %361 = vmatprep.subr.mxu0 0.0
    %362 = vmatpush1.msra.mxu0 0.0
    %363 = vmatprep.subr.mxu0 0.0
    %364 = vmatpush1.msra.mxu0 0.0
    %365 = vmatprep.subr.mxu0 0.0
    %366 = vmatpush1.msra.mxu0 0.0
    %367 = vmatprep.subr.mxu0 0.0
    %368 = vmatpush1.msra.mxu0 0.0
    %369 = vmatprep.subr.mxu0 0.0
    %370 = vmatpush1.msra.mxu0 0.0
    %371 = vmatprep.subr.mxu0 0.0
    %372 = vmatpush1.msra.mxu0 0.0
    %373 = vmatprep.mubr.f32.mxu0 0.0
    %374 = vmatmul.mubr.f32.gmra.mrb[0].mxu0 %v307
    %v375 = vpop.f32.mrb[0].mxu0
    %v376 = vadd.f32 0.0, %v375
    %v377 = vpop.f32.mrb[0].mxu0
    %378 = vdwg.mxu0
    %vm379 = vcmask 64512
    %v381 = vsel %vm379, %v376, 0
    %v384 = vsel %vm379, %v303, 0
    %386 = vmatprep.subr.mxu0 0.0
    %387 = vmatpush1.xpose.msra.mxu0 %v384
    %388 = vmatprep.subr.mxu0 0.0
    %389 = vmatpush1.xpose.msra.mxu0 0.0
    %390 = vmatprep.subr.mxu0 0.0
    %391 = vmatpush1.xpose.msra.mxu0 0.0
    %392 = vmatprep.subr.mxu0 0.0
    %393 = vmatpush1.xpose.msra.mxu0 0.0
    %394 = vmatprep.subr.mxu0 0.0
    %395 = vmatpush1.xpose.msra.mxu0 0.0
    %396 = vmatprep.subr.mxu0 0.0
    %397 = vmatpush1.xpose.msra.mxu0 0.0
    %398 = vmatprep.subr.mxu0 0.0
    %399 = vmatpush1.xpose.msra.mxu0 0.0
    %400 = vmatprep.subr.mxu0 0.0
    %401 = vmatpush1.xpose.msra.mxu0 0.0
    %402 = vmatprep.subr.mxu0 0.0
    %403 = vmatpush1.xpose.msra.mxu0 0.0
    %404 = vmatprep.subr.mxu0 0.0
    %405 = vmatpush1.xpose.msra.mxu0 0.0
    %406 = vmatprep.subr.mxu0 0.0
    %407 = vmatpush1.xpose.msra.mxu0 0.0
    %408 = vmatprep.subr.mxu0 0.0
    %409 = vmatpush1.xpose.msra.mxu0 0.0
    %410 = vmatprep.subr.mxu0 0.0
    %411 = vmatpush1.xpose.msra.mxu0 0.0
    %412 = vmatprep.subr.mxu0 0.0
    %413 = vmatpush1.xpose.msra.mxu0 0.0
    %414 = vmatprep.subr.mxu0 0.0
    %415 = vmatpush1.xpose.msra.mxu0 0.0
    %416 = vmatprep.subr.mxu0 0.0
    %417 = vmatpush1.xpose.msra.mxu0 0.0
    %418 = vmatprep.subr.mxu0 0.0
    %419 = vmatpush1.xpose.msra.mxu0 0.0
    %420 = vmatprep.subr.mxu0 0.0
    %421 = vmatpush1.xpose.msra.mxu0 0.0
    %422 = vmatprep.subr.mxu0 0.0
    %423 = vmatpush1.xpose.msra.mxu0 0.0
    %424 = vmatprep.subr.mxu0 0.0
    %425 = vmatpush1.xpose.msra.mxu0 0.0
    %426 = vmatprep.subr.mxu0 0.0
    %427 = vmatpush1.xpose.msra.mxu0 0.0
    %428 = vmatprep.subr.mxu0 0.0
    %429 = vmatpush1.xpose.msra.mxu0 0.0
    %430 = vmatprep.subr.mxu0 0.0
    %431 = vmatpush1.xpose.msra.mxu0 0.0
    %432 = vmatprep.subr.mxu0 0.0
    %433 = vmatpush1.xpose.msra.mxu0 0.0
    %434 = vmatprep.subr.mxu0 0.0
    %435 = vmatpush1.xpose.msra.mxu0 0.0
    %436 = vmatprep.subr.mxu0 0.0
    %437 = vmatpush1.xpose.msra.mxu0 0.0
    %438 = vmatprep.subr.mxu0 0.0
    %439 = vmatpush1.xpose.msra.mxu0 0.0
    %440 = vmatprep.subr.mxu0 0.0
    %441 = vmatpush1.xpose.msra.mxu0 0.0
    %442 = vmatprep.subr.mxu0 0.0
    %443 = vmatpush1.xpose.msra.mxu0 0.0
    %444 = vmatprep.subr.mxu0 0.0
    %445 = vmatpush1.xpose.msra.mxu0 0.0
    %446 = vmatprep.subr.mxu0 0.0
    %447 = vmatpush1.xpose.msra.mxu0 0.0
    %448 = vmatprep.subr.mxu0 0.0
    %449 = vmatpush1.xpose.msra.mxu0 0.0
    %450 = vmatprep.mubr.f32.mxu0 0.0
    %451 = vmatmul.mubr.f32.gmra.mrb[0].mxu0 %v381
    %v452 = vpop.f32.mrb[0].mxu0
    %v453 = vadd.f32 %v158, %v452
    %v454 = vpop.f32.mrb[0].mxu0
    %455 = vdwg.mxu0
    %v456 = vmul.f32 %v453, 0.17677669
    %v457 = vsel %vm379, %v456, -inf
    %458 = vmax.xlane.f32.xlu0 %v457
    %v459 = vpop.xlane.xlu0 %458
    %v460 = vsub.f32 %v456, %v459
    %v461 = vmul.f32 %v460, 1.442695
    %v462 = vpow.pop %v461
    %v463 = vsel %vm379, %v462, 0.0
    %464 = vadd.xlane.f32.xlu0 %v463
    %v465 = vpop.xlane.xlu0 %464
    %v466 = vrcp.pop %v465
    %v467 = vmul.f32 %v462, %v466
    %v469 = vsel %vm379, %v467, 0
    %471 = vmatprep.subr.mxu0 0.0
    %472 = vmatpush1.msra.mxu0 %v230
    %473 = vmatprep.subr.mxu0 0.0
    %474 = vmatpush1.msra.mxu0 0.0
    %475 = vmatprep.subr.mxu0 0.0
    %476 = vmatpush1.msra.mxu0 0.0
    %477 = vmatprep.subr.mxu0 0.0
    %478 = vmatpush1.msra.mxu0 0.0
    %479 = vmatprep.subr.mxu0 0.0
    %480 = vmatpush1.msra.mxu0 0.0
    %481 = vmatprep.subr.mxu0 0.0
    %482 = vmatpush1.msra.mxu0 0.0
    %483 = vmatprep.subr.mxu0 0.0
    %484 = vmatpush1.msra.mxu0 0.0
    %485 = vmatprep.subr.mxu0 0.0
    %486 = vmatpush1.msra.mxu0 0.0
    %487 = vmatprep.subr.mxu0 0.0
    %488 = vmatpush1.msra.mxu0 0.0
    %489 = vmatprep.subr.mxu0 0.0
    %490 = vmatpush1.msra.mxu0 0.0
    %491 = vmatprep.subr.mxu0 0.0
    %492 = vmatpush1.msra.mxu0 0.0
    %493 = vmatprep.subr.mxu0 0.0
    %494 = vmatpush1.msra.mxu0 0.0
    %495 = vmatprep.subr.mxu0 0.0
    %496 = vmatpush1.msra.mxu0 0.0
    %497 = vmatprep.subr.mxu0 0.0
    %498 = vmatpush1.msra.mxu0 0.0
    %499 = vmatprep.subr.mxu0 0.0
    %500 = vmatpush1.msra.mxu0 0.0
    %501 = vmatprep.subr.mxu0 0.0
    %502 = vmatpush1.msra.mxu0 0.0
    %503 = vmatprep.subr.mxu0 0.0
    %504 = vmatpush1.msra.mxu0 0.0
    %505 = vmatprep.subr.mxu0 0.0
    %506 = vmatpush1.msra.mxu0 0.0
    %507 = vmatprep.subr.mxu0 0.0
    %508 = vmatpush1.msra.mxu0 0.0
    %509 = vmatprep.subr.mxu0 0.0
    %510 = vmatpush1.msra.mxu0 0.0
    %511 = vmatprep.subr.mxu0 0.0
    %512 = vmatpush1.msra.mxu0 0.0
    %513 = vmatprep.subr.mxu0 0.0
    %514 = vmatpush1.msra.mxu0 0.0
    %515 = vmatprep.subr.mxu0 0.0
    %516 = vmatpush1.msra.mxu0 0.0
    %517 = vmatprep.subr.mxu0 0.0
    %518 = vmatpush1.msra.mxu0 0.0
    %519 = vmatprep.subr.mxu0 0.0
    %520 = vmatpush1.msra.mxu0 0.0
    %521 = vmatprep.subr.mxu0 0.0
    %522 = vmatpush1.msra.mxu0 0.0
    %523 = vmatprep.subr.mxu0 0.0
    %524 = vmatpush1.msra.mxu0 0.0
    %525 = vmatprep.subr.mxu0 0.0
    %526 = vmatpush1.msra.mxu0 0.0
    %527 = vmatprep.subr.mxu0 0.0
    %528 = vmatpush1.msra.mxu0 0.0
    %529 = vmatprep.subr.mxu0 0.0
    %530 = vmatpush1.msra.mxu0 0.0
    %531 = vmatprep.subr.mxu0 0.0
    %532 = vmatpush1.msra.mxu0 0.0
    %533 = vmatprep.subr.mxu0 0.0
    %534 = vmatpush1.msra.mxu0 0.0
    %535 = vmatprep.mubr.f32.mxu0 0.0
    %536 = vmatmul.mubr.f32.gmra.mrb[0].mxu0 %v469
    %v537 = vpop.f32.mrb[0].mxu0
    %v538 = vadd.f32 0.0, %v537
    %v539 = vpop.f32.mrb[0].mxu0
    %540 = vdwg.mxu0
    %541 = vrot.lane.b32.xlu0 %v376, 120
    %v542 = vpop.permute.xlu0 %541
    %543 = vrot.lane.b32.xlu0 %v303, 120
    %v544 = vpop.permute.xlu0 %543
    %v545 = vsel %vm379, %v542, 0
    %v547 = vsel %vm379, %v544, 0
    %549 = vmatprep.subr.mxu0 0.0
    %550 = vmatpush1.xpose.msra.mxu0 %v547
    %551 = vmatprep.subr.mxu0 0.0
    %552 = vmatpush1.xpose.msra.mxu0 0.0
    %553 = vmatprep.subr.mxu0 0.0
    %554 = vmatpush1.xpose.msra.mxu0 0.0
    %555 = vmatprep.subr.mxu0 0.0
    %556 = vmatpush1.xpose.msra.mxu0 0.0
    %557 = vmatprep.subr.mxu0 0.0
    %558 = vmatpush1.xpose.msra.mxu0 0.0
    %559 = vmatprep.subr.mxu0 0.0
    %560 = vmatpush1.xpose.msra.mxu0 0.0
    %561 = vmatprep.subr.mxu0 0.0
    %562 = vmatpush1.xpose.msra.mxu0 0.0
    %563 = vmatprep.subr.mxu0 0.0
    %564 = vmatpush1.xpose.msra.mxu0 0.0
    %565 = vmatprep.subr.mxu0 0.0
    %566 = vmatpush1.xpose.msra.mxu0 0.0
    %567 = vmatprep.subr.mxu0 0.0
    %568 = vmatpush1.xpose.msra.mxu0 0.0
    %569 = vmatprep.subr.mxu0 0.0
    %570 = vmatpush1.xpose.msra.mxu0 0.0
    %571 = vmatprep.subr.mxu0 0.0
    %572 = vmatpush1.xpose.msra.mxu0 0.0
    %573 = vmatprep.subr.mxu0 0.0
    %574 = vmatpush1.xpose.msra.mxu0 0.0
    %575 = vmatprep.subr.mxu0 0.0
    %576 = vmatpush1.xpose.msra.mxu0 0.0
    %577 = vmatprep.subr.mxu0 0.0
    %578 = vmatpush1.xpose.msra.mxu0 0.0
    %579 = vmatprep.subr.mxu0 0.0
    %580 = vmatpush1.xpose.msra.mxu0 0.0
    %581 = vmatprep.subr.mxu0 0.0
    %582 = vmatpush1.xpose.msra.mxu0 0.0
    %583 = vmatprep.subr.mxu0 0.0
    %584 = vmatpush1.xpose.msra.mxu0 0.0
    %585 = vmatprep.subr.mxu0 0.0
    %586 = vmatpush1.xpose.msra.mxu0 0.0
    %587 = vmatprep.subr.mxu0 0.0
    %588 = vmatpush1.xpose.msra.mxu0 0.0
    %589 = vmatprep.subr.mxu0 0.0
    %590 = vmatpush1.xpose.msra.mxu0 0.0
    %591 = vmatprep.subr.mxu0 0.0
    %592 = vmatpush1.xpose.msra.mxu0 0.0
    %593 = vmatprep.subr.mxu0 0.0
    %594 = vmatpush1.xpose.msra.mxu0 0.0
    %595 = vmatprep.subr.mxu0 0.0
    %596 = vmatpush1.xpose.msra.mxu0 0.0
    %597 = vmatprep.subr.mxu0 0.0
    %598 = vmatpush1.xpose.msra.mxu0 0.0
    %599 = vmatprep.subr.mxu0 0.0
    %600 = vmatpush1.xpose.msra.mxu0 0.0
    %601 = vmatprep.subr.mxu0 0.0
    %602 = vmatpush1.xpose.msra.mxu0 0.0
    %603 = vmatprep.subr.mxu0 0.0
    %604 = vmatpush1.xpose.msra.mxu0 0.0
    %605 = vmatprep.subr.mxu0 0.0
    %606 = vmatpush1.xpose.msra.mxu0 0.0
    %607 = vmatprep.subr.mxu0 0.0
    %608 = vmatpush1.xpose.msra.mxu0 0.0
    %609 = vmatprep.subr.mxu0 0.0
    %610 = vmatpush1.xpose.msra.mxu0 0.0
    %611 = vmatprep.subr.mxu0 0.0
    %612 = vmatpush1.xpose.msra.mxu0 0.0
    %613 = vmatprep.mubr.f32.mxu0 0.0
    %614 = vmatmul.mubr.f32.gmra.mrb[0].mxu0 %v545
    %v615 = vpop.f32.mrb[0].mxu0
    %v616 = vadd.f32 %v158, %v615
    %v617 = vpop.f32.mrb[0].mxu0
    %618 = vdwg.mxu0
    %v619 = vmul.f32 %v616, 0.17677669
    %v620 = vsel %vm379, %v619, -inf
    %621 = vmax.xlane.f32.xlu0 %v620
    %v622 = vpop.xlane.xlu0 %621
    %v623 = vsub.f32 %v619, %v622
    %v624 = vmul.f32 %v623, 1.442695
    %v625 = vpow.pop %v624
    %v626 = vsel %vm379, %v625, 0.0
    %627 = vadd.xlane.f32.xlu0 %v626
    %v628 = vpop.xlane.xlu0 %627
    %v629 = vrcp.pop %v628
    %v630 = vmul.f32 %v625, %v629
    %632 = vrot.lane.b32.xlu0 %v230, 120
    %v633 = vpop.permute.xlu0 %632
    %v636 = vsel %vm379, %v630, 0
    %638 = vmatprep.subr.mxu0 0.0
    %639 = vmatpush1.msra.mxu0 %v633
    %640 = vmatprep.subr.mxu0 0.0
    %641 = vmatpush1.msra.mxu0 0.0
    %642 = vmatprep.subr.mxu0 0.0
    %643 = vmatpush1.msra.mxu0 0.0
    %644 = vmatprep.subr.mxu0 0.0
    %645 = vmatpush1.msra.mxu0 0.0
    %646 = vmatprep.subr.mxu0 0.0
    %647 = vmatpush1.msra.mxu0 0.0
    %648 = vmatprep.subr.mxu0 0.0
    %649 = vmatpush1.msra.mxu0 0.0
    %650 = vmatprep.subr.mxu0 0.0
    %651 = vmatpush1.msra.mxu0 0.0
    %652 = vmatprep.subr.mxu0 0.0
    %653 = vmatpush1.msra.mxu0 0.0
    %654 = vmatprep.subr.mxu0 0.0
    %655 = vmatpush1.msra.mxu0 0.0
    %656 = vmatprep.subr.mxu0 0.0
    %657 = vmatpush1.msra.mxu0 0.0
    %658 = vmatprep.subr.mxu0 0.0
    %659 = vmatpush1.msra.mxu0 0.0
    %660 = vmatprep.subr.mxu0 0.0
    %661 = vmatpush1.msra.mxu0 0.0
    %662 = vmatprep.subr.mxu0 0.0
    %663 = vmatpush1.msra.mxu0 0.0
    %664 = vmatprep.subr.mxu0 0.0
    %665 = vmatpush1.msra.mxu0 0.0
    %666 = vmatprep.subr.mxu0 0.0
    %667 = vmatpush1.msra.mxu0 0.0
    %668 = vmatprep.subr.mxu0 0.0
    %669 = vmatpush1.msra.mxu0 0.0
    %670 = vmatprep.subr.mxu0 0.0
    %671 = vmatpush1.msra.mxu0 0.0
    %672 = vmatprep.subr.mxu0 0.0
    %673 = vmatpush1.msra.mxu0 0.0
    %674 = vmatprep.subr.mxu0 0.0
    %675 = vmatpush1.msra.mxu0 0.0
    %676 = vmatprep.subr.mxu0 0.0
    %677 = vmatpush1.msra.mxu0 0.0
    %678 = vmatprep.subr.mxu0 0.0
    %679 = vmatpush1.msra.mxu0 0.0
    %680 = vmatprep.subr.mxu0 0.0
    %681 = vmatpush1.msra.mxu0 0.0
    %682 = vmatprep.subr.mxu0 0.0
    %683 = vmatpush1.msra.mxu0 0.0
    %684 = vmatprep.subr.mxu0 0.0
    %685 = vmatpush1.msra.mxu0 0.0
    %686 = vmatprep.subr.mxu0 0.0
    %687 = vmatpush1.msra.mxu0 0.0
    %688 = vmatprep.subr.mxu0 0.0
    %689 = vmatpush1.msra.mxu0 0.0
    %690 = vmatprep.subr.mxu0 0.0
    %691 = vmatpush1.msra.mxu0 0.0
    %692 = vmatprep.subr.mxu0 0.0
    %693 = vmatpush1.msra.mxu0 0.0
    %694 = vmatprep.subr.mxu0 0.0
    %695 = vmatpush1.msra.mxu0 0.0
    %696 = vmatprep.subr.mxu0 0.0
    %697 = vmatpush1.msra.mxu0 0.0
    %698 = vmatprep.subr.mxu0 0.0
    %699 = vmatpush1.msra.mxu0 0.0
    %700 = vmatprep.subr.mxu0 0.0
    %701 = vmatpush1.msra.mxu0 0.0
    %702 = vmatprep.mubr.f32.mxu0 0.0
    %703 = vmatmul.mubr.f32.gmra.mrb[0].mxu0 %v636
    %v704 = vpop.f32.mrb[0].mxu0
    %v705 = vadd.f32 0.0, %v704
    %v706 = vpop.f32.mrb[0].mxu0
    %707 = vdwg.mxu0
    %v709 = vsel %vm379, %v705, 0
    %711 = vmatprep.subr.mxu0 0.0
    %712 = vmatpush1.msra.mxu0 %v125
    %713 = vmatprep.subr.mxu0 0.0
    %714 = vmatpush1.msra.mxu0 0.0
    %715 = vmatprep.subr.mxu0 0.0
    %716 = vmatpush1.msra.mxu0 0.0
    %717 = vmatprep.subr.mxu0 0.0
    %718 = vmatpush1.msra.mxu0 0.0
    %719 = vmatprep.subr.mxu0 0.0
    %720 = vmatpush1.msra.mxu0 0.0
    %721 = vmatprep.subr.mxu0 0.0
    %722 = vmatpush1.msra.mxu0 0.0
    %723 = vmatprep.subr.mxu0 0.0
    %724 = vmatpush1.msra.mxu0 0.0
    %725 = vmatprep.subr.mxu0 0.0
    %726 = vmatpush1.msra.mxu0 0.0
    %727 = vmatprep.subr.mxu0 0.0
    %728 = vmatpush1.msra.mxu0 0.0
    %729 = vmatprep.subr.mxu0 0.0
    %730 = vmatpush1.msra.mxu0 0.0
    %731 = vmatprep.subr.mxu0 0.0
    %732 = vmatpush1.msra.mxu0 0.0
    %733 = vmatprep.subr.mxu0 0.0
    %734 = vmatpush1.msra.mxu0 0.0
    %735 = vmatprep.subr.mxu0 0.0
    %736 = vmatpush1.msra.mxu0 0.0
    %737 = vmatprep.subr.mxu0 0.0
    %738 = vmatpush1.msra.mxu0 0.0
    %739 = vmatprep.subr.mxu0 0.0
    %740 = vmatpush1.msra.mxu0 0.0
    %741 = vmatprep.subr.mxu0 0.0
    %742 = vmatpush1.msra.mxu0 0.0
    %743 = vmatprep.subr.mxu0 0.0
    %744 = vmatpush1.msra.mxu0 0.0
    %745 = vmatprep.subr.mxu0 0.0
    %746 = vmatpush1.msra.mxu0 0.0
    %747 = vmatprep.subr.mxu0 0.0
    %748 = vmatpush1.msra.mxu0 0.0
    %749 = vmatprep.subr.mxu0 0.0
    %750 = vmatpush1.msra.mxu0 0.0
    %751 = vmatprep.subr.mxu0 0.0
    %752 = vmatpush1.msra.mxu0 0.0
    %753 = vmatprep.subr.mxu0 0.0
    %754 = vmatpush1.msra.mxu0 0.0
    %755 = vmatprep.subr.mxu0 0.0
    %756 = vmatpush1.msra.mxu0 0.0
    %757 = vmatprep.subr.mxu0 0.0
    %758 = vmatpush1.msra.mxu0 0.0
    %759 = vmatprep.subr.mxu0 0.0
    %760 = vmatpush1.msra.mxu0 0.0
    %761 = vmatprep.subr.mxu0 0.0
    %762 = vmatpush1.msra.mxu0 0.0
    %763 = vmatprep.subr.mxu0 0.0
    %764 = vmatpush1.msra.mxu0 0.0
    %765 = vmatprep.subr.mxu0 0.0
    %766 = vmatpush1.msra.mxu0 0.0
    %767 = vmatprep.subr.mxu0 0.0
    %768 = vmatpush1.msra.mxu0 0.0
    %769 = vmatprep.subr.mxu0 0.0
    %770 = vmatpush1.msra.mxu0 0.0
    %771 = vmatprep.subr.mxu0 0.0
    %772 = vmatpush1.msra.mxu0 0.0
    %773 = vmatprep.subr.mxu0 0.0
    %774 = vmatpush1.msra.mxu0 0.0
    %775 = vmatprep.mubr.f32.mxu0 0.0
    %776 = vmatmul.mubr.f32.gmra.mrb[0].mxu0 %v709
    %v777 = vpop.f32.mrb[0].mxu0
    %v778 = vadd.f32 0.0, %v777
    %v779 = vpop.f32.mrb[0].mxu0
    %780 = vdwg.mxu0
    %v782 = vsel %vm379, %v538, 0
    %784 = vmatprep.subr.mxu0 0.0
    %785 = vmatpush1.msra.mxu0 %v124
    %786 = vmatprep.subr.mxu0 0.0
    %787 = vmatpush1.msra.mxu0 0.0
    %788 = vmatprep.subr.mxu0 0.0
    %789 = vmatpush1.msra.mxu0 0.0
    %790 = vmatprep.subr.mxu0 0.0
    %791 = vmatpush1.msra.mxu0 0.0
    %792 = vmatprep.subr.mxu0 0.0
    %793 = vmatpush1.msra.mxu0 0.0
    %794 = vmatprep.subr.mxu0 0.0
    %795 = vmatpush1.msra.mxu0 0.0
    %796 = vmatprep.subr.mxu0 0.0
    %797 = vmatpush1.msra.mxu0 0.0
    %798 = vmatprep.subr.mxu0 0.0
    %799 = vmatpush1.msra.mxu0 0.0
    %800 = vmatprep.subr.mxu0 0.0
    %801 = vmatpush1.msra.mxu0 0.0
    %802 = vmatprep.subr.mxu0 0.0
    %803 = vmatpush1.msra.mxu0 0.0
    %804 = vmatprep.subr.mxu0 0.0
    %805 = vmatpush1.msra.mxu0 0.0
    %806 = vmatprep.subr.mxu0 0.0
    %807 = vmatpush1.msra.mxu0 0.0
    %808 = vmatprep.subr.mxu0 0.0
    %809 = vmatpush1.msra.mxu0 0.0
    %810 = vmatprep.subr.mxu0 0.0
    %811 = vmatpush1.msra.mxu0 0.0
    %812 = vmatprep.subr.mxu0 0.0
    %813 = vmatpush1.msra.mxu0 0.0
    %814 = vmatprep.subr.mxu0 0.0
    %815 = vmatpush1.msra.mxu0 0.0
    %816 = vmatprep.subr.mxu0 0.0
    %817 = vmatpush1.msra.mxu0 0.0
    %818 = vmatprep.subr.mxu0 0.0
    %819 = vmatpush1.msra.mxu0 0.0
    %820 = vmatprep.subr.mxu0 0.0
    %821 = vmatpush1.msra.mxu0 0.0
    %822 = vmatprep.subr.mxu0 0.0
    %823 = vmatpush1.msra.mxu0 0.0
    %824 = vmatprep.subr.mxu0 0.0
    %825 = vmatpush1.msra.mxu0 0.0
    %826 = vmatprep.subr.mxu0 0.0
    %827 = vmatpush1.msra.mxu0 0.0
    %828 = vmatprep.subr.mxu0 0.0
    %829 = vmatpush1.msra.mxu0 0.0
    %830 = vmatprep.subr.mxu0 0.0
    %831 = vmatpush1.msra.mxu0 0.0
    %832 = vmatprep.subr.mxu0 0.0
    %833 = vmatpush1.msra.mxu0 0.0
    %834 = vmatprep.subr.mxu0 0.0
    %835 = vmatpush1.msra.mxu0 0.0
    %836 = vmatprep.subr.mxu0 0.0
    %837 = vmatpush1.msra.mxu0 0.0
    %838 = vmatprep.subr.mxu0 0.0
    %839 = vmatpush1.msra.mxu0 0.0
    %840 = vmatprep.subr.mxu0 0.0
    %841 = vmatpush1.msra.mxu0 0.0
    %842 = vmatprep.subr.mxu0 0.0
    %843 = vmatpush1.msra.mxu0 0.0
    %844 = vmatprep.subr.mxu0 0.0
    %845 = vmatpush1.msra.mxu0 0.0
    %846 = vmatprep.subr.mxu0 0.0
    %847 = vmatpush1.msra.mxu0 0.0
    %848 = vmatprep.mubr.f32.mxu0 0.0
    %849 = vmatmul.mubr.f32.gmra.mrb[0].mxu0 %v782
    %v850 = vpop.f32.mrb[0].mxu0
    %v851 = vadd.f32 %v778, %v850
    %v852 = vpop.f32.mrb[0].mxu0
    %853 = vdwg.mxu0
    %854 = vrot.lane.b32.xlu0 %v376, 112
    %v855 = vpop.permute.xlu0 %854
    %856 = vrot.lane.b32.xlu0 %v303, 112
    %v857 = vpop.permute.xlu0 %856
    %v858 = vsel %vm379, %v855, 0
    %v860 = vsel %vm379, %v857, 0
    %862 = vmatprep.subr.mxu0 0.0
    %863 = vmatpush1.xpose.msra.mxu0 %v860
    %864 = vmatprep.subr.mxu0 0.0
    %865 = vmatpush1.xpose.msra.mxu0 0.0
    %866 = vmatprep.subr.mxu0 0.0
    %867 = vmatpush1.xpose.msra.mxu0 0.0
    %868 = vmatprep.subr.mxu0 0.0
    %869 = vmatpush1.xpose.msra.mxu0 0.0
    %870 = vmatprep.subr.mxu0 0.0
    %871 = vmatpush1.xpose.msra.mxu0 0.0
    %872 = vmatprep.subr.mxu0 0.0
    %873 = vmatpush1.xpose.msra.mxu0 0.0
    %874 = vmatprep.subr.mxu0 0.0
    %875 = vmatpush1.xpose.msra.mxu0 0.0
    %876 = vmatprep.subr.mxu0 0.0
    %877 = vmatpush1.xpose.msra.mxu0 0.0
    %878 = vmatprep.subr.mxu0 0.0
    %879 = vmatpush1.xpose.msra.mxu0 0.0
    %880 = vmatprep.subr.mxu0 0.0
    %881 = vmatpush1.xpose.msra.mxu0 0.0
    %882 = vmatprep.subr.mxu0 0.0
    %883 = vmatpush1.xpose.msra.mxu0 0.0
    %884 = vmatprep.subr.mxu0 0.0
    %885 = vmatpush1.xpose.msra.mxu0 0.0
    %886 = vmatprep.subr.mxu0 0.0
    %887 = vmatpush1.xpose.msra.mxu0 0.0
    %888 = vmatprep.subr.mxu0 0.0
    %889 = vmatpush1.xpose.msra.mxu0 0.0
    %890 = vmatprep.subr.mxu0 0.0
    %891 = vmatpush1.xpose.msra.mxu0 0.0
    %892 = vmatprep.subr.mxu0 0.0
    %893 = vmatpush1.xpose.msra.mxu0 0.0
    %894 = vmatprep.subr.mxu0 0.0
    %895 = vmatpush1.xpose.msra.mxu0 0.0
    %896 = vmatprep.subr.mxu0 0.0
    %897 = vmatpush1.xpose.msra.mxu0 0.0
    %898 = vmatprep.subr.mxu0 0.0
    %899 = vmatpush1.xpose.msra.mxu0 0.0
    %900 = vmatprep.subr.mxu0 0.0
    %901 = vmatpush1.xpose.msra.mxu0 0.0
    %902 = vmatprep.subr.mxu0 0.0
    %903 = vmatpush1.xpose.msra.mxu0 0.0
    %904 = vmatprep.subr.mxu0 0.0
    %905 = vmatpush1.xpose.msra.mxu0 0.0
    %906 = vmatprep.subr.mxu0 0.0
    %907 = vmatpush1.xpose.msra.mxu0 0.0
    %908 = vmatprep.subr.mxu0 0.0
    %909 = vmatpush1.xpose.msra.mxu0 0.0
    %910 = vmatprep.subr.mxu0 0.0
    %911 = vmatpush1.xpose.msra.mxu0 0.0
    %912 = vmatprep.subr.mxu0 0.0
    %913 = vmatpush1.xpose.msra.mxu0 0.0
    %914 = vmatprep.subr.mxu0 0.0
    %915 = vmatpush1.xpose.msra.mxu0 0.0
    %916 = vmatprep.subr.mxu0 0.0
    %917 = vmatpush1.xpose.msra.mxu0 0.0
    %918 = vmatprep.subr.mxu0 0.0
    %919 = vmatpush1.xpose.msra.mxu0 0.0
    %920 = vmatprep.subr.mxu0 0.0
    %921 = vmatpush1.xpose.msra.mxu0 0.0
    %922 = vmatprep.subr.mxu0 0.0
    %923 = vmatpush1.xpose.msra.mxu0 0.0
    %924 = vmatprep.subr.mxu0 0.0
    %925 = vmatpush1.xpose.msra.mxu0 0.0
    %926 = vmatprep.mubr.f32.mxu0 0.0
    %927 = vmatmul.mubr.f32.gmra.mrb[0].mxu0 %v858
    %v928 = vpop.f32.mrb[0].mxu0
    %v929 = vadd.f32 %v158, %v928
    %v930 = vpop.f32.mrb[0].mxu0
    %931 = vdwg.mxu0
    %v932 = vmul.f32 %v929, 0.17677669
    %v933 = vsel %vm379, %v932, -inf
    %934 = vmax.xlane.f32.xlu0 %v933
    %v935 = vpop.xlane.xlu0 %934
    %v936 = vsub.f32 %v932, %v935
    %v937 = vmul.f32 %v936, 1.442695
    %v938 = vpow.pop %v937
    %v939 = vsel %vm379, %v938, 0.0
    %940 = vadd.xlane.f32.xlu0 %v939
    %v941 = vpop.xlane.xlu0 %940
    %v942 = vrcp.pop %v941
    %v943 = vmul.f32 %v938, %v942
    %944 = vrot.lane.b32.xlu0 %v230, 112
    %v945 = vpop.permute.xlu0 %944
    %v948 = vsel %vm379, %v943, 0
    %950 = vmatprep.subr.mxu0 0.0
    %951 = vmatpush1.msra.mxu0 %v945
    %952 = vmatprep.subr.mxu0 0.0
    %953 = vmatpush1.msra.mxu0 0.0
    %954 = vmatprep.subr.mxu0 0.0
    %955 = vmatpush1.msra.mxu0 0.0
    %956 = vmatprep.subr.mxu0 0.0
    %957 = vmatpush1.msra.mxu0 0.0
    %958 = vmatprep.subr.mxu0 0.0
    %959 = vmatpush1.msra.mxu0 0.0
    %960 = vmatprep.subr.mxu0 0.0
    %961 = vmatpush1.msra.mxu0 0.0
    %962 = vmatprep.subr.mxu0 0.0
    %963 = vmatpush1.msra.mxu0 0.0
    %964 = vmatprep.subr.mxu0 0.0
    %965 = vmatpush1.msra.mxu0 0.0
    %966 = vmatprep.subr.mxu0 0.0
    %967 = vmatpush1.msra.mxu0 0.0
    %968 = vmatprep.subr.mxu0 0.0
    %969 = vmatpush1.msra.mxu0 0.0
    %970 = vmatprep.subr.mxu0 0.0
    %971 = vmatpush1.msra.mxu0 0.0
    %972 = vmatprep.subr.mxu0 0.0
    %973 = vmatpush1.msra.mxu0 0.0
    %974 = vmatprep.subr.mxu0 0.0
    %975 = vmatpush1.msra.mxu0 0.0
    %976 = vmatprep.subr.mxu0 0.0
    %977 = vmatpush1.msra.mxu0 0.0
    %978 = vmatprep.subr.mxu0 0.0
    %979 = vmatpush1.msra.mxu0 0.0
    %980 = vmatprep.subr.mxu0 0.0
    %981 = vmatpush1.msra.mxu0 0.0
    %982 = vmatprep.subr.mxu0 0.0
    %983 = vmatpush1.msra.mxu0 0.0
    %984 = vmatprep.subr.mxu0 0.0
    %985 = vmatpush1.msra.mxu0 0.0
    %986 = vmatprep.subr.mxu0 0.0
    %987 = vmatpush1.msra.mxu0 0.0
    %988 = vmatprep.subr.mxu0 0.0
    %989 = vmatpush1.msra.mxu0 0.0
    %990 = vmatprep.subr.mxu0 0.0
    %991 = vmatpush1.msra.mxu0 0.0
    %992 = vmatprep.subr.mxu0 0.0
    %993 = vmatpush1.msra.mxu0 0.0
    %994 = vmatprep.subr.mxu0 0.0
    %995 = vmatpush1.msra.mxu0 0.0
    %996 = vmatprep.subr.mxu0 0.0
    %997 = vmatpush1.msra.mxu0 0.0
    %998 = vmatprep.subr.mxu0 0.0
    %999 = vmatpush1.msra.mxu0 0.0
    %1000 = vmatprep.subr.mxu0 0.0
    %1001 = vmatpush1.msra.mxu0 0.0
    %1002 = vmatprep.subr.mxu0 0.0
    %1003 = vmatpush1.msra.mxu0 0.0
    %1004 = vmatprep.subr.mxu0 0.0
    %1005 = vmatpush1.msra.mxu0 0.0
    %1006 = vmatprep.subr.mxu0 0.0
    %1007 = vmatpush1.msra.mxu0 0.0
    %1008 = vmatprep.subr.mxu0 0.0
    %1009 = vmatpush1.msra.mxu0 0.0
    %1010 = vmatprep.subr.mxu0 0.0
    %1011 = vmatpush1.msra.mxu0 0.0
    %1012 = vmatprep.subr.mxu0 0.0
    %1013 = vmatpush1.msra.mxu0 0.0
    %1014 = vmatprep.mubr.f32.mxu0 0.0
    %1015 = vmatmul.mubr.f32.gmra.mrb[0].mxu0 %v948
    %v1016 = vpop.f32.mrb[0].mxu0
    %v1017 = vadd.f32 0.0, %v1016
    %v1018 = vpop.f32.mrb[0].mxu0
    %1019 = vdwg.mxu0
    %v1021 = vsel %vm379, %v1017, 0
    %1023 = vmatprep.subr.mxu0 0.0
    %1024 = vmatpush1.msra.mxu0 %v126
    %1025 = vmatprep.subr.mxu0 0.0
    %1026 = vmatpush1.msra.mxu0 0.0
    %1027 = vmatprep.subr.mxu0 0.0
    %1028 = vmatpush1.msra.mxu0 0.0
    %1029 = vmatprep.subr.mxu0 0.0
    %1030 = vmatpush1.msra.mxu0 0.0
    %1031 = vmatprep.subr.mxu0 0.0
    %1032 = vmatpush1.msra.mxu0 0.0
    %1033 = vmatprep.subr.mxu0 0.0
    %1034 = vmatpush1.msra.mxu0 0.0
    %1035 = vmatprep.subr.mxu0 0.0
    %1036 = vmatpush1.msra.mxu0 0.0
    %1037 = vmatprep.subr.mxu0 0.0
    %1038 = vmatpush1.msra.mxu0 0.0
    %1039 = vmatprep.subr.mxu0 0.0
    %1040 = vmatpush1.msra.mxu0 0.0
    %1041 = vmatprep.subr.mxu0 0.0
    %1042 = vmatpush1.msra.mxu0 0.0
    %1043 = vmatprep.subr.mxu0 0.0
    %1044 = vmatpush1.msra.mxu0 0.0
    %1045 = vmatprep.subr.mxu0 0.0
    %1046 = vmatpush1.msra.mxu0 0.0
    %1047 = vmatprep.subr.mxu0 0.0
    %1048 = vmatpush1.msra.mxu0 0.0
    %1049 = vmatprep.subr.mxu0 0.0
    %1050 = vmatpush1.msra.mxu0 0.0
    %1051 = vmatprep.subr.mxu0 0.0
    %1052 = vmatpush1.msra.mxu0 0.0
    %1053 = vmatprep.subr.mxu0 0.0
    %1054 = vmatpush1.msra.mxu0 0.0
    %1055 = vmatprep.subr.mxu0 0.0
    %1056 = vmatpush1.msra.mxu0 0.0
    %1057 = vmatprep.subr.mxu0 0.0
    %1058 = vmatpush1.msra.mxu0 0.0
    %1059 = vmatprep.subr.mxu0 0.0
    %1060 = vmatpush1.msra.mxu0 0.0
    %1061 = vmatprep.subr.mxu0 0.0
    %1062 = vmatpush1.msra.mxu0 0.0
    %1063 = vmatprep.subr.mxu0 0.0
    %1064 = vmatpush1.msra.mxu0 0.0
    %1065 = vmatprep.subr.mxu0 0.0
    %1066 = vmatpush1.msra.mxu0 0.0
    %1067 = vmatprep.subr.mxu0 0.0
    %1068 = vmatpush1.msra.mxu0 0.0
    %1069 = vmatprep.subr.mxu0 0.0
    %1070 = vmatpush1.msra.mxu0 0.0
    %1071 = vmatprep.subr.mxu0 0.0
    %1072 = vmatpush1.msra.mxu0 0.0
    %1073 = vmatprep.subr.mxu0 0.0
    %1074 = vmatpush1.msra.mxu0 0.0
    %1075 = vmatprep.subr.mxu0 0.0
    %1076 = vmatpush1.msra.mxu0 0.0
    %1077 = vmatprep.subr.mxu0 0.0
    %1078 = vmatpush1.msra.mxu0 0.0
    %1079 = vmatprep.subr.mxu0 0.0
    %1080 = vmatpush1.msra.mxu0 0.0
    %1081 = vmatprep.subr.mxu0 0.0
    %1082 = vmatpush1.msra.mxu0 0.0
    %1083 = vmatprep.subr.mxu0 0.0
    %1084 = vmatpush1.msra.mxu0 0.0
    %1085 = vmatprep.subr.mxu0 0.0
    %1086 = vmatpush1.msra.mxu0 0.0
    %1087 = vmatprep.mubr.f32.mxu0 0.0
    %1088 = vmatmul.mubr.f32.gmra.mrb[0].mxu0 %v1021
    %v1089 = vpop.f32.mrb[0].mxu0
    %v1090 = vadd.f32 0.0, %v1089
    %v1091 = vpop.f32.mrb[0].mxu0
    %1092 = vdwg.mxu0
    %v1093 = vadd.f32 %v851, %v1090
    %1094 = vrot.lane.b32.xlu0 %v376, 104
    %v1095 = vpop.permute.xlu0 %1094
    %1096 = vrot.lane.b32.xlu0 %v303, 104
    %v1097 = vpop.permute.xlu0 %1096
    %v1098 = vsel %vm379, %v1095, 0
    %v1100 = vsel %vm379, %v1097, 0
    %1102 = vmatprep.subr.mxu0 0.0
    %1103 = vmatpush1.xpose.msra.mxu0 %v1100
    %1104 = vmatprep.subr.mxu0 0.0
    %1105 = vmatpush1.xpose.msra.mxu0 0.0
    %1106 = vmatprep.subr.mxu0 0.0
    %1107 = vmatpush1.xpose.msra.mxu0 0.0
    %1108 = vmatprep.subr.mxu0 0.0
    %1109 = vmatpush1.xpose.msra.mxu0 0.0
    %1110 = vmatprep.subr.mxu0 0.0
    %1111 = vmatpush1.xpose.msra.mxu0 0.0
    %1112 = vmatprep.subr.mxu0 0.0
    %1113 = vmatpush1.xpose.msra.mxu0 0.0
    %1114 = vmatprep.subr.mxu0 0.0
    %1115 = vmatpush1.xpose.msra.mxu0 0.0
    %1116 = vmatprep.subr.mxu0 0.0
    %1117 = vmatpush1.xpose.msra.mxu0 0.0
    %1118 = vmatprep.subr.mxu0 0.0
    %1119 = vmatpush1.xpose.msra.mxu0 0.0
    %1120 = vmatprep.subr.mxu0 0.0
    %1121 = vmatpush1.xpose.msra.mxu0 0.0
    %1122 = vmatprep.subr.mxu0 0.0
    %1123 = vmatpush1.xpose.msra.mxu0 0.0
    %1124 = vmatprep.subr.mxu0 0.0
    %1125 = vmatpush1.xpose.msra.mxu0 0.0
    %1126 = vmatprep.subr.mxu0 0.0
    %1127 = vmatpush1.xpose.msra.mxu0 0.0
    %1128 = vmatprep.subr.mxu0 0.0
    %1129 = vmatpush1.xpose.msra.mxu0 0.0
    %1130 = vmatprep.subr.mxu0 0.0
    %1131 = vmatpush1.xpose.msra.mxu0 0.0
    %1132 = vmatprep.subr.mxu0 0.0
    %1133 = vmatpush1.xpose.msra.mxu0 0.0
    %1134 = vmatprep.subr.mxu0 0.0
    %1135 = vmatpush1.xpose.msra.mxu0 0.0
    %1136 = vmatprep.subr.mxu0 0.0
    %1137 = vmatpush1.xpose.msra.mxu0 0.0
    %1138 = vmatprep.subr.mxu0 0.0
    %1139 = vmatpush1.xpose.msra.mxu0 0.0
    %1140 = vmatprep.subr.mxu0 0.0
    %1141 = vmatpush1.xpose.msra.mxu0 0.0
    %1142 = vmatprep.subr.mxu0 0.0
    %1143 = vmatpush1.xpose.msra.mxu0 0.0
    %1144 = vmatprep.subr.mxu0 0.0
    %1145 = vmatpush1.xpose.msra.mxu0 0.0
    %1146 = vmatprep.subr.mxu0 0.0
    %1147 = vmatpush1.xpose.msra.mxu0 0.0
    %1148 = vmatprep.subr.mxu0 0.0
    %1149 = vmatpush1.xpose.msra.mxu0 0.0
    %1150 = vmatprep.subr.mxu0 0.0
    %1151 = vmatpush1.xpose.msra.mxu0 0.0
    %1152 = vmatprep.subr.mxu0 0.0
    %1153 = vmatpush1.xpose.msra.mxu0 0.0
    %1154 = vmatprep.subr.mxu0 0.0
    %1155 = vmatpush1.xpose.msra.mxu0 0.0
    %1156 = vmatprep.subr.mxu0 0.0
    %1157 = vmatpush1.xpose.msra.mxu0 0.0
    %1158 = vmatprep.subr.mxu0 0.0
    %1159 = vmatpush1.xpose.msra.mxu0 0.0
    %1160 = vmatprep.subr.mxu0 0.0
    %1161 = vmatpush1.xpose.msra.mxu0 0.0
    %1162 = vmatprep.subr.mxu0 0.0
    %1163 = vmatpush1.xpose.msra.mxu0 0.0
    %1164 = vmatprep.subr.mxu0 0.0
    %1165 = vmatpush1.xpose.msra.mxu0 0.0
    %1166 = vmatprep.mubr.f32.mxu0 0.0
    %1167 = vmatmul.mubr.f32.gmra.mrb[0].mxu0 %v1098
    %v1168 = vpop.f32.mrb[0].mxu0
    %v1169 = vadd.f32 %v158, %v1168
    %v1170 = vpop.f32.mrb[0].mxu0
    %1171 = vdwg.mxu0
    %v1172 = vmul.f32 %v1169, 0.17677669
    %v1173 = vsel %vm379, %v1172, -inf
    %1174 = vmax.xlane.f32.xlu0 %v1173
    %v1175 = vpop.xlane.xlu0 %1174
    %v1176 = vsub.f32 %v1172, %v1175
    %v1177 = vmul.f32 %v1176, 1.442695
    %v1178 = vpow.pop %v1177
    %v1179 = vsel %vm379, %v1178, 0.0
    %1180 = vadd.xlane.f32.xlu0 %v1179
    %v1181 = vpop.xlane.xlu0 %1180
    %v1182 = vrcp.pop %v1181
    %v1183 = vmul.f32 %v1178, %v1182
    %1184 = vrot.lane.b32.xlu0 %v230, 104
    %v1185 = vpop.permute.xlu0 %1184
    %v1188 = vsel %vm379, %v1183, 0
    %1190 = vmatprep.subr.mxu0 0.0
    %1191 = vmatpush1.msra.mxu0 %v1185
    %1192 = vmatprep.subr.mxu0 0.0
    %1193 = vmatpush1.msra.mxu0 0.0
    %1194 = vmatprep.subr.mxu0 0.0
    %1195 = vmatpush1.msra.mxu0 0.0
    %1196 = vmatprep.subr.mxu0 0.0
    %1197 = vmatpush1.msra.mxu0 0.0
    %1198 = vmatprep.subr.mxu0 0.0
    %1199 = vmatpush1.msra.mxu0 0.0
    %1200 = vmatprep.subr.mxu0 0.0
    %1201 = vmatpush1.msra.mxu0 0.0
    %1202 = vmatprep.subr.mxu0 0.0
    %1203 = vmatpush1.msra.mxu0 0.0
    %1204 = vmatprep.subr.mxu0 0.0
    %1205 = vmatpush1.msra.mxu0 0.0
    %1206 = vmatprep.subr.mxu0 0.0
    %1207 = vmatpush1.msra.mxu0 0.0
    %1208 = vmatprep.subr.mxu0 0.0
    %1209 = vmatpush1.msra.mxu0 0.0
    %1210 = vmatprep.subr.mxu0 0.0
    %1211 = vmatpush1.msra.mxu0 0.0
    %1212 = vmatprep.subr.mxu0 0.0
    %1213 = vmatpush1.msra.mxu0 0.0
    %1214 = vmatprep.subr.mxu0 0.0
    %1215 = vmatpush1.msra.mxu0 0.0
    %1216 = vmatprep.subr.mxu0 0.0
    %1217 = vmatpush1.msra.mxu0 0.0
    %1218 = vmatprep.subr.mxu0 0.0
    %1219 = vmatpush1.msra.mxu0 0.0
    %1220 = vmatprep.subr.mxu0 0.0
    %1221 = vmatpush1.msra.mxu0 0.0
    %1222 = vmatprep.subr.mxu0 0.0
    %1223 = vmatpush1.msra.mxu0 0.0
    %1224 = vmatprep.subr.mxu0 0.0
    %1225 = vmatpush1.msra.mxu0 0.0
    %1226 = vmatprep.subr.mxu0 0.0
    %1227 = vmatpush1.msra.mxu0 0.0
    %1228 = vmatprep.subr.mxu0 0.0
    %1229 = vmatpush1.msra.mxu0 0.0
    %1230 = vmatprep.subr.mxu0 0.0
    %1231 = vmatpush1.msra.mxu0 0.0
    %1232 = vmatprep.subr.mxu0 0.0
    %1233 = vmatpush1.msra.mxu0 0.0
    %1234 = vmatprep.subr.mxu0 0.0
    %1235 = vmatpush1.msra.mxu0 0.0
    %1236 = vmatprep.subr.mxu0 0.0
    %1237 = vmatpush1.msra.mxu0 0.0
    %1238 = vmatprep.subr.mxu0 0.0
    %1239 = vmatpush1.msra.mxu0 0.0
    %1240 = vmatprep.subr.mxu0 0.0
    %1241 = vmatpush1.msra.mxu0 0.0
    %1242 = vmatprep.subr.mxu0 0.0
    %1243 = vmatpush1.msra.mxu0 0.0
    %1244 = vmatprep.subr.mxu0 0.0
    %1245 = vmatpush1.msra.mxu0 0.0
    %1246 = vmatprep.subr.mxu0 0.0
    %1247 = vmatpush1.msra.mxu0 0.0
    %1248 = vmatprep.subr.mxu0 0.0
    %1249 = vmatpush1.msra.mxu0 0.0
    %1250 = vmatprep.subr.mxu0 0.0
    %1251 = vmatpush1.msra.mxu0 0.0
    %1252 = vmatprep.subr.mxu0 0.0
    %1253 = vmatpush1.msra.mxu0 0.0
    %1254 = vmatprep.mubr.f32.mxu0 0.0
    %1255 = vmatmul.mubr.f32.gmra.mrb[0].mxu0 %v1188
    %v1256 = vpop.f32.mrb[0].mxu0
    %v1257 = vadd.f32 0.0, %v1256
    %v1258 = vpop.f32.mrb[0].mxu0
    %1259 = vdwg.mxu0
    %v1261 = vsel %vm379, %v1257, 0
    %1263 = vmatprep.subr.mxu0 0.0
    %1264 = vmatpush1.msra.mxu0 %v127
    %1265 = vmatprep.subr.mxu0 0.0
    %1266 = vmatpush1.msra.mxu0 0.0
    %1267 = vmatprep.subr.mxu0 0.0
    %1268 = vmatpush1.msra.mxu0 0.0
    %1269 = vmatprep.subr.mxu0 0.0
    %1270 = vmatpush1.msra.mxu0 0.0
    %1271 = vmatprep.subr.mxu0 0.0
    %1272 = vmatpush1.msra.mxu0 0.0
    %1273 = vmatprep.subr.mxu0 0.0
    %1274 = vmatpush1.msra.mxu0 0.0
    %1275 = vmatprep.subr.mxu0 0.0
    %1276 = vmatpush1.msra.mxu0 0.0
    %1277 = vmatprep.subr.mxu0 0.0
    %1278 = vmatpush1.msra.mxu0 0.0
    %1279 = vmatprep.subr.mxu0 0.0
    %1280 = vmatpush1.msra.mxu0 0.0
    %1281 = vmatprep.subr.mxu0 0.0
    %1282 = vmatpush1.msra.mxu0 0.0
    %1283 = vmatprep.subr.mxu0 0.0
    %1284 = vmatpush1.msra.mxu0 0.0
    %1285 = vmatprep.subr.mxu0 0.0
    %1286 = vmatpush1.msra.mxu0 0.0
    %1287 = vmatprep.subr.mxu0 0.0
    %1288 = vmatpush1.msra.mxu0 0.0
    %1289 = vmatprep.subr.mxu0 0.0
    %1290 = vmatpush1.msra.mxu0 0.0
    %1291 = vmatprep.subr.mxu0 0.0
    %1292 = vmatpush1.msra.mxu0 0.0
    %1293 = vmatprep.subr.mxu0 0.0
    %1294 = vmatpush1.msra.mxu0 0.0
    %1295 = vmatprep.subr.mxu0 0.0
    %1296 = vmatpush1.msra.mxu0 0.0
    %1297 = vmatprep.subr.mxu0 0.0
    %1298 = vmatpush1.msra.mxu0 0.0
    %1299 = vmatprep.subr.mxu0 0.0
    %1300 = vmatpush1.msra.mxu0 0.0
    %1301 = vmatprep.subr.mxu0 0.0
    %1302 = vmatpush1.msra.mxu0 0.0
    %1303 = vmatprep.subr.mxu0 0.0
    %1304 = vmatpush1.msra.mxu0 0.0
    %1305 = vmatprep.subr.mxu0 0.0
    %1306 = vmatpush1.msra.mxu0 0.0
    %1307 = vmatprep.subr.mxu0 0.0
    %1308 = vmatpush1.msra.mxu0 0.0
    %1309 = vmatprep.subr.mxu0 0.0
    %1310 = vmatpush1.msra.mxu0 0.0
    %1311 = vmatprep.subr.mxu0 0.0
    %1312 = vmatpush1.msra.mxu0 0.0
    %1313 = vmatprep.subr.mxu0 0.0
    %1314 = vmatpush1.msra.mxu0 0.0
    %1315 = vmatprep.subr.mxu0 0.0
    %1316 = vmatpush1.msra.mxu0 0.0
    %1317 = vmatprep.subr.mxu0 0.0
    %1318 = vmatpush1.msra.mxu0 0.0
    %1319 = vmatprep.subr.mxu0 0.0
    %1320 = vmatpush1.msra.mxu0 0.0
    %1321 = vmatprep.subr.mxu0 0.0
    %1322 = vmatpush1.msra.mxu0 0.0
    %1323 = vmatprep.subr.mxu0 0.0
    %1324 = vmatpush1.msra.mxu0 0.0
    %1325 = vmatprep.subr.mxu0 0.0
    %1326 = vmatpush1.msra.mxu0 0.0
    %1327 = vmatprep.mubr.f32.mxu0 0.0
    %1328 = vmatmul.mubr.f32.gmra.mrb[0].mxu0 %v1261
    %v1329 = vpop.f32.mrb[0].mxu0
    %v1330 = vadd.f32 0.0, %v1329
    %v1331 = vpop.f32.mrb[0].mxu0
    %1332 = vdwg.mxu0
    %v1333 = vadd.f32 %v1093, %v1330
    %v1335 = vlaneseq
    %v1336 = vshrl.u32 %v1335, 7
    %v1337 = vsub.s32 0, %v1336
    %v1338 = vrot.slane %v128, %v1337
    %v1340 = vadd.f32 %v1333, %v1338
    %v1341 = vadd.f32 %v1340, %v157
    %v1342 = vsel %vm159, %v1341, 0.0
    %1343 = vadd.xlane.f32.xlu0 %v1342
    %v1344 = vpop.xlane.xlu0 %1343
    %v1345 = vrcp.pop 32.0
    %v1346 = vmul.f32 %v1344, %v1345
    %v1347 = vsub.f32 %v1341, %v1346
    %v1348 = vmul.f32 %v1347, %v1347
    %v1349 = vsel %vm159, %v1348, 0.0
    %1350 = vadd.xlane.f32.xlu0 %v1349
    %v1351 = vpop.xlane.xlu0 %1350
    %v1352 = vmul.f32 %v1351, %v1345
    %v1353 = vadd.f32 %v1352, 1e-05
    %v1354 = vrsqrt.pop %v1353
    %v1355 = vmul.f32 %v1347, %v1354
    %v1357 = vlaneseq
    %v1358 = vshrl.u32 %v1357, 7
    %v1359 = vsub.s32 0, %v1358
    %v1360 = vrot.slane %v129, %v1359
    %v1362 = vmul.f32 %v1355, %v1360
    %v1364 = vlaneseq
    %v1365 = vshrl.u32 %v1364, 7
    %v1366 = vsub.s32 0, %v1365
    %v1367 = vrot.slane %v130, %v1366
    %v1369 = vadd.f32 %v1362, %v1367
    %v1371 = vlaneseq
    %v1372 = vshrl.u32 %v1371, 7
    %v1373 = vsub.s32 0, %v1372
    %v1374 = vrot.slane %v135, %v1373
    %v1377 = vsel %vm159, %v1369, 0
    %1379 = vmatprep.subr.mxu0 0.0
    %1380 = vmatpush1.msra.mxu0 %v131
    %1381 = vmatprep.subr.mxu0 0.0
    %1382 = vmatpush1.msra.mxu0 %v132
    %1383 = vmatprep.subr.mxu0 0.0
    %1384 = vmatpush1.msra.mxu0 %v133
    %1385 = vmatprep.subr.mxu0 0.0
    %1386 = vmatpush1.msra.mxu0 %v134
    %1387 = vmatprep.subr.mxu0 0.0
    %1388 = vmatpush1.msra.mxu0 0.0
    %1389 = vmatprep.subr.mxu0 0.0
    %1390 = vmatpush1.msra.mxu0 0.0
    %1391 = vmatprep.subr.mxu0 0.0
    %1392 = vmatpush1.msra.mxu0 0.0
    %1393 = vmatprep.subr.mxu0 0.0
    %1394 = vmatpush1.msra.mxu0 0.0
    %1395 = vmatprep.subr.mxu0 0.0
    %1396 = vmatpush1.msra.mxu0 0.0
    %1397 = vmatprep.subr.mxu0 0.0
    %1398 = vmatpush1.msra.mxu0 0.0
    %1399 = vmatprep.subr.mxu0 0.0
    %1400 = vmatpush1.msra.mxu0 0.0
    %1401 = vmatprep.subr.mxu0 0.0
    %1402 = vmatpush1.msra.mxu0 0.0
    %1403 = vmatprep.subr.mxu0 0.0
    %1404 = vmatpush1.msra.mxu0 0.0
    %1405 = vmatprep.subr.mxu0 0.0
    %1406 = vmatpush1.msra.mxu0 0.0
    %1407 = vmatprep.subr.mxu0 0.0
    %1408 = vmatpush1.msra.mxu0 0.0
    %1409 = vmatprep.subr.mxu0 0.0
    %1410 = vmatpush1.msra.mxu0 0.0
    %1411 = vmatprep.subr.mxu0 0.0
    %1412 = vmatpush1.msra.mxu0 0.0
    %1413 = vmatprep.subr.mxu0 0.0
    %1414 = vmatpush1.msra.mxu0 0.0
    %1415 = vmatprep.subr.mxu0 0.0
    %1416 = vmatpush1.msra.mxu0 0.0
    %1417 = vmatprep.subr.mxu0 0.0
    %1418 = vmatpush1.msra.mxu0 0.0
    %1419 = vmatprep.subr.mxu0 0.0
    %1420 = vmatpush1.msra.mxu0 0.0
    %1421 = vmatprep.subr.mxu0 0.0
    %1422 = vmatpush1.msra.mxu0 0.0
    %1423 = vmatprep.subr.mxu0 0.0
    %1424 = vmatpush1.msra.mxu0 0.0
    %1425 = vmatprep.subr.mxu0 0.0
    %1426 = vmatpush1.msra.mxu0 0.0
    %1427 = vmatprep.subr.mxu0 0.0
    %1428 = vmatpush1.msra.mxu0 0.0
    %1429 = vmatprep.subr.mxu0 0.0
    %1430 = vmatpush1.msra.mxu0 0.0
    %1431 = vmatprep.subr.mxu0 0.0
    %1432 = vmatpush1.msra.mxu0 0.0
    %1433 = vmatprep.subr.mxu0 0.0
    %1434 = vmatpush1.msra.mxu0 0.0
    %1435 = vmatprep.subr.mxu0 0.0
    %1436 = vmatpush1.msra.mxu0 0.0
    %1437 = vmatprep.subr.mxu0 0.0
    %1438 = vmatpush1.msra.mxu0 0.0
    %1439 = vmatprep.subr.mxu0 0.0
    %1440 = vmatpush1.msra.mxu0 0.0
    %1441 = vmatprep.subr.mxu0 0.0
    %1442 = vmatpush1.msra.mxu0 0.0
    %1443 = vmatprep.mubr.f32.mxu0 0.0
    %1444 = vmatmul.mubr.f32.gmra.mrb[0].mxu0 %v1377
    %v1445 = vpop.f32.mrb[0].mxu0
    %v1446 = vadd.f32 %v1374, %v1445
    %v1447 = vpop.f32.mrb[0].mxu0
    %1448 = vdwg.mxu0
    %v1449 = vmax.f32 %v1446, 0.0
    %v1451 = vlaneseq
    %v1452 = vshrl.u32 %v1451, 7
    %v1453 = vsub.s32 0, %v1452
    %v1454 = vrot.slane %v152, %v1453
    %1456 = vmatprep.subr.mxu0 0.0
    %1457 = vmatpush1.msra.mxu0 %v136
    %1458 = vmatprep.subr.mxu0 0.0
    %1459 = vmatpush1.msra.mxu0 %v137
    %1460 = vmatprep.subr.mxu0 0.0
    %1461 = vmatpush1.msra.mxu0 %v138
    %1462 = vmatprep.subr.mxu0 0.0
    %1463 = vmatpush1.msra.mxu0 %v139
    %1464 = vmatprep.subr.mxu0 0.0
    %1465 = vmatpush1.msra.mxu0 %v140
    %1466 = vmatprep.subr.mxu0 0.0
    %1467 = vmatpush1.msra.mxu0 %v141
    %1468 = vmatprep.subr.mxu0 0.0
    %1469 = vmatpush1.msra.mxu0 %v142
    %1470 = vmatprep.subr.mxu0 0.0
    %1471 = vmatpush1.msra.mxu0 %v143
    %1472 = vmatprep.subr.mxu0 0.0
    %1473 = vmatpush1.msra.mxu0 %v144
    %1474 = vmatprep.subr.mxu0 0.0
    %1475 = vmatpush1.msra.mxu0 %v145
    %1476 = vmatprep.subr.mxu0 0.0
    %1477 = vmatpush1.msra.mxu0 %v146
    %1478 = vmatprep.subr.mxu0 0.0
    %1479 = vmatpush1.msra.mxu0 %v147
    %1480 = vmatprep.subr.mxu0 0.0
    %1481 = vmatpush1.msra.mxu0 %v148
    %1482 = vmatprep.subr.mxu0 0.0
    %1483 = vmatpush1.msra.mxu0 %v149
    %1484 = vmatprep.subr.mxu0 0.0
    %1485 = vmatpush1.msra.mxu0 %v150
    %1486 = vmatprep.subr.mxu0 0.0
    %1487 = vmatpush1.msra.mxu0 %v151
    %1488 = vmatprep.subr.mxu0 0.0
    %1489 = vmatpush1.msra.mxu0 0.0
    %1490 = vmatprep.subr.mxu0 0.0
    %1491 = vmatpush1.msra.mxu0 0.0
    %1492 = vmatprep.subr.mxu0 0.0
    %1493 = vmatpush1.msra.mxu0 0.0
    %1494 = vmatprep.subr.mxu0 0.0
    %1495 = vmatpush1.msra.mxu0 0.0
    %1496 = vmatprep.subr.mxu0 0.0
    %1497 = vmatpush1.msra.mxu0 0.0
    %1498 = vmatprep.subr.mxu0 0.0
    %1499 = vmatpush1.msra.mxu0 0.0
    %1500 = vmatprep.subr.mxu0 0.0
    %1501 = vmatpush1.msra.mxu0 0.0
    %1502 = vmatprep.subr.mxu0 0.0
    %1503 = vmatpush1.msra.mxu0 0.0
    %1504 = vmatprep.subr.mxu0 0.0
    %1505 = vmatpush1.msra.mxu0 0.0
    %1506 = vmatprep.subr.mxu0 0.0
    %1507 = vmatpush1.msra.mxu0 0.0
    %1508 = vmatprep.subr.mxu0 0.0
    %1509 = vmatpush1.msra.mxu0 0.0
    %1510 = vmatprep.subr.mxu0 0.0
    %1511 = vmatpush1.msra.mxu0 0.0
    %1512 = vmatprep.subr.mxu0 0.0
    %1513 = vmatpush1.msra.mxu0 0.0
    %1514 = vmatprep.subr.mxu0 0.0
    %1515 = vmatpush1.msra.mxu0 0.0
    %1516 = vmatprep.subr.mxu0 0.0
    %1517 = vmatpush1.msra.mxu0 0.0
    %1518 = vmatprep.subr.mxu0 0.0
    %1519 = vmatpush1.msra.mxu0 0.0
    %1520 = vmatprep.mubr.f32.mxu0 0.0
    %1521 = vmatmul.mubr.f32.gmra.mrb[0].mxu0 %v1449
    %v1522 = vpop.f32.mrb[0].mxu0
    %v1523 = vadd.f32 %v1454, %v1522
    %v1524 = vpop.f32.mrb[0].mxu0
    %1525 = vdwg.mxu0
    %v1526 = vadd.f32 %v1523, %v1369
    %v1527 = vsel %vm159, %v1526, 0.0
    %1528 = vadd.xlane.f32.xlu0 %v1527
    %v1529 = vpop.xlane.xlu0 %1528
    %v1530 = vmul.f32 %v1529, %v1345
    %v1531 = vsub.f32 %v1526, %v1530
    %v1532 = vmul.f32 %v1531, %v1531
    %v1533 = vsel %vm159, %v1532, 0.0
    %1534 = vadd.xlane.f32.xlu0 %v1533
    %v1535 = vpop.xlane.xlu0 %1534
    %v1536 = vmul.f32 %v1535, %v1345
    %v1537 = vadd.f32 %v1536, 1e-05
    %v1538 = vrsqrt.pop %v1537
    %v1539 = vmul.f32 %v1531, %v1538
    %v1541 = vlaneseq
    %v1542 = vshrl.u32 %v1541, 7
    %v1543 = vsub.s32 0, %v1542
    %v1544 = vrot.slane %v153, %v1543
    %v1546 = vmul.f32 %v1539, %v1544
    %v1548 = vlaneseq
    %v1549 = vshrl.u32 %v1548, 7
    %v1550 = vsub.s32 0, %v1549
    %v1551 = vrot.slane %v154, %v1550
    %v1553 = vadd.f32 %v1546, %v1551
    %1554 = vst.msk [vmem:[#allocation10] sm:$0xff] %vm159, %v1553
    %s1555 = scalar_lea.vmem [#allocation2], 8
    %v1556 = vld [vmem:[%s1555] sm:$0xff]
    %s1557 = scalar_lea.vmem [#allocation5], 8
    %v1558 = vld [vmem:[%s1557] sm:$0xff]
    %s1559 = scalar_lea.vmem [#allocation7], 8
    %v1560 = vld [vmem:[%s1559] sm:$0xff]
    %s1561 = scalar_lea.vmem [#allocation8], 8
    %v1562 = vld [vmem:[%s1561] sm:$0xff]
    %v1564 = vsel %vm159, %v1556, 0
    %1566 = vmatprep.subr.mxu0 0.0
    %1567 = vmatpush1.msra.mxu0 %v112
    %1568 = vmatprep.subr.mxu0 0.0
    %1569 = vmatpush1.msra.mxu0 %v113
    %1570 = vmatprep.subr.mxu0 0.0
    %1571 = vmatpush1.msra.mxu0 %v114
    %1572 = vmatprep.subr.mxu0 0.0
    %1573 = vmatpush1.msra.mxu0 %v115
    %1574 = vmatprep.subr.mxu0 0.0
    %1575 = vmatpush1.msra.mxu0 0.0
    %1576 = vmatprep.subr.mxu0 0.0
    %1577 = vmatpush1.msra.mxu0 0.0
    %1578 = vmatprep.subr.mxu0 0.0
    %1579 = vmatpush1.msra.mxu0 0.0
    %1580 = vmatprep.subr.mxu0 0.0
    %1581 = vmatpush1.msra.mxu0 0.0
    %1582 = vmatprep.subr.mxu0 0.0
    %1583 = vmatpush1.msra.mxu0 0.0
    %1584 = vmatprep.subr.mxu0 0.0
    %1585 = vmatpush1.msra.mxu0 0.0
    %1586 = vmatprep.subr.mxu0 0.0
    %1587 = vmatpush1.msra.mxu0 0.0
    %1588 = vmatprep.subr.mxu0 0.0
    %1589 = vmatpush1.msra.mxu0 0.0
    %1590 = vmatprep.subr.mxu0 0.0
    %1591 = vmatpush1.msra.mxu0 0.0
    %1592 = vmatprep.subr.mxu0 0.0
    %1593 = vmatpush1.msra.mxu0 0.0
    %1594 = vmatprep.subr.mxu0 0.0
    %1595 = vmatpush1.msra.mxu0 0.0
    %1596 = vmatprep.subr.mxu0 0.0
    %1597 = vmatpush1.msra.mxu0 0.0
    %1598 = vmatprep.subr.mxu0 0.0
    %1599 = vmatpush1.msra.mxu0 0.0
    %1600 = vmatprep.subr.mxu0 0.0
    %1601 = vmatpush1.msra.mxu0 0.0
    %1602 = vmatprep.subr.mxu0 0.0
    %1603 = vmatpush1.msra.mxu0 0.0
    %1604 = vmatprep.subr.mxu0 0.0
    %1605 = vmatpush1.msra.mxu0 0.0
    %1606 = vmatprep.subr.mxu0 0.0
    %1607 = vmatpush1.msra.mxu0 0.0
    %1608 = vmatprep.subr.mxu0 0.0
    %1609 = vmatpush1.msra.mxu0 0.0
    %1610 = vmatprep.subr.mxu0 0.0
    %1611 = vmatpush1.msra.mxu0 0.0
    %1612 = vmatprep.subr.mxu0 0.0
    %1613 = vmatpush1.msra.mxu0 0.0
    %1614 = vmatprep.subr.mxu0 0.0
    %1615 = vmatpush1.msra.mxu0 0.0
    %1616 = vmatprep.subr.mxu0 0.0
    %1617 = vmatpush1.msra.mxu0 0.0
    %1618 = vmatprep.subr.mxu0 0.0
    %1619 = vmatpush1.msra.mxu0 0.0
    %1620 = vmatprep.subr.mxu0 0.0
    %1621 = vmatpush1.msra.mxu0 0.0
    %1622 = vmatprep.subr.mxu0 0.0
    %1623 = vmatpush1.msra.mxu0 0.0
    %1624 = vmatprep.subr.mxu0 0.0
    %1625 = vmatpush1.msra.mxu0 0.0
    %1626 = vmatprep.subr.mxu0 0.0
    %1627 = vmatpush1.msra.mxu0 0.0
    %1628 = vmatprep.subr.mxu0 0.0
    %1629 = vmatpush1.msra.mxu0 0.0
    %1630 = vmatprep.mubr.f32.mxu0 0.0
    %1631 = vmatmul.mubr.f32.gmra.mrb[0].mxu0 %v1564
    %v1632 = vpop.f32.mrb[0].mxu0
    %v1633 = vadd.f32 0.0, %v1632
    %v1634 = vpop.f32.mrb[0].mxu0
    %1635 = vdwg.mxu0
    %v1637 = vsel %vm159, %v1558, 0
    %1639 = vmatprep.subr.mxu0 0.0
    %1640 = vmatpush1.msra.mxu0 %v116
    %1641 = vmatprep.subr.mxu0 0.0
    %1642 = vmatpush1.msra.mxu0 %v117
    %1643 = vmatprep.subr.mxu0 0.0
    %1644 = vmatpush1.msra.mxu0 %v118
    %1645 = vmatprep.subr.mxu0 0.0
    %1646 = vmatpush1.msra.mxu0 %v119
    %1647 = vmatprep.subr.mxu0 0.0
    %1648 = vmatpush1.msra.mxu0 0.0
    %1649 = vmatprep.subr.mxu0 0.0
    %1650 = vmatpush1.msra.mxu0 0.0
    %1651 = vmatprep.subr.mxu0 0.0
    %1652 = vmatpush1.msra.mxu0 0.0
    %1653 = vmatprep.subr.mxu0 0.0
    %1654 = vmatpush1.msra.mxu0 0.0
    %1655 = vmatprep.subr.mxu0 0.0
    %1656 = vmatpush1.msra.mxu0 0.0
    %1657 = vmatprep.subr.mxu0 0.0
    %1658 = vmatpush1.msra.mxu0 0.0
    %1659 = vmatprep.subr.mxu0 0.0
    %1660 = vmatpush1.msra.mxu0 0.0
    %1661 = vmatprep.subr.mxu0 0.0
    %1662 = vmatpush1.msra.mxu0 0.0
    %1663 = vmatprep.subr.mxu0 0.0
    %1664 = vmatpush1.msra.mxu0 0.0
    %1665 = vmatprep.subr.mxu0 0.0
    %1666 = vmatpush1.msra.mxu0 0.0
    %1667 = vmatprep.subr.mxu0 0.0
    %1668 = vmatpush1.msra.mxu0 0.0
    %1669 = vmatprep.subr.mxu0 0.0
    %1670 = vmatpush1.msra.mxu0 0.0
    %1671 = vmatprep.subr.mxu0 0.0
    %1672 = vmatpush1.msra.mxu0 0.0
    %1673 = vmatprep.subr.mxu0 0.0
    %1674 = vmatpush1.msra.mxu0 0.0
    %1675 = vmatprep.subr.mxu0 0.0
    %1676 = vmatpush1.msra.mxu0 0.0
    %1677 = vmatprep.subr.mxu0 0.0
    %1678 = vmatpush1.msra.mxu0 0.0
    %1679 = vmatprep.subr.mxu0 0.0
    %1680 = vmatpush1.msra.mxu0 0.0
    %1681 = vmatprep.subr.mxu0 0.0
    %1682 = vmatpush1.msra.mxu0 0.0
    %1683 = vmatprep.subr.mxu0 0.0
    %1684 = vmatpush1.msra.mxu0 0.0
    %1685 = vmatprep.subr.mxu0 0.0
    %1686 = vmatpush1.msra.mxu0 0.0
    %1687 = vmatprep.subr.mxu0 0.0
    %1688 = vmatpush1.msra.mxu0 0.0
    %1689 = vmatprep.subr.mxu0 0.0
    %1690 = vmatpush1.msra.mxu0 0.0
    %1691 = vmatprep.subr.mxu0 0.0
    %1692 = vmatpush1.msra.mxu0 0.0
    %1693 = vmatprep.subr.mxu0 0.0
    %1694 = vmatpush1.msra.mxu0 0.0
    %1695 = vmatprep.subr.mxu0 0.0
    %1696 = vmatpush1.msra.mxu0 0.0
    %1697 = vmatprep.subr.mxu0 0.0
    %1698 = vmatpush1.msra.mxu0 0.0
    %1699 = vmatprep.subr.mxu0 0.0
    %1700 = vmatpush1.msra.mxu0 0.0
    %1701 = vmatprep.subr.mxu0 0.0
    %1702 = vmatpush1.msra.mxu0 0.0
    %1703 = vmatprep.mubr.f32.mxu0 0.0
    %1704 = vmatmul.mubr.f32.gmra.mrb[0].mxu0 %v1637
    %v1705 = vpop.f32.mrb[0].mxu0
    %v1706 = vadd.f32 0.0, %v1705
    %v1707 = vpop.f32.mrb[0].mxu0
    %1708 = vdwg.mxu0
    %v1710 = vsel %vm159, %v1560, 0
    %1712 = vmatprep.subr.mxu0 0.0
    %1713 = vmatpush1.msra.mxu0 %v120
    %1714 = vmatprep.subr.mxu0 0.0
    %1715 = vmatpush1.msra.mxu0 %v121
    %1716 = vmatprep.subr.mxu0 0.0
    %1717 = vmatpush1.msra.mxu0 %v122
    %1718 = vmatprep.subr.mxu0 0.0
    %1719 = vmatpush1.msra.mxu0 %v123
    %1720 = vmatprep.subr.mxu0 0.0
    %1721 = vmatpush1.msra.mxu0 0.0
    %1722 = vmatprep.subr.mxu0 0.0
    %1723 = vmatpush1.msra.mxu0 0.0
    %1724 = vmatprep.subr.mxu0 0.0
    %1725 = vmatpush1.msra.mxu0 0.0
    %1726 = vmatprep.subr.mxu0 0.0
    %1727 = vmatpush1.msra.mxu0 0.0
    %1728 = vmatprep.subr.mxu0 0.0
    %1729 = vmatpush1.msra.mxu0 0.0
    %1730 = vmatprep.subr.mxu0 0.0
    %1731 = vmatpush1.msra.mxu0 0.0
    %1732 = vmatprep.subr.mxu0 0.0
    %1733 = vmatpush1.msra.mxu0 0.0
    %1734 = vmatprep.subr.mxu0 0.0
    %1735 = vmatpush1.msra.mxu0 0.0
    %1736 = vmatprep.subr.mxu0 0.0
    %1737 = vmatpush1.msra.mxu0 0.0
    %1738 = vmatprep.subr.mxu0 0.0
    %1739 = vmatpush1.msra.mxu0 0.0
    %1740 = vmatprep.subr.mxu0 0.0
    %1741 = vmatpush1.msra.mxu0 0.0
    %1742 = vmatprep.subr.mxu0 0.0
    %1743 = vmatpush1.msra.mxu0 0.0
    %1744 = vmatprep.subr.mxu0 0.0
    %1745 = vmatpush1.msra.mxu0 0.0
    %1746 = vmatprep.subr.mxu0 0.0
    %1747 = vmatpush1.msra.mxu0 0.0
    %1748 = vmatprep.subr.mxu0 0.0
    %1749 = vmatpush1.msra.mxu0 0.0
    %1750 = vmatprep.subr.mxu0 0.0
    %1751 = vmatpush1.msra.mxu0 0.0
    %1752 = vmatprep.subr.mxu0 0.0
    %1753 = vmatpush1.msra.mxu0 0.0
    %1754 = vmatprep.subr.mxu0 0.0
    %1755 = vmatpush1.msra.mxu0 0.0
    %1756 = vmatprep.subr.mxu0 0.0
    %1757 = vmatpush1.msra.mxu0 0.0
    %1758 = vmatprep.subr.mxu0 0.0
    %1759 = vmatpush1.msra.mxu0 0.0
    %1760 = vmatprep.subr.mxu0 0.0
    %1761 = vmatpush1.msra.mxu0 0.0
    %1762 = vmatprep.subr.mxu0 0.0
    %1763 = vmatpush1.msra.mxu0 0.0
    %1764 = vmatprep.subr.mxu0 0.0
    %1765 = vmatpush1.msra.mxu0 0.0
    %1766 = vmatprep.subr.mxu0 0.0
    %1767 = vmatpush1.msra.mxu0 0.0
    %1768 = vmatprep.subr.mxu0 0.0
    %1769 = vmatpush1.msra.mxu0 0.0
    %1770 = vmatprep.subr.mxu0 0.0
    %1771 = vmatpush1.msra.mxu0 0.0
    %1772 = vmatprep.subr.mxu0 0.0
    %1773 = vmatpush1.msra.mxu0 0.0
    %1774 = vmatprep.subr.mxu0 0.0
    %1775 = vmatpush1.msra.mxu0 0.0
    %1776 = vmatprep.mubr.f32.mxu0 0.0
    %1777 = vmatmul.mubr.f32.gmra.mrb[0].mxu0 %v1710
    %v1778 = vpop.f32.mrb[0].mxu0
    %v1779 = vadd.f32 0.0, %v1778
    %v1780 = vpop.f32.mrb[0].mxu0
    %1781 = vdwg.mxu0
    %v1783 = vsel %vm379, %v1779, 0
    %v1786 = vsel %vm379, %v1706, 0
    %1788 = vmatprep.subr.mxu0 0.0
    %1789 = vmatpush1.xpose.msra.mxu0 %v1786
    %1790 = vmatprep.subr.mxu0 0.0
    %1791 = vmatpush1.xpose.msra.mxu0 0.0
    %1792 = vmatprep.subr.mxu0 0.0
    %1793 = vmatpush1.xpose.msra.mxu0 0.0
    %1794 = vmatprep.subr.mxu0 0.0
    %1795 = vmatpush1.xpose.msra.mxu0 0.0
    %1796 = vmatprep.subr.mxu0 0.0
    %1797 = vmatpush1.xpose.msra.mxu0 0.0
    %1798 = vmatprep.subr.mxu0 0.0
    %1799 = vmatpush1.xpose.msra.mxu0 0.0
    %1800 = vmatprep.subr.mxu0 0.0
    %1801 = vmatpush1.xpose.msra.mxu0 0.0
    %1802 = vmatprep.subr.mxu0 0.0
    %1803 = vmatpush1.xpose.msra.mxu0 0.0
    %1804 = vmatprep.subr.mxu0 0.0
    %1805 = vmatpush1.xpose.msra.mxu0 0.0
    %1806 = vmatprep.subr.mxu0 0.0
    %1807 = vmatpush1.xpose.msra.mxu0 0.0
    %1808 = vmatprep.subr.mxu0 0.0
    %1809 = vmatpush1.xpose.msra.mxu0 0.0
    %1810 = vmatprep.subr.mxu0 0.0
    %1811 = vmatpush1.xpose.msra.mxu0 0.0
    %1812 = vmatprep.subr.mxu0 0.0
    %1813 = vmatpush1.xpose.msra.mxu0 0.0
    %1814 = vmatprep.subr.mxu0 0.0
    %1815 = vmatpush1.xpose.msra.mxu0 0.0
    %1816 = vmatprep.subr.mxu0 0.0
    %1817 = vmatpush1.xpose.msra.mxu0 0.0
    %1818 = vmatprep.subr.mxu0 0.0
    %1819 = vmatpush1.xpose.msra.mxu0 0.0
    %1820 = vmatprep.subr.mxu0 0.0
    %1821 = vmatpush1.xpose.msra.mxu0 0.0
    %1822 = vmatprep.subr.mxu0 0.0
    %1823 = vmatpush1.xpose.msra.mxu0 0.0
    %1824 = vmatprep.subr.mxu0 0.0
    %1825 = vmatpush1.xpose.msra.mxu0 0.0
    %1826 = vmatprep.subr.mxu0 0.0
    %1827 = vmatpush1.xpose.msra.mxu0 0.0
    %1828 = vmatprep.subr.mxu0 0.0
    %1829 = vmatpush1.xpose.msra.mxu0 0.0
    %1830 = vmatprep.subr.mxu0 0.0
    %1831 = vmatpush1.xpose.msra.mxu0 0.0
    %1832 = vmatprep.subr.mxu0 0.0
    %1833 = vmatpush1.xpose.msra.mxu0 0.0
    %1834 = vmatprep.subr.mxu0 0.0
    %1835 = vmatpush1.xpose.msra.mxu0 0.0
    %1836 = vmatprep.subr.mxu0 0.0
    %1837 = vmatpush1.xpose.msra.mxu0 0.0
    %1838 = vmatprep.subr.mxu0 0.0
    %1839 = vmatpush1.xpose.msra.mxu0 0.0
    %1840 = vmatprep.subr.mxu0 0.0
    %1841 = vmatpush1.xpose.msra.mxu0 0.0
    %1842 = vmatprep.subr.mxu0 0.0
    %1843 = vmatpush1.xpose.msra.mxu0 0.0
    %1844 = vmatprep.subr.mxu0 0.0
    %1845 = vmatpush1.xpose.msra.mxu0 0.0
    %1846 = vmatprep.subr.mxu0 0.0
    %1847 = vmatpush1.xpose.msra.mxu0 0.0
    %1848 = vmatprep.subr.mxu0 0.0
    %1849 = vmatpush1.xpose.msra.mxu0 0.0
    %1850 = vmatprep.subr.mxu0 0.0
    %1851 = vmatpush1.xpose.msra.mxu0 0.0
    %1852 = vmatprep.mubr.f32.mxu0 0.0
    %1853 = vmatmul.mubr.f32.gmra.mrb[0].mxu0 %v1783
    %v1854 = vpop.f32.mrb[0].mxu0
    %v1855 = vadd.f32 %v1562, %v1854
    %v1856 = vpop.f32.mrb[0].mxu0
    %1857 = vdwg.mxu0
    %v1858 = vmul.f32 %v1855, 0.17677669
    %v1859 = vsel %vm379, %v1858, -inf
    %1860 = vmax.xlane.f32.xlu0 %v1859
    %v1861 = vpop.xlane.xlu0 %1860
    %v1862 = vsub.f32 %v1858, %v1861
    %v1863 = vmul.f32 %v1862, 1.442695
    %v1864 = vpow.pop %v1863
    %v1865 = vsel %vm379, %v1864, 0.0
    %1866 = vadd.xlane.f32.xlu0 %v1865
    %v1867 = vpop.xlane.xlu0 %1866
    %v1868 = vrcp.pop %v1867
    %v1869 = vmul.f32 %v1864, %v1868
    %v1871 = vsel %vm379, %v1869, 0
    %1873 = vmatprep.subr.mxu0 0.0
    %1874 = vmatpush1.msra.mxu0 %v1633
    %1875 = vmatprep.subr.mxu0 0.0
    %1876 = vmatpush1.msra.mxu0 0.0
    %1877 = vmatprep.subr.mxu0 0.0
    %1878 = vmatpush1.msra.mxu0 0.0
    %1879 = vmatprep.subr.mxu0 0.0
    %1880 = vmatpush1.msra.mxu0 0.0
    %1881 = vmatprep.subr.mxu0 0.0
    %1882 = vmatpush1.msra.mxu0 0.0
    %1883 = vmatprep.subr.mxu0 0.0
    %1884 = vmatpush1.msra.mxu0 0.0
    %1885 = vmatprep.subr.mxu0 0.0
    %1886 = vmatpush1.msra.mxu0 0.0
    %1887 = vmatprep.subr.mxu0 0.0
    %1888 = vmatpush1.msra.mxu0 0.0
    %1889 = vmatprep.subr.mxu0 0.0
    %1890 = vmatpush1.msra.mxu0 0.0
    %1891 = vmatprep.subr.mxu0 0.0
    %1892 = vmatpush1.msra.mxu0 0.0
    %1893 = vmatprep.subr.mxu0 0.0
    %1894 = vmatpush1.msra.mxu0 0.0
    %1895 = vmatprep.subr.mxu0 0.0
    %1896 = vmatpush1.msra.mxu0 0.0
    %1897 = vmatprep.subr.mxu0 0.0
    %1898 = vmatpush1.msra.mxu0 0.0
    %1899 = vmatprep.subr.mxu0 0.0
    %1900 = vmatpush1.msra.mxu0 0.0
    %1901 = vmatprep.subr.mxu0 0.0
    %1902 = vmatpush1.msra.mxu0 0.0
    %1903 = vmatprep.subr.mxu0 0.0
    %1904 = vmatpush1.msra.mxu0 0.0
    %1905 = vmatprep.subr.mxu0 0.0
    %1906 = vmatpush1.msra.mxu0 0.0
    %1907 = vmatprep.subr.mxu0 0.0
    %1908 = vmatpush1.msra.mxu0 0.0
    %1909 = vmatprep.subr.mxu0 0.0
    %1910 = vmatpush1.msra.mxu0 0.0
    %1911 = vmatprep.subr.mxu0 0.0
    %1912 = vmatpush1.msra.mxu0 0.0
    %1913 = vmatprep.subr.mxu0 0.0
    %1914 = vmatpush1.msra.mxu0 0.0
    %1915 = vmatprep.subr.mxu0 0.0
    %1916 = vmatpush1.msra.mxu0 0.0
    %1917 = vmatprep.subr.mxu0 0.0
    %1918 = vmatpush1.msra.mxu0 0.0
    %1919 = vmatprep.subr.mxu0 0.0
    %1920 = vmatpush1.msra.mxu0 0.0
    %1921 = vmatprep.subr.mxu0 0.0
    %1922 = vmatpush1.msra.mxu0 0.0
    %1923 = vmatprep.subr.mxu0 0.0
    %1924 = vmatpush1.msra.mxu0 0.0
    %1925 = vmatprep.subr.mxu0 0.0
    %1926 = vmatpush1.msra.mxu0 0.0
    %1927 = vmatprep.subr.mxu0 0.0
    %1928 = vmatpush1.msra.mxu0 0.0
    %1929 = vmatprep.subr.mxu0 0.0
    %1930 = vmatpush1.msra.mxu0 0.0
    %1931 = vmatprep.subr.mxu0 0.0
    %1932 = vmatpush1.msra.mxu0 0.0
    %1933 = vmatprep.subr.mxu0 0.0
    %1934 = vmatpush1.msra.mxu0 0.0
    %1935 = vmatprep.subr.mxu0 0.0
    %1936 = vmatpush1.msra.mxu0 0.0
    %1937 = vmatprep.mubr.f32.mxu0 0.0
    %1938 = vmatmul.mubr.f32.gmra.mrb[0].mxu0 %v1871
    %v1939 = vpop.f32.mrb[0].mxu0
    %v1940 = vadd.f32 0.0, %v1939
    %v1941 = vpop.f32.mrb[0].mxu0
    %1942 = vdwg.mxu0
    %1943 = vrot.lane.b32.xlu0 %v1779, 120
    %v1944 = vpop.permute.xlu0 %1943
    %1945 = vrot.lane.b32.xlu0 %v1706, 120
    %v1946 = vpop.permute.xlu0 %1945
    %v1947 = vsel %vm379, %v1944, 0
    %v1949 = vsel %vm379, %v1946, 0
    %1951 = vmatprep.subr.mxu0 0.0
    %1952 = vmatpush1.xpose.msra.mxu0 %v1949
    %1953 = vmatprep.subr.mxu0 0.0
    %1954 = vmatpush1.xpose.msra.mxu0 0.0
    %1955 = vmatprep.subr.mxu0 0.0
    %1956 = vmatpush1.xpose.msra.mxu0 0.0
    %1957 = vmatprep.subr.mxu0 0.0
    %1958 = vmatpush1.xpose.msra.mxu0 0.0
    %1959 = vmatprep.subr.mxu0 0.0
    %1960 = vmatpush1.xpose.msra.mxu0 0.0
    %1961 = vmatprep.subr.mxu0 0.0
    %1962 = vmatpush1.xpose.msra.mxu0 0.0
    %1963 = vmatprep.subr.mxu0 0.0
    %1964 = vmatpush1.xpose.msra.mxu0 0.0
    %1965 = vmatprep.subr.mxu0 0.0
    %1966 = vmatpush1.xpose.msra.mxu0 0.0
    %1967 = vmatprep.subr.mxu0 0.0
    %1968 = vmatpush1.xpose.msra.mxu0 0.0
    %1969 = vmatprep.subr.mxu0 0.0
    %1970 = vmatpush1.xpose.msra.mxu0 0.0
    %1971 = vmatprep.subr.mxu0 0.0
    %1972 = vmatpush1.xpose.msra.mxu0 0.0
    %1973 = vmatprep.subr.mxu0 0.0
    %1974 = vmatpush1.xpose.msra.mxu0 0.0
    %1975 = vmatprep.subr.mxu0 0.0
    %1976 = vmatpush1.xpose.msra.mxu0 0.0
    %1977 = vmatprep.subr.mxu0 0.0
    %1978 = vmatpush1.xpose.msra.mxu0 0.0
    %1979 = vmatprep.subr.mxu0 0.0
    %1980 = vmatpush1.xpose.msra.mxu0 0.0
    %1981 = vmatprep.subr.mxu0 0.0
    %1982 = vmatpush1.xpose.msra.mxu0 0.0
    %1983 = vmatprep.subr.mxu0 0.0
    %1984 = vmatpush1.xpose.msra.mxu0 0.0
    %1985 = vmatprep.subr.mxu0 0.0
    %1986 = vmatpush1.xpose.msra.mxu0 0.0
    %1987 = vmatprep.subr.mxu0 0.0
    %1988 = vmatpush1.xpose.msra.mxu0 0.0
    %1989 = vmatprep.subr.mxu0 0.0
    %1990 = vmatpush1.xpose.msra.mxu0 0.0
    %1991 = vmatprep.subr.mxu0 0.0
    %1992 = vmatpush1.xpose.msra.mxu0 0.0
    %1993 = vmatprep.subr.mxu0 0.0
    %1994 = vmatpush1.xpose.msra.mxu0 0.0
    %1995 = vmatprep.subr.mxu0 0.0
    %1996 = vmatpush1.xpose.msra.mxu0 0.0
    %1997 = vmatprep.subr.mxu0 0.0
    %1998 = vmatpush1.xpose.msra.mxu0 0.0
    %1999 = vmatprep.subr.mxu0 0.0
    %2000 = vmatpush1.xpose.msra.mxu0 0.0
    %2001 = vmatprep.subr.mxu0 0.0
    %2002 = vmatpush1.xpose.msra.mxu0 0.0
    %2003 = vmatprep.subr.mxu0 0.0
    %2004 = vmatpush1.xpose.msra.mxu0 0.0
    %2005 = vmatprep.subr.mxu0 0.0
    %2006 = vmatpush1.xpose.msra.mxu0 0.0
    %2007 = vmatprep.subr.mxu0 0.0
    %2008 = vmatpush1.xpose.msra.mxu0 0.0
    %2009 = vmatprep.subr.mxu0 0.0
    %2010 = vmatpush1.xpose.msra.mxu0 0.0
    %2011 = vmatprep.subr.mxu0 0.0
    %2012 = vmatpush1.xpose.msra.mxu0 0.0
    %2013 = vmatprep.subr.mxu0 0.0
    %2014 = vmatpush1.xpose.msra.mxu0 0.0
    %2015 = vmatprep.mubr.f32.mxu0 0.0
    %2016 = vmatmul.mubr.f32.gmra.mrb[0].mxu0 %v1947
    %v2017 = vpop.f32.mrb[0].mxu0
    %v2018 = vadd.f32 %v1562, %v2017
    %v2019 = vpop.f32.mrb[0].mxu0
    %2020 = vdwg.mxu0
    %v2021 = vmul.f32 %v2018, 0.17677669
    %v2022 = vsel %vm379, %v2021, -inf
    %2023 = vmax.xlane.f32.xlu0 %v2022
    %v2024 = vpop.xlane.xlu0 %2023
    %v2025 = vsub.f32 %v2021, %v2024
    %v2026 = vmul.f32 %v2025, 1.442695
    %v2027 = vpow.pop %v2026
    %v2028 = vsel %vm379, %v2027, 0.0
    %2029 = vadd.xlane.f32.xlu0 %v2028
    %v2030 = vpop.xlane.xlu0 %2029
    %v2031 = vrcp.pop %v2030
    %v2032 = vmul.f32 %v2027, %v2031
    %2034 = vrot.lane.b32.xlu0 %v1633, 120
    %v2035 = vpop.permute.xlu0 %2034
    %v2038 = vsel %vm379, %v2032, 0
    %2040 = vmatprep.subr.mxu0 0.0
    %2041 = vmatpush1.msra.mxu0 %v2035
    %2042 = vmatprep.subr.mxu0 0.0
    %2043 = vmatpush1.msra.mxu0 0.0
    %2044 = vmatprep.subr.mxu0 0.0
    %2045 = vmatpush1.msra.mxu0 0.0
    %2046 = vmatprep.subr.mxu0 0.0
    %2047 = vmatpush1.msra.mxu0 0.0
    %2048 = vmatprep.subr.mxu0 0.0
    %2049 = vmatpush1.msra.mxu0 0.0
    %2050 = vmatprep.subr.mxu0 0.0
    %2051 = vmatpush1.msra.mxu0 0.0
    %2052 = vmatprep.subr.mxu0 0.0
    %2053 = vmatpush1.msra.mxu0 0.0
    %2054 = vmatprep.subr.mxu0 0.0
    %2055 = vmatpush1.msra.mxu0 0.0
    %2056 = vmatprep.subr.mxu0 0.0
    %2057 = vmatpush1.msra.mxu0 0.0
    %2058 = vmatprep.subr.mxu0 0.0
    %2059 = vmatpush1.msra.mxu0 0.0
    %2060 = vmatprep.subr.mxu0 0.0
    %2061 = vmatpush1.msra.mxu0 0.0
    %2062 = vmatprep.subr.mxu0 0.0
    %2063 = vmatpush1.msra.mxu0 0.0
    %2064 = vmatprep.subr.mxu0 0.0
    %2065 = vmatpush1.msra.mxu0 0.0
    %2066 = vmatprep.subr.mxu0 0.0
    %2067 = vmatpush1.msra.mxu0 0.0
    %2068 = vmatprep.subr.mxu0 0.0
    %2069 = vmatpush1.msra.mxu0 0.0
    %2070 = vmatprep.subr.mxu0 0.0
    %2071 = vmatpush1.msra.mxu0 0.0
    %2072 = vmatprep.subr.mxu0 0.0
    %2073 = vmatpush1.msra.mxu0 0.0
    %2074 = vmatprep.subr.mxu0 0.0
    %2075 = vmatpush1.msra.mxu0 0.0
    %2076 = vmatprep.subr.mxu0 0.0
    %2077 = vmatpush1.msra.mxu0 0.0
    %2078 = vmatprep.subr.mxu0 0.0
    %2079 = vmatpush1.msra.mxu0 0.0
    %2080 = vmatprep.subr.mxu0 0.0
    %2081 = vmatpush1.msra.mxu0 0.0
    %2082 = vmatprep.subr.mxu0 0.0
    %2083 = vmatpush1.msra.mxu0 0.0
    %2084 = vmatprep.subr.mxu0 0.0
    %2085 = vmatpush1.msra.mxu0 0.0
    %2086 = vmatprep.subr.mxu0 0.0
    %2087 = vmatpush1.msra.mxu0 0.0
    %2088 = vmatprep.subr.mxu0 0.0
    %2089 = vmatpush1.msra.mxu0 0.0
    %2090 = vmatprep.subr.mxu0 0.0
    %2091 = vmatpush1.msra.mxu0 0.0
    %2092 = vmatprep.subr.mxu0 0.0
    %2093 = vmatpush1.msra.mxu0 0.0
    %2094 = vmatprep.subr.mxu0 0.0
    %2095 = vmatpush1.msra.mxu0 0.0
    %2096 = vmatprep.subr.mxu0 0.0
    %2097 = vmatpush1.msra.mxu0 0.0
    %2098 = vmatprep.subr.mxu0 0.0
    %2099 = vmatpush1.msra.mxu0 0.0
    %2100 = vmatprep.subr.mxu0 0.0
    %2101 = vmatpush1.msra.mxu0 0.0
    %2102 = vmatprep.subr.mxu0 0.0
    %2103 = vmatpush1.msra.mxu0 0.0
    %2104 = vmatprep.mubr.f32.mxu0 0.0
    %2105 = vmatmul.mubr.f32.gmra.mrb[0].mxu0 %v2038
    %v2106 = vpop.f32.mrb[0].mxu0
    %v2107 = vadd.f32 0.0, %v2106
    %v2108 = vpop.f32.mrb[0].mxu0
    %2109 = vdwg.mxu0
    %v2111 = vsel %vm379, %v2107, 0
    %2113 = vmatprep.subr.mxu0 0.0
    %2114 = vmatpush1.msra.mxu0 %v125
    %2115 = vmatprep.subr.mxu0 0.0
    %2116 = vmatpush1.msra.mxu0 0.0
    %2117 = vmatprep.subr.mxu0 0.0
    %2118 = vmatpush1.msra.mxu0 0.0
    %2119 = vmatprep.subr.mxu0 0.0
    %2120 = vmatpush1.msra.mxu0 0.0
    %2121 = vmatprep.subr.mxu0 0.0
    %2122 = vmatpush1.msra.mxu0 0.0
    %2123 = vmatprep.subr.mxu0 0.0
    %2124 = vmatpush1.msra.mxu0 0.0
    %2125 = vmatprep.subr.mxu0 0.0
    %2126 = vmatpush1.msra.mxu0 0.0
    %2127 = vmatprep.subr.mxu0 0.0
    %2128 = vmatpush1.msra.mxu0 0.0
    %2129 = vmatprep.subr.mxu0 0.0
    %2130 = vmatpush1.msra.mxu0 0.0
    %2131 = vmatprep.subr.mxu0 0.0
    %2132 = vmatpush1.msra.mxu0 0.0
    %2133 = vmatprep.subr.mxu0 0.0
    %2134 = vmatpush1.msra.mxu0 0.0
    %2135 = vmatprep.subr.mxu0 0.0
    %2136 = vmatpush1.msra.mxu0 0.0
    %2137 = vmatprep.subr.mxu0 0.0
    %2138 = vmatpush1.msra.mxu0 0.0
    %2139 = vmatprep.subr.mxu0 0.0
    %2140 = vmatpush1.msra.mxu0 0.0
    %2141 = vmatprep.subr.mxu0 0.0
    %2142 = vmatpush1.msra.mxu0 0.0
    %2143 = vmatprep.subr.mxu0 0.0
    %2144 = vmatpush1.msra.mxu0 0.0
    %2145 = vmatprep.subr.mxu0 0.0
    %2146 = vmatpush1.msra.mxu0 0.0
    %2147 = vmatprep.subr.mxu0 0.0
    %2148 = vmatpush1.msra.mxu0 0.0
    %2149 = vmatprep.subr.mxu0 0.0
    %2150 = vmatpush1.msra.mxu0 0.0
    %2151 = vmatprep.subr.mxu0 0.0
    %2152 = vmatpush1.msra.mxu0 0.0
    %2153 = vmatprep.subr.mxu0 0.0
    %2154 = vmatpush1.msra.mxu0 0.0
    %2155 = vmatprep.subr.mxu0 0.0
    %2156 = vmatpush1.msra.mxu0 0.0
    %2157 = vmatprep.subr.mxu0 0.0
    %2158 = vmatpush1.msra.mxu0 0.0
    %2159 = vmatprep.subr.mxu0 0.0
    %2160 = vmatpush1.msra.mxu0 0.0
    %2161 = vmatprep.subr.mxu0 0.0
    %2162 = vmatpush1.msra.mxu0 0.0
    %2163 = vmatprep.subr.mxu0 0.0
    %2164 = vmatpush1.msra.mxu0 0.0
    %2165 = vmatprep.subr.mxu0 0.0
    %2166 = vmatpush1.msra.mxu0 0.0
    %2167 = vmatprep.subr.mxu0 0.0
    %2168 = vmatpush1.msra.mxu0 0.0
    %2169 = vmatprep.subr.mxu0 0.0
    %2170 = vmatpush1.msra.mxu0 0.0
    %2171 = vmatprep.subr.mxu0 0.0
    %2172 = vmatpush1.msra.mxu0 0.0
    %2173 = vmatprep.subr.mxu0 0.0
    %2174 = vmatpush1.msra.mxu0 0.0
    %2175 = vmatprep.subr.mxu0 0.0
    %2176 = vmatpush1.msra.mxu0 0.0
    %2177 = vmatprep.mubr.f32.mxu0 0.0
    %2178 = vmatmul.mubr.f32.gmra.mrb[0].mxu0 %v2111
    %v2179 = vpop.f32.mrb[0].mxu0
    %v2180 = vadd.f32 0.0, %v2179
    %v2181 = vpop.f32.mrb[0].mxu0
    %2182 = vdwg.mxu0
    %v2184 = vsel %vm379, %v1940, 0
    %2186 = vmatprep.subr.mxu0 0.0
    %2187 = vmatpush1.msra.mxu0 %v124
    %2188 = vmatprep.subr.mxu0 0.0
    %2189 = vmatpush1.msra.mxu0 0.0
    %2190 = vmatprep.subr.mxu0 0.0
    %2191 = vmatpush1.msra.mxu0 0.0
    %2192 = vmatprep.subr.mxu0 0.0
    %2193 = vmatpush1.msra.mxu0 0.0
    %2194 = vmatprep.subr.mxu0 0.0
    %2195 = vmatpush1.msra.mxu0 0.0
    %2196 = vmatprep.subr.mxu0 0.0
    %2197 = vmatpush1.msra.mxu0 0.0
    %2198 = vmatprep.subr.mxu0 0.0
    %2199 = vmatpush1.msra.mxu0 0.0
    %2200 = vmatprep.subr.mxu0 0.0
    %2201 = vmatpush1.msra.mxu0 0.0
    %2202 = vmatprep.subr.mxu0 0.0
    %2203 = vmatpush1.msra.mxu0 0.0
    %2204 = vmatprep.subr.mxu0 0.0
    %2205 = vmatpush1.msra.mxu0 0.0
    %2206 = vmatprep.subr.mxu0 0.0
    %2207 = vmatpush1.msra.mxu0 0.0
    %2208 = vmatprep.subr.mxu0 0.0
    %2209 = vmatpush1.msra.mxu0 0.0
    %2210 = vmatprep.subr.mxu0 0.0
    %2211 = vmatpush1.msra.mxu0 0.0
    %2212 = vmatprep.subr.mxu0 0.0
    %2213 = vmatpush1.msra.mxu0 0.0
    %2214 = vmatprep.subr.mxu0 0.0
    %2215 = vmatpush1.msra.mxu0 0.0
    %2216 = vmatprep.subr.mxu0 0.0
    %2217 = vmatpush1.msra.mxu0 0.0
    %2218 = vmatprep.subr.mxu0 0.0
    %2219 = vmatpush1.msra.mxu0 0.0
    %2220 = vmatprep.subr.mxu0 0.0
    %2221 = vmatpush1.msra.mxu0 0.0
    %2222 = vmatprep.subr.mxu0 0.0
    %2223 = vmatpush1.msra.mxu0 0.0
    %2224 = vmatprep.subr.mxu0 0.0
    %2225 = vmatpush1.msra.mxu0 0.0
    %2226 = vmatprep.subr.mxu0 0.0
    %2227 = vmatpush1.msra.mxu0 0.0
    %2228 = vmatprep.subr.mxu0 0.0
    %2229 = vmatpush1.msra.mxu0 0.0
    %2230 = vmatprep.subr.mxu0 0.0
    %2231 = vmatpush1.msra.mxu0 0.0
    %2232 = vmatprep.subr.mxu0 0.0
    %2233 = vmatpush1.msra.mxu0 0.0
    %2234 = vmatprep.subr.mxu0 0.0
    %2235 = vmatpush1.msra.mxu0 0.0
    %2236 = vmatprep.subr.mxu0 0.0
    %2237 = vmatpush1.msra.mxu0 0.0
    %2238 = vmatprep.subr.mxu0 0.0
    %2239 = vmatpush1.msra.mxu0 0.0
    %2240 = vmatprep.subr.mxu0 0.0
    %2241 = vmatpush1.msra.mxu0 0.0
    %2242 = vmatprep.subr.mxu0 0.0
    %2243 = vmatpush1.msra.mxu0 0.0
    %2244 = vmatprep.subr.mxu0 0.0
    %2245 = vmatpush1.msra.mxu0 0.0
    %2246 = vmatprep.subr.mxu0 0.0
    %2247 = vmatpush1.msra.mxu0 0.0
    %2248 = vmatprep.subr.mxu0 0.0
    %2249 = vmatpush1.msra.mxu0 0.0
    %2250 = vmatprep.mubr.f32.mxu0 0.0
    %2251 = vmatmul.mubr.f32.gmra.mrb[0].mxu0 %v2184
    %v2252 = vpop.f32.mrb[0].mxu0
    %v2253 = vadd.f32 %v2180, %v2252
    %v2254 = vpop.f32.mrb[0].mxu0
    %2255 = vdwg.mxu0
    %2256 = vrot.lane.b32.xlu0 %v1779, 112
    %v2257 = vpop.permute.xlu0 %2256
    %2258 = vrot.lane.b32.xlu0 %v1706, 112
    %v2259 = vpop.permute.xlu0 %2258
    %v2260 = vsel %vm379, %v2257, 0
    %v2262 = vsel %vm379, %v2259, 0
    %2264 = vmatprep.subr.mxu0 0.0
    %2265 = vmatpush1.xpose.msra.mxu0 %v2262
    %2266 = vmatprep.subr.mxu0 0.0
    %2267 = vmatpush1.xpose.msra.mxu0 0.0
    %2268 = vmatprep.subr.mxu0 0.0
    %2269 = vmatpush1.xpose.msra.mxu0 0.0
    %2270 = vmatprep.subr.mxu0 0.0
    %2271 = vmatpush1.xpose.msra.mxu0 0.0
    %2272 = vmatprep.subr.mxu0 0.0
    %2273 = vmatpush1.xpose.msra.mxu0 0.0
    %2274 = vmatprep.subr.mxu0 0.0
    %2275 = vmatpush1.xpose.msra.mxu0 0.0
    %2276 = vmatprep.subr.mxu0 0.0
    %2277 = vmatpush1.xpose.msra.mxu0 0.0
    %2278 = vmatprep.subr.mxu0 0.0
    %2279 = vmatpush1.xpose.msra.mxu0 0.0
    %2280 = vmatprep.subr.mxu0 0.0
    %2281 = vmatpush1.xpose.msra.mxu0 0.0
    %2282 = vmatprep.subr.mxu0 0.0
    %2283 = vmatpush1.xpose.msra.mxu0 0.0
    %2284 = vmatprep.subr.mxu0 0.0
    %2285 = vmatpush1.xpose.msra.mxu0 0.0
    %2286 = vmatprep.subr.mxu0 0.0
    %2287 = vmatpush1.xpose.msra.mxu0 0.0
    %2288 = vmatprep.subr.mxu0 0.0
    %2289 = vmatpush1.xpose.msra.mxu0 0.0
    %2290 = vmatprep.subr.mxu0 0.0
    %2291 = vmatpush1.xpose.msra.mxu0 0.0
    %2292 = vmatprep.subr.mxu0 0.0
    %2293 = vmatpush1.xpose.msra.mxu0 0.0
    %2294 = vmatprep.subr.mxu0 0.0
    %2295 = vmatpush1.xpose.msra.mxu0 0.0
    %2296 = vmatprep.subr.mxu0 0.0
    %2297 = vmatpush1.xpose.msra.mxu0 0.0
    %2298 = vmatprep.subr.mxu0 0.0
    %2299 = vmatpush1.xpose.msra.mxu0 0.0
    %2300 = vmatprep.subr.mxu0 0.0
    %2301 = vmatpush1.xpose.msra.mxu0 0.0
    %2302 = vmatprep.subr.mxu0 0.0
    %2303 = vmatpush1.xpose.msra.mxu0 0.0
    %2304 = vmatprep.subr.mxu0 0.0
    %2305 = vmatpush1.xpose.msra.mxu0 0.0
    %2306 = vmatprep.subr.mxu0 0.0
    %2307 = vmatpush1.xpose.msra.mxu0 0.0
    %2308 = vmatprep.subr.mxu0 0.0
    %2309 = vmatpush1.xpose.msra.mxu0 0.0
    %2310 = vmatprep.subr.mxu0 0.0
    %2311 = vmatpush1.xpose.msra.mxu0 0.0
    %2312 = vmatprep.subr.mxu0 0.0
    %2313 = vmatpush1.xpose.msra.mxu0 0.0
    %2314 = vmatprep.subr.mxu0 0.0
    %2315 = vmatpush1.xpose.msra.mxu0 0.0
    %2316 = vmatprep.subr.mxu0 0.0
    %2317 = vmatpush1.xpose.msra.mxu0 0.0
    %2318 = vmatprep.subr.mxu0 0.0
    %2319 = vmatpush1.xpose.msra.mxu0 0.0
    %2320 = vmatprep.subr.mxu0 0.0
    %2321 = vmatpush1.xpose.msra.mxu0 0.0
    %2322 = vmatprep.subr.mxu0 0.0
    %2323 = vmatpush1.xpose.msra.mxu0 0.0
    %2324 = vmatprep.subr.mxu0 0.0
    %2325 = vmatpush1.xpose.msra.mxu0 0.0
    %2326 = vmatprep.subr.mxu0 0.0
    %2327 = vmatpush1.xpose.msra.mxu0 0.0
    %2328 = vmatprep.mubr.f32.mxu0 0.0
    %2329 = vmatmul.mubr.f32.gmra.mrb[0].mxu0 %v2260
    %v2330 = vpop.f32.mrb[0].mxu0
    %v2331 = vadd.f32 %v1562, %v2330
    %v2332 = vpop.f32.mrb[0].mxu0
    %2333 = vdwg.mxu0
    %v2334 = vmul.f32 %v2331, 0.17677669
    %v2335 = vsel %vm379, %v2334, -inf
    %2336 = vmax.xlane.f32.xlu0 %v2335
    %v2337 = vpop.xlane.xlu0 %2336
    %v2338 = vsub.f32 %v2334, %v2337
    %v2339 = vmul.f32 %v2338, 1.442695
    %v2340 = vpow.pop %v2339
    %v2341 = vsel %vm379, %v2340, 0.0
    %2342 = vadd.xlane.f32.xlu0 %v2341
    %v2343 = vpop.xlane.xlu0 %2342
    %v2344 = vrcp.pop %v2343
    %v2345 = vmul.f32 %v2340, %v2344
    %2346 = vrot.lane.b32.xlu0 %v1633, 112
    %v2347 = vpop.permute.xlu0 %2346
    %v2350 = vsel %vm379, %v2345, 0
    %2352 = vmatprep.subr.mxu0 0.0
    %2353 = vmatpush1.msra.mxu0 %v2347
    %2354 = vmatprep.subr.mxu0 0.0
    %2355 = vmatpush1.msra.mxu0 0.0
    %2356 = vmatprep.subr.mxu0 0.0
    %2357 = vmatpush1.msra.mxu0 0.0
    %2358 = vmatprep.subr.mxu0 0.0
    %2359 = vmatpush1.msra.mxu0 0.0
    %2360 = vmatprep.subr.mxu0 0.0
    %2361 = vmatpush1.msra.mxu0 0.0
    %2362 = vmatprep.subr.mxu0 0.0
    %2363 = vmatpush1.msra.mxu0 0.0
    %2364 = vmatprep.subr.mxu0 0.0
    %2365 = vmatpush1.msra.mxu0 0.0
    %2366 = vmatprep.subr.mxu0 0.0
    %2367 = vmatpush1.msra.mxu0 0.0
    %2368 = vmatprep.subr.mxu0 0.0
    %2369 = vmatpush1.msra.mxu0 0.0
    %2370 = vmatprep.subr.mxu0 0.0
    %2371 = vmatpush1.msra.mxu0 0.0
    %2372 = vmatprep.subr.mxu0 0.0
    %2373 = vmatpush1.msra.mxu0 0.0
    %2374 = vmatprep.subr.mxu0 0.0
    %2375 = vmatpush1.msra.mxu0 0.0
    %2376 = vmatprep.subr.mxu0 0.0
    %2377 = vmatpush1.msra.mxu0 0.0
    %2378 = vmatprep.subr.mxu0 0.0
    %2379 = vmatpush1.msra.mxu0 0.0
    %2380 = vmatprep.subr.mxu0 0.0
    %2381 = vmatpush1.msra.mxu0 0.0
    %2382 = vmatprep.subr.mxu0 0.0
    %2383 = vmatpush1.msra.mxu0 0.0
    %2384 = vmatprep.subr.mxu0 0.0
    %2385 = vmatpush1.msra.mxu0 0.0
    %2386 = vmatprep.subr.mxu0 0.0
    %2387 = vmatpush1.msra.mxu0 0.0
    %2388 = vmatprep.subr.mxu0 0.0
    %2389 = vmatpush1.msra.mxu0 0.0
    %2390 = vmatprep.subr.mxu0 0.0
    %2391 = vmatpush1.msra.mxu0 0.0
    %2392 = vmatprep.subr.mxu0 0.0
    %2393 = vmatpush1.msra.mxu0 0.0
    %2394 = vmatprep.subr.mxu0 0.0
    %2395 = vmatpush1.msra.mxu0 0.0
    %2396 = vmatprep.subr.mxu0 0.0
    %2397 = vmatpush1.msra.mxu0 0.0
    %2398 = vmatprep.subr.mxu0 0.0
    %2399 = vmatpush1.msra.mxu0 0.0
    %2400 = vmatprep.subr.mxu0 0.0
    %2401 = vmatpush1.msra.mxu0 0.0
    %2402 = vmatprep.subr.mxu0 0.0
    %2403 = vmatpush1.msra.mxu0 0.0
    %2404 = vmatprep.subr.mxu0 0.0
    %2405 = vmatpush1.msra.mxu0 0.0
    %2406 = vmatprep.subr.mxu0 0.0
    %2407 = vmatpush1.msra.mxu0 0.0
    %2408 = vmatprep.subr.mxu0 0.0
    %2409 = vmatpush1.msra.mxu0 0.0
    %2410 = vmatprep.subr.mxu0 0.0
    %2411 = vmatpush1.msra.mxu0 0.0
    %2412 = vmatprep.subr.mxu0 0.0
    %2413 = vmatpush1.msra.mxu0 0.0
    %2414 = vmatprep.subr.mxu0 0.0
    %2415 = vmatpush1.msra.mxu0 0.0
    %2416 = vmatprep.mubr.f32.mxu0 0.0
    %2417 = vmatmul.mubr.f32.gmra.mrb[0].mxu0 %v2350
    %v2418 = vpop.f32.mrb[0].mxu0
    %v2419 = vadd.f32 0.0, %v2418
    %v2420 = vpop.f32.mrb[0].mxu0
    %2421 = vdwg.mxu0
    %v2423 = vsel %vm379, %v2419, 0
    %2425 = vmatprep.subr.mxu0 0.0
    %2426 = vmatpush1.msra.mxu0 %v126
    %2427 = vmatprep.subr.mxu0 0.0
    %2428 = vmatpush1.msra.mxu0 0.0
    %2429 = vmatprep.subr.mxu0 0.0
    %2430 = vmatpush1.msra.mxu0 0.0
    %2431 = vmatprep.subr.mxu0 0.0
    %2432 = vmatpush1.msra.mxu0 0.0
    %2433 = vmatprep.subr.mxu0 0.0
    %2434 = vmatpush1.msra.mxu0 0.0
    %2435 = vmatprep.subr.mxu0 0.0
    %2436 = vmatpush1.msra.mxu0 0.0
    %2437 = vmatprep.subr.mxu0 0.0
    %2438 = vmatpush1.msra.mxu0 0.0
    %2439 = vmatprep.subr.mxu0 0.0
    %2440 = vmatpush1.msra.mxu0 0.0
    %2441 = vmatprep.subr.mxu0 0.0
    %2442 = vmatpush1.msra.mxu0 0.0
    %2443 = vmatprep.subr.mxu0 0.0
    %2444 = vmatpush1.msra.mxu0 0.0
    %2445 = vmatprep.subr.mxu0 0.0
    %2446 = vmatpush1.msra.mxu0 0.0
    %2447 = vmatprep.subr.mxu0 0.0
    %2448 = vmatpush1.msra.mxu0 0.0
    %2449 = vmatprep.subr.mxu0 0.0
    %2450 = vmatpush1.msra.mxu0 0.0
    %2451 = vmatprep.subr.mxu0 0.0
    %2452 = vmatpush1.msra.mxu0 0.0
    %2453 = vmatprep.subr.mxu0 0.0
    %2454 = vmatpush1.msra.mxu0 0.0
    %2455 = vmatprep.subr.mxu0 0.0
    %2456 = vmatpush1.msra.mxu0 0.0
    %2457 = vmatprep.subr.mxu0 0.0
    %2458 = vmatpush1.msra.mxu0 0.0
    %2459 = vmatprep.subr.mxu0 0.0
    %2460 = vmatpush1.msra.mxu0 0.0
    %2461 = vmatprep.subr.mxu0 0.0
    %2462 = vmatpush1.msra.mxu0 0.0
    %2463 = vmatprep.subr.mxu0 0.0
    %2464 = vmatpush1.msra.mxu0 0.0
    %2465 = vmatprep.subr.mxu0 0.0
    %2466 = vmatpush1.msra.mxu0 0.0
    %2467 = vmatprep.subr.mxu0 0.0
    %2468 = vmatpush1.msra.mxu0 0.0
    %2469 = vmatprep.subr.mxu0 0.0
    %2470 = vmatpush1.msra.mxu0 0.0
    %2471 = vmatprep.subr.mxu0 0.0
    %2472 = vmatpush1.msra.mxu0 0.0
    %2473 = vmatprep.subr.mxu0 0.0
    %2474 = vmatpush1.msra.mxu0 0.0
    %2475 = vmatprep.subr.mxu0 0.0
    %2476 = vmatpush1.msra.mxu0 0.0
    %2477 = vmatprep.subr.mxu0 0.0
    %2478 = vmatpush1.msra.mxu0 0.0
    %2479 = vmatprep.subr.mxu0 0.0
    %2480 = vmatpush1.msra.mxu0 0.0
    %2481 = vmatprep.subr.mxu0 0.0
    %2482 = vmatpush1.msra.mxu0 0.0
    %2483 = vmatprep.subr.mxu0 0.0
    %2484 = vmatpush1.msra.mxu0 0.0
    %2485 = vmatprep.subr.mxu0 0.0
    %2486 = vmatpush1.msra.mxu0 0.0
    %2487 = vmatprep.subr.mxu0 0.0
    %2488 = vmatpush1.msra.mxu0 0.0
    %2489 = vmatprep.mubr.f32.mxu0 0.0
    %2490 = vmatmul.mubr.f32.gmra.mrb[0].mxu0 %v2423
    %v2491 = vpop.f32.mrb[0].mxu0
    %v2492 = vadd.f32 0.0, %v2491
    %v2493 = vpop.f32.mrb[0].mxu0
    %2494 = vdwg.mxu0
    %v2495 = vadd.f32 %v2253, %v2492
    %2496 = vrot.lane.b32.xlu0 %v1779, 104
    %v2497 = vpop.permute.xlu0 %2496
    %2498 = vrot.lane.b32.xlu0 %v1706, 104
    %v2499 = vpop.permute.xlu0 %2498
    %v2500 = vsel %vm379, %v2497, 0
    %v2502 = vsel %vm379, %v2499, 0
    %2504 = vmatprep.subr.mxu0 0.0
    %2505 = vmatpush1.xpose.msra.mxu0 %v2502
    %2506 = vmatprep.subr.mxu0 0.0
    %2507 = vmatpush1.xpose.msra.mxu0 0.0
    %2508 = vmatprep.subr.mxu0 0.0
    %2509 = vmatpush1.xpose.msra.mxu0 0.0
    %2510 = vmatprep.subr.mxu0 0.0
    %2511 = vmatpush1.xpose.msra.mxu0 0.0
    %2512 = vmatprep.subr.mxu0 0.0
    %2513 = vmatpush1.xpose.msra.mxu0 0.0
    %2514 = vmatprep.subr.mxu0 0.0
    %2515 = vmatpush1.xpose.msra.mxu0 0.0
    %2516 = vmatprep.subr.mxu0 0.0
    %2517 = vmatpush1.xpose.msra.mxu0 0.0
    %2518 = vmatprep.subr.mxu0 0.0
    %2519 = vmatpush1.xpose.msra.mxu0 0.0
    %2520 = vmatprep.subr.mxu0 0.0
    %2521 = vmatpush1.xpose.msra.mxu0 0.0
    %2522 = vmatprep.subr.mxu0 0.0
    %2523 = vmatpush1.xpose.msra.mxu0 0.0
    %2524 = vmatprep.subr.mxu0 0.0
    %2525 = vmatpush1.xpose.msra.mxu0 0.0
    %2526 = vmatprep.subr.mxu0 0.0
    %2527 = vmatpush1.xpose.msra.mxu0 0.0
    %2528 = vmatprep.subr.mxu0 0.0
    %2529 = vmatpush1.xpose.msra.mxu0 0.0
    %2530 = vmatprep.subr.mxu0 0.0
    %2531 = vmatpush1.xpose.msra.mxu0 0.0
    %2532 = vmatprep.subr.mxu0 0.0
    %2533 = vmatpush1.xpose.msra.mxu0 0.0
    %2534 = vmatprep.subr.mxu0 0.0
    %2535 = vmatpush1.xpose.msra.mxu0 0.0
    %2536 = vmatprep.subr.mxu0 0.0
    %2537 = vmatpush1.xpose.msra.mxu0 0.0
    %2538 = vmatprep.subr.mxu0 0.0
    %2539 = vmatpush1.xpose.msra.mxu0 0.0
    %2540 = vmatprep.subr.mxu0 0.0
    %2541 = vmatpush1.xpose.msra.mxu0 0.0
    %2542 = vmatprep.subr.mxu0 0.0
    %2543 = vmatpush1.xpose.msra.mxu0 0.0
    %2544 = vmatprep.subr.mxu0 0.0
    %2545 = vmatpush1.xpose.msra.mxu0 0.0
    %2546 = vmatprep.subr.mxu0 0.0
    %2547 = vmatpush1.xpose.msra.mxu0 0.0
    %2548 = vmatprep.subr.mxu0 0.0
    %2549 = vmatpush1.xpose.msra.mxu0 0.0
    %2550 = vmatprep.subr.mxu0 0.0
    %2551 = vmatpush1.xpose.msra.mxu0 0.0
    %2552 = vmatprep.subr.mxu0 0.0
    %2553 = vmatpush1.xpose.msra.mxu0 0.0
    %2554 = vmatprep.subr.mxu0 0.0
    %2555 = vmatpush1.xpose.msra.mxu0 0.0
    %2556 = vmatprep.subr.mxu0 0.0
    %2557 = vmatpush1.xpose.msra.mxu0 0.0
    %2558 = vmatprep.subr.mxu0 0.0
    %2559 = vmatpush1.xpose.msra.mxu0 0.0
    %2560 = vmatprep.subr.mxu0 0.0
    %2561 = vmatpush1.xpose.msra.mxu0 0.0
    %2562 = vmatprep.subr.mxu0 0.0
    %2563 = vmatpush1.xpose.msra.mxu0 0.0
    %2564 = vmatprep.subr.mxu0 0.0
    %2565 = vmatpush1.xpose.msra.mxu0 0.0
    %2566 = vmatprep.subr.mxu0 0.0
    %2567 = vmatpush1.xpose.msra.mxu0 0.0
    %2568 = vmatprep.mubr.f32.mxu0 0.0
    %2569 = vmatmul.mubr.f32.gmra.mrb[0].mxu0 %v2500
    %v2570 = vpop.f32.mrb[0].mxu0
    %v2571 = vadd.f32 %v1562, %v2570
    %v2572 = vpop.f32.mrb[0].mxu0
    %2573 = vdwg.mxu0
    %v2574 = vmul.f32 %v2571, 0.17677669
    %v2575 = vsel %vm379, %v2574, -inf
    %2576 = vmax.xlane.f32.xlu0 %v2575
    %v2577 = vpop.xlane.xlu0 %2576
    %v2578 = vsub.f32 %v2574, %v2577
    %v2579 = vmul.f32 %v2578, 1.442695
    %v2580 = vpow.pop %v2579
    %v2581 = vsel %vm379, %v2580, 0.0
    %2582 = vadd.xlane.f32.xlu0 %v2581
    %v2583 = vpop.xlane.xlu0 %2582
    %v2584 = vrcp.pop %v2583
    %v2585 = vmul.f32 %v2580, %v2584
    %2586 = vrot.lane.b32.xlu0 %v1633, 104
    %v2587 = vpop.permute.xlu0 %2586
    %v2590 = vsel %vm379, %v2585, 0
    %2592 = vmatprep.subr.mxu0 0.0
    %2593 = vmatpush1.msra.mxu0 %v2587
    %2594 = vmatprep.subr.mxu0 0.0
    %2595 = vmatpush1.msra.mxu0 0.0
    %2596 = vmatprep.subr.mxu0 0.0
    %2597 = vmatpush1.msra.mxu0 0.0
    %2598 = vmatprep.subr.mxu0 0.0
    %2599 = vmatpush1.msra.mxu0 0.0
    %2600 = vmatprep.subr.mxu0 0.0
    %2601 = vmatpush1.msra.mxu0 0.0
    %2602 = vmatprep.subr.mxu0 0.0
    %2603 = vmatpush1.msra.mxu0 0.0
    %2604 = vmatprep.subr.mxu0 0.0
    %2605 = vmatpush1.msra.mxu0 0.0
    %2606 = vmatprep.subr.mxu0 0.0
    %2607 = vmatpush1.msra.mxu0 0.0
    %2608 = vmatprep.subr.mxu0 0.0
    %2609 = vmatpush1.msra.mxu0 0.0
    %2610 = vmatprep.subr.mxu0 0.0
    %2611 = vmatpush1.msra.mxu0 0.0
    %2612 = vmatprep.subr.mxu0 0.0
    %2613 = vmatpush1.msra.mxu0 0.0
    %2614 = vmatprep.subr.mxu0 0.0
    %2615 = vmatpush1.msra.mxu0 0.0
    %2616 = vmatprep.subr.mxu0 0.0
    %2617 = vmatpush1.msra.mxu0 0.0
    %2618 = vmatprep.subr.mxu0 0.0
    %2619 = vmatpush1.msra.mxu0 0.0
    %2620 = vmatprep.subr.mxu0 0.0
    %2621 = vmatpush1.msra.mxu0 0.0
    %2622 = vmatprep.subr.mxu0 0.0
    %2623 = vmatpush1.msra.mxu0 0.0
    %2624 = vmatprep.subr.mxu0 0.0
    %2625 = vmatpush1.msra.mxu0 0.0
    %2626 = vmatprep.subr.mxu0 0.0
    %2627 = vmatpush1.msra.mxu0 0.0
    %2628 = vmatprep.subr.mxu0 0.0
    %2629 = vmatpush1.msra.mxu0 0.0
    %2630 = vmatprep.subr.mxu0 0.0
    %2631 = vmatpush1.msra.mxu0 0.0
    %2632 = vmatprep.subr.mxu0 0.0
    %2633 = vmatpush1.msra.mxu0 0.0
    %2634 = vmatprep.subr.mxu0 0.0
    %2635 = vmatpush1.msra.mxu0 0.0
    %2636 = vmatprep.subr.mxu0 0.0
    %2637 = vmatpush1.msra.mxu0 0.0
    %2638 = vmatprep.subr.mxu0 0.0
    %2639 = vmatpush1.msra.mxu0 0.0
    %2640 = vmatprep.subr.mxu0 0.0
    %2641 = vmatpush1.msra.mxu0 0.0
    %2642 = vmatprep.subr.mxu0 0.0
    %2643 = vmatpush1.msra.mxu0 0.0
    %2644 = vmatprep.subr.mxu0 0.0
    %2645 = vmatpush1.msra.mxu0 0.0
    %2646 = vmatprep.subr.mxu0 0.0
    %2647 = vmatpush1.msra.mxu0 0.0
    %2648 = vmatprep.subr.mxu0 0.0
    %2649 = vmatpush1.msra.mxu0 0.0
    %2650 = vmatprep.subr.mxu0 0.0
    %2651 = vmatpush1.msra.mxu0 0.0
    %2652 = vmatprep.subr.mxu0 0.0
    %2653 = vmatpush1.msra.mxu0 0.0
    %2654 = vmatprep.subr.mxu0 0.0
    %2655 = vmatpush1.msra.mxu0 0.0
    %2656 = vmatprep.mubr.f32.mxu0 0.0
    %2657 = vmatmul.mubr.f32.gmra.mrb[0].mxu0 %v2590
    %v2658 = vpop.f32.mrb[0].mxu0
    %v2659 = vadd.f32 0.0, %v2658
    %v2660 = vpop.f32.mrb[0].mxu0
    %2661 = vdwg.mxu0
    %v2663 = vsel %vm379, %v2659, 0
    %2665 = vmatprep.subr.mxu0 0.0
    %2666 = vmatpush1.msra.mxu0 %v127
    %2667 = vmatprep.subr.mxu0 0.0
    %2668 = vmatpush1.msra.mxu0 0.0
    %2669 = vmatprep.subr.mxu0 0.0
    %2670 = vmatpush1.msra.mxu0 0.0
    %2671 = vmatprep.subr.mxu0 0.0
    %2672 = vmatpush1.msra.mxu0 0.0
    %2673 = vmatprep.subr.mxu0 0.0
    %2674 = vmatpush1.msra.mxu0 0.0
    %2675 = vmatprep.subr.mxu0 0.0
    %2676 = vmatpush1.msra.mxu0 0.0
    %2677 = vmatprep.subr.mxu0 0.0
    %2678 = vmatpush1.msra.mxu0 0.0
    %2679 = vmatprep.subr.mxu0 0.0
    %2680 = vmatpush1.msra.mxu0 0.0
    %2681 = vmatprep.subr.mxu0 0.0
    %2682 = vmatpush1.msra.mxu0 0.0
    %2683 = vmatprep.subr.mxu0 0.0
    %2684 = vmatpush1.msra.mxu0 0.0
    %2685 = vmatprep.subr.mxu0 0.0
    %2686 = vmatpush1.msra.mxu0 0.0
    %2687 = vmatprep.subr.mxu0 0.0
    %2688 = vmatpush1.msra.mxu0 0.0
    %2689 = vmatprep.subr.mxu0 0.0
    %2690 = vmatpush1.msra.mxu0 0.0
    %2691 = vmatprep.subr.mxu0 0.0
    %2692 = vmatpush1.msra.mxu0 0.0
    %2693 = vmatprep.subr.mxu0 0.0
    %2694 = vmatpush1.msra.mxu0 0.0
    %2695 = vmatprep.subr.mxu0 0.0
    %2696 = vmatpush1.msra.mxu0 0.0
    %2697 = vmatprep.subr.mxu0 0.0
    %2698 = vmatpush1.msra.mxu0 0.0
    %2699 = vmatprep.subr.mxu0 0.0
    %2700 = vmatpush1.msra.mxu0 0.0
    %2701 = vmatprep.subr.mxu0 0.0
    %2702 = vmatpush1.msra.mxu0 0.0
    %2703 = vmatprep.subr.mxu0 0.0
    %2704 = vmatpush1.msra.mxu0 0.0
    %2705 = vmatprep.subr.mxu0 0.0
    %2706 = vmatpush1.msra.mxu0 0.0
    %2707 = vmatprep.subr.mxu0 0.0
    %2708 = vmatpush1.msra.mxu0 0.0
    %2709 = vmatprep.subr.mxu0 0.0
    %2710 = vmatpush1.msra.mxu0 0.0
    %2711 = vmatprep.subr.mxu0 0.0
    %2712 = vmatpush1.msra.mxu0 0.0
    %2713 = vmatprep.subr.mxu0 0.0
    %2714 = vmatpush1.msra.mxu0 0.0
    %2715 = vmatprep.subr.mxu0 0.0
    %2716 = vmatpush1.msra.mxu0 0.0
    %2717 = vmatprep.subr.mxu0 0.0
    %2718 = vmatpush1.msra.mxu0 0.0
    %2719 = vmatprep.subr.mxu0 0.0
    %2720 = vmatpush1.msra.mxu0 0.0
    %2721 = vmatprep.subr.mxu0 0.0
    %2722 = vmatpush1.msra.mxu0 0.0
    %2723 = vmatprep.subr.mxu0 0.0
    %2724 = vmatpush1.msra.mxu0 0.0
    %2725 = vmatprep.subr.mxu0 0.0
    %2726 = vmatpush1.msra.mxu0 0.0
    %2727 = vmatprep.subr.mxu0 0.0
    %2728 = vmatpush1.msra.mxu0 0.0
    %2729 = vmatprep.mubr.f32.mxu0 0.0
    %2730 = vmatmul.mubr.f32.gmra.mrb[0].mxu0 %v2663
    %v2731 = vpop.f32.mrb[0].mxu0
    %v2732 = vadd.f32 0.0, %v2731
    %v2733 = vpop.f32.mrb[0].mxu0
    %2734 = vdwg.mxu0
    %v2735 = vadd.f32 %v2495, %v2732
    %v2736 = vadd.f32 %v2735, %v1338
    %v2737 = vadd.f32 %v2736, %v1560
    %v2738 = vsel %vm159, %v2737, 0.0
    %2739 = vadd.xlane.f32.xlu0 %v2738
    %v2740 = vpop.xlane.xlu0 %2739
    %v2741 = vmul.f32 %v2740, %v1345
    %v2742 = vsub.f32 %v2737, %v2741
    %v2743 = vmul.f32 %v2742, %v2742
    %v2744 = vsel %vm159, %v2743, 0.0
    %2745 = vadd.xlane.f32.xlu0 %v2744
    %v2746 = vpop.xlane.xlu0 %2745
    %v2747 = vmul.f32 %v2746, %v1345
    %v2748 = vadd.f32 %v2747, 1e-05
    %v2749 = vrsqrt.pop %v2748
    %v2750 = vmul.f32 %v2742, %v2749
    %v2751 = vmul.f32 %v2750, %v1360
    %v2752 = vadd.f32 %v2751, %v1367
    %v2754 = vsel %vm159, %v2752, 0
    %2756 = vmatprep.subr.mxu0 0.0
    %2757 = vmatpush1.msra.mxu0 %v131
    %2758 = vmatprep.subr.mxu0 0.0
    %2759 = vmatpush1.msra.mxu0 %v132
    %2760 = vmatprep.subr.mxu0 0.0
    %2761 = vmatpush1.msra.mxu0 %v133
    %2762 = vmatprep.subr.mxu0 0.0
    %2763 = vmatpush1.msra.mxu0 %v134
    %2764 = vmatprep.subr.mxu0 0.0
    %2765 = vmatpush1.msra.mxu0 0.0
    %2766 = vmatprep.subr.mxu0 0.0
    %2767 = vmatpush1.msra.mxu0 0.0
    %2768 = vmatprep.subr.mxu0 0.0
    %2769 = vmatpush1.msra.mxu0 0.0
    %2770 = vmatprep.subr.mxu0 0.0
    %2771 = vmatpush1.msra.mxu0 0.0
    %2772 = vmatprep.subr.mxu0 0.0
    %2773 = vmatpush1.msra.mxu0 0.0
    %2774 = vmatprep.subr.mxu0 0.0
    %2775 = vmatpush1.msra.mxu0 0.0
    %2776 = vmatprep.subr.mxu0 0.0
    %2777 = vmatpush1.msra.mxu0 0.0
    %2778 = vmatprep.subr.mxu0 0.0
    %2779 = vmatpush1.msra.mxu0 0.0
    %2780 = vmatprep.subr.mxu0 0.0
    %2781 = vmatpush1.msra.mxu0 0.0
    %2782 = vmatprep.subr.mxu0 0.0
    %2783 = vmatpush1.msra.mxu0 0.0
    %2784 = vmatprep.subr.mxu0 0.0
    %2785 = vmatpush1.msra.mxu0 0.0
    %2786 = vmatprep.subr.mxu0 0.0
    %2787 = vmatpush1.msra.mxu0 0.0
    %2788 = vmatprep.subr.mxu0 0.0
    %2789 = vmatpush1.msra.mxu0 0.0
    %2790 = vmatprep.subr.mxu0 0.0
    %2791 = vmatpush1.msra.mxu0 0.0
    %2792 = vmatprep.subr.mxu0 0.0
    %2793 = vmatpush1.msra.mxu0 0.0
    %2794 = vmatprep.subr.mxu0 0.0
    %2795 = vmatpush1.msra.mxu0 0.0
    %2796 = vmatprep.subr.mxu0 0.0
    %2797 = vmatpush1.msra.mxu0 0.0
    %2798 = vmatprep.subr.mxu0 0.0
    %2799 = vmatpush1.msra.mxu0 0.0
    %2800 = vmatprep.subr.mxu0 0.0
    %2801 = vmatpush1.msra.mxu0 0.0
    %2802 = vmatprep.subr.mxu0 0.0
    %2803 = vmatpush1.msra.mxu0 0.0
    %2804 = vmatprep.subr.mxu0 0.0
    %2805 = vmatpush1.msra.mxu0 0.0
    %2806 = vmatprep.subr.mxu0 0.0
    %2807 = vmatpush1.msra.mxu0 0.0
    %2808 = vmatprep.subr.mxu0 0.0
    %2809 = vmatpush1.msra.mxu0 0.0
    %2810 = vmatprep.subr.mxu0 0.0
    %2811 = vmatpush1.msra.mxu0 0.0
    %2812 = vmatprep.subr.mxu0 0.0
    %2813 = vmatpush1.msra.mxu0 0.0
    %2814 = vmatprep.subr.mxu0 0.0
    %2815 = vmatpush1.msra.mxu0 0.0
    %2816 = vmatprep.subr.mxu0 0.0
    %2817 = vmatpush1.msra.mxu0 0.0
    %2818 = vmatprep.subr.mxu0 0.0
    %2819 = vmatpush1.msra.mxu0 0.0
    %2820 = vmatprep.mubr.f32.mxu0 0.0
    %2821 = vmatmul.mubr.f32.gmra.mrb[0].mxu0 %v2754
    %v2822 = vpop.f32.mrb[0].mxu0
    %v2823 = vadd.f32 %v1374, %v2822
    %v2824 = vpop.f32.mrb[0].mxu0
    %2825 = vdwg.mxu0
    %v2826 = vmax.f32 %v2823, 0.0
    %2827 = vmatprep.subr.mxu0 0.0
    %2828 = vmatpush1.msra.mxu0 %v136
    %2829 = vmatprep.subr.mxu0 0.0
    %2830 = vmatpush1.msra.mxu0 %v137
    %2831 = vmatprep.subr.mxu0 0.0
    %2832 = vmatpush1.msra.mxu0 %v138
    %2833 = vmatprep.subr.mxu0 0.0
    %2834 = vmatpush1.msra.mxu0 %v139
    %2835 = vmatprep.subr.mxu0 0.0
    %2836 = vmatpush1.msra.mxu0 %v140
    %2837 = vmatprep.subr.mxu0 0.0
    %2838 = vmatpush1.msra.mxu0 %v141
    %2839 = vmatprep.subr.mxu0 0.0
    %2840 = vmatpush1.msra.mxu0 %v142
    %2841 = vmatprep.subr.mxu0 0.0
    %2842 = vmatpush1.msra.mxu0 %v143
    %2843 = vmatprep.subr.mxu0 0.0
    %2844 = vmatpush1.msra.mxu0 %v144
    %2845 = vmatprep.subr.mxu0 0.0
    %2846 = vmatpush1.msra.mxu0 %v145
    %2847 = vmatprep.subr.mxu0 0.0
    %2848 = vmatpush1.msra.mxu0 %v146
    %2849 = vmatprep.subr.mxu0 0.0
    %2850 = vmatpush1.msra.mxu0 %v147
    %2851 = vmatprep.subr.mxu0 0.0
    %2852 = vmatpush1.msra.mxu0 %v148
    %2853 = vmatprep.subr.mxu0 0.0
    %2854 = vmatpush1.msra.mxu0 %v149
    %2855 = vmatprep.subr.mxu0 0.0
    %2856 = vmatpush1.msra.mxu0 %v150
    %2857 = vmatprep.subr.mxu0 0.0
    %2858 = vmatpush1.msra.mxu0 %v151
    %2859 = vmatprep.subr.mxu0 0.0
    %2860 = vmatpush1.msra.mxu0 0.0
    %2861 = vmatprep.subr.mxu0 0.0
    %2862 = vmatpush1.msra.mxu0 0.0
    %2863 = vmatprep.subr.mxu0 0.0
    %2864 = vmatpush1.msra.mxu0 0.0
    %2865 = vmatprep.subr.mxu0 0.0
    %2866 = vmatpush1.msra.mxu0 0.0
    %2867 = vmatprep.subr.mxu0 0.0
    %2868 = vmatpush1.msra.mxu0 0.0
    %2869 = vmatprep.subr.mxu0 0.0
    %2870 = vmatpush1.msra.mxu0 0.0
    %2871 = vmatprep.subr.mxu0 0.0
    %2872 = vmatpush1.msra.mxu0 0.0
    %2873 = vmatprep.subr.mxu0 0.0
    %2874 = vmatpush1.msra.mxu0 0.0
    %2875 = vmatprep.subr.mxu0 0.0
    %2876 = vmatpush1.msra.mxu0 0.0
    %2877 = vmatprep.subr.mxu0 0.0
    %2878 = vmatpush1.msra.mxu0 0.0
    %2879 = vmatprep.subr.mxu0 0.0
    %2880 = vmatpush1.msra.mxu0 0.0
    %2881 = vmatprep.subr.mxu0 0.0
    %2882 = vmatpush1.msra.mxu0 0.0
    %2883 = vmatprep.subr.mxu0 0.0
    %2884 = vmatpush1.msra.mxu0 0.0
    %2885 = vmatprep.subr.mxu0 0.0
    %2886 = vmatpush1.msra.mxu0 0.0
    %2887 = vmatprep.subr.mxu0 0.0
    %2888 = vmatpush1.msra.mxu0 0.0
    %2889 = vmatprep.subr.mxu0 0.0
    %2890 = vmatpush1.msra.mxu0 0.0
    %2891 = vmatprep.mubr.f32.mxu0 0.0
    %2892 = vmatmul.mubr.f32.gmra.mrb[0].mxu0 %v2826
    %v2893 = vpop.f32.mrb[0].mxu0
    %v2894 = vadd.f32 %v1454, %v2893
    %v2895 = vpop.f32.mrb[0].mxu0
    %2896 = vdwg.mxu0
    %v2897 = vadd.f32 %v2894, %v2752
    %v2898 = vsel %vm159, %v2897, 0.0
    %2899 = vadd.xlane.f32.xlu0 %v2898
    %v2900 = vpop.xlane.xlu0 %2899
    %v2901 = vmul.f32 %v2900, %v1345
    %v2902 = vsub.f32 %v2897, %v2901
    %v2903 = vmul.f32 %v2902, %v2902
    %v2904 = vsel %vm159, %v2903, 0.0
    %2905 = vadd.xlane.f32.xlu0 %v2904
    %v2906 = vpop.xlane.xlu0 %2905
    %v2907 = vmul.f32 %v2906, %v1345
    %v2908 = vadd.f32 %v2907, 1e-05
    %v2909 = vrsqrt.pop %v2908
    %v2910 = vmul.f32 %v2902, %v2909
    %v2911 = vmul.f32 %v2910, %v1544
    %v2912 = vadd.f32 %v2911, %v1551
    %s2913 = scalar_lea.vmem [#allocation10], 8
    %2914 = vst.msk [vmem:[%s2913] sm:$0xff] %vm159, %v2912
    // Predicated region
    $region86: #{tpu_custom_call.1} parent=1 // pred_check
      _
    $region87: #{tpu_custom_call.1} parent=1 // pred_check_branch
      %2916 = sbr.rel (0) target = $region89
    $region88: #{tpu_custom_call.1} parent=1 // pred_region
      %s2918 = ssub.s32 256, 256
      %2919 = vsyncadd [#allocation4], %s2918
      %s2920 = sshll.u32 [#allocation10], 4
      %s2921 = int_to_ptr.vmem [resolvable:$true] %s2920
      %2926 = dma.vmem_to_hbm [thread:$0]  %s2921, 256, %s17, [#allocation4], 128, 128, 8
    $region89: #{tpu_custom_call.1} parent=1 // pred_fallthru
      _
    // Predicated region
    $region90: #{tpu_custom_call.1} parent=1 // pred_check
      _
    $region91: #{tpu_custom_call.1} parent=1 // pred_check_branch
      %2928 = sbr.rel (0) target = $region93
    $region92: #{tpu_custom_call.1} parent=1 // pred_region
      %2929 = dma.done [#allocation4], 256
    $region93: #{tpu_custom_call.1} parent=1 // pred_fallthru
      _
    %2930 = vsyncpa [#allocation3], 1
    %2931 = vsyncpa [#allocation6], 1
    %2932 = vsyncpa [#allocation9], 1
    %2933 = vsyncpa [#allocation4], 1

</llo_original>
